<compile_context>
chip_gen: v6e
topology: v6e:2x2x1
jax: 0.10.0
libtpu: 0.0.40
codegen_flags: <defaults>
</compile_context>

<pallas_src>
import jax
import jax.numpy as jnp
from jax.experimental import pallas as pl
from jax.experimental.pallas import tpu as pltpu

EPS = 1e-5


def conv_stats_kernel(x_ref, wt_ref, y_ref, sum_ref, ssq_ref):
    """Pass 1: 3x3 conv via in-VMEM im2col (9 MXU dots) + BN partial stats.

    x_ref:   (1, H+2, W+2, Cin)  bf16  haloed NHWC image tile
    wt_ref:  (9, Cin, Cout)      bf16  conv taps (kh*3+kw order), resident
    y_ref:   (1, H*W, Cout)      f32   conv output tile
    sum_ref: (1, 1, Cout)        f32   per-tile channel sum
    ssq_ref: (1, 1, Cout)        f32   per-tile channel sum of squares
    """
    _, hp, wp, cin = x_ref.shape
    h, w = hp - 2, wp - 2
    cout = wt_ref.shape[2]

    acc = jnp.zeros((h * w, cout), jnp.float32)
    for kh in range(3):
        for kw in range(3):
            # Shifted window of the padded tile -> (H*W, Cin) im2col slice.
            xs = x_ref[0, kh:kh + h, kw:kw + w, :].reshape(h * w, cin)
            acc = acc + jnp.dot(xs, wt_ref[kh * 3 + kw],
                                preferred_element_type=jnp.float32)

    y_ref[0] = acc
    sum_ref[0] = jnp.sum(acc, axis=0, keepdims=True)
    ssq_ref[0] = jnp.sum(acc * acc, axis=0, keepdims=True)


def bn_relu_kernel(y_ref, scale_ref, shift_ref, o_ref):
    """Pass 2: y * scale + shift -> ReLU (scale/shift fold mean/var/gamma/beta)."""
    o_ref[...] = jnp.maximum(
        y_ref[...] * scale_ref[...] + shift_ref[...], 0.0
    ).astype(o_ref.dtype)


@jax.jit
def resnet_block(x_nchw, weight_oihw, gamma, beta):
    """Forward of ResnetBlock.

    x_nchw:      (N, C, H, W) float32 (PyTorch NCHW)
    weight_oihw: (C, C, 3, 3) conv weight, OIHW, no bias
    gamma, beta: (C,)         BatchNorm affine params
    returns:     (N, C, H, W)
    """
    n, c, h, w = x_nchw.shape
    cout = weight_oihw.shape[0]
    hw = h * w

    # Layout glue (XLA): NCHW -> NHWC, one 1-pixel halo pad, bf16 cast.
    x_nhwc = jnp.transpose(x_nchw, (0, 2, 3, 1))
    x_pad = jnp.pad(x_nhwc, ((0, 0), (1, 1), (1, 1), (0, 0))).astype(jnp.bfloat16)
    # OIHW -> (kh*3+kw, Cin, Cout), matching the in-kernel tap order.
    w_taps = jnp.transpose(weight_oihw, (2, 3, 1, 0)).reshape(9, c, cout)
    w_taps = w_taps.astype(jnp.bfloat16)

    conv_out, psum, pssq = pl.pallas_call(
        conv_stats_kernel,
        grid=(n,),
        in_specs=[
            pl.BlockSpec((1, h + 2, w + 2, c), lambda i: (i, 0, 0, 0)),
            pl.BlockSpec((9, c, cout), lambda i: (0, 0, 0)),  # weights resident
        ],
        out_specs=[
            pl.BlockSpec((1, hw, cout), lambda i: (i, 0, 0)),
            pl.BlockSpec((1, 1, cout), lambda i: (i, 0, 0)),
            pl.BlockSpec((1, 1, cout), lambda i: (i, 0, 0)),
        ],
        out_shape=[
            jax.ShapeDtypeStruct((n, hw, cout), jnp.float32),
            jax.ShapeDtypeStruct((n, 1, cout), jnp.float32),
            jax.ShapeDtypeStruct((n, 1, cout), jnp.float32),
        ],
        compiler_params=pltpu.CompilerParams(
            dimension_semantics=("parallel",)),
    )(x_pad, w_taps)

    # Tiny per-channel BN math (Cout elements) in f32 in the wrapper.
    m = n * hw
    total = jnp.sum(psum, axis=(0, 1))
    total_sq = jnp.sum(pssq, axis=(0, 1))
    mean = total / m
    var = total_sq / m - mean * mean            # biased variance (training BN)
    inv_std = jax.lax.rsqrt(var + EPS)
    scale = (gamma * inv_std).astype(jnp.float32).reshape(1, 1, cout)
    shift = (beta - mean * gamma * inv_std).astype(jnp.float32).reshape(1, 1, cout)

    out_flat = pl.pallas_call(
        bn_relu_kernel,
        grid=(n,),
        in_specs=[
            pl.BlockSpec((1, hw, cout), lambda i: (i, 0, 0)),
            pl.BlockSpec((1, 1, cout), lambda i: (0, 0, 0)),
            pl.BlockSpec((1, 1, cout), lambda i: (0, 0, 0)),
        ],
        out_specs=pl.BlockSpec((1, hw, cout), lambda i: (i, 0, 0)),
        out_shape=jax.ShapeDtypeStruct((n, hw, cout), jnp.float32),
        input_output_aliases={0: 0},   # normalize the conv buffer in place
        compiler_params=pltpu.CompilerParams(
            dimension_semantics=("parallel",)),
    )(conv_out, scale, shift)

    out_nhwc = out_flat.reshape(n, h, w, cout)
    return jnp.transpose(out_nhwc, (0, 3, 1, 2)).astype(x_nchw.dtype)


def resnet_block_reference(x, weight, gamma, beta):
    """Pure-JAX reference mirroring the PyTorch module (training-mode BN)."""
    y = jax.lax.conv_general_dilated(
        x, weight, window_strides=(1, 1), padding=((1, 1), (1, 1)),
        dimension_numbers=("NCHW", "OIHW", "NCHW"))
    mean = jnp.mean(y, axis=(0, 2, 3), keepdims=True)
    var = jnp.mean((y - mean) ** 2, axis=(0, 2, 3), keepdims=True)
    yn = (y - mean) * jax.lax.rsqrt(var + EPS)
    yn = yn * gamma.reshape(1, -1, 1, 1) + beta.reshape(1, -1, 1, 1)
    return jnp.maximum(yn, 0.0)


if __name__ == "__main__":
    # Small shapes consistent with the module: conv_dim = 4, 16x16 images.
    N, C, H, W = 2, 4, 16, 16

    key = jax.random.PRNGKey(0)
    kx, kwt, kg, kb = jax.random.split(key, 4)

    # Round inputs to bf16-representable values so the kernel's bf16 MXU path
    # and the f32 reference see identical operands (only accumulation order
    # differs, at f32 ULP level).
    x = jax.random.normal(kx, (N, C, H, W), jnp.float32)
    x = x.astype(jnp.bfloat16).astype(jnp.float32)
    conv_weight = 0.1 * jax.random.normal(kwt, (C, C, 3, 3), jnp.float32)
    conv_weight = conv_weight.astype(jnp.bfloat16).astype(jnp.float32)
    bn_gamma = 1.0 + 0.1 * jax.random.normal(kg, (C,), jnp.float32)
    bn_beta = 0.1 * jax.random.normal(kb, (C,), jnp.float32)

    out = jax.block_until_ready(resnet_block(x, conv_weight, bn_gamma, bn_beta))
    ref = jax.block_until_ready(
        resnet_block_reference(x, conv_weight, bn_gamma, bn_beta))

    assert out.shape == (N, C, H, W), out.shape
    if not jnp.allclose(out, ref, atol=1e-3, rtol=1e-3):
        max_err = float(jnp.max(jnp.abs(out - ref)))
        raise AssertionError(f"mismatch vs reference, max abs err = {max_err}")

    print("KERNEL_OK")
</pallas_src>

<mosaic_0001>
module attributes {stable_mosaic.version = 11 : i64} {
  func.func @conv_stats_kernel(%arg0: i32, %arg1: memref<1x18x18x4xbf16, #tpu.memory_space<vmem>>, %arg2: memref<9x4x4xbf16, #tpu.memory_space<vmem>>, %arg3: memref<1x256x4xf32, #tpu.memory_space<vmem>>, %arg4: memref<1x1x4xf32, #tpu.memory_space<vmem>>, %arg5: memref<1x1x4xf32, #tpu.memory_space<vmem>>) attributes {dimension_semantics = [#tpu.dimension_semantics<parallel>], iteration_bounds = array<i64: 2>, scalar_prefetch = 0 : i64, scratch_operands = 0 : i64, tpu.core_type = #tpu.core_type<tc>, window_params = [{transform_indices = @transform_0, window_bounds = array<i64: 1, 18, 18, 4>}, {pipeline_mode = #tpu.pipeline_mode<synchronous>, transform_indices = @transform_1, window_bounds = array<i64: 9, 4, 4>}, {transform_indices = @transform_2, window_bounds = array<i64: 1, 256, 4>}, {transform_indices = @transform_3, window_bounds = array<i64: 1, 1, 4>}, {transform_indices = @transform_4, window_bounds = array<i64: 1, 1, 4>}]} {
    %cst = arith.constant 0.000000e+00 : f32
    %0 = vector.broadcast %cst : f32 to vector<256x4xf32>
    %c0 = arith.constant 0 : index
    %c0_0 = arith.constant 0 : index
    %c0_1 = arith.constant 0 : index
    %c0_2 = arith.constant 0 : index
    %1 = vector.load %arg1[%c0, %c0_0, %c0_1, %c0_2] : memref<1x18x18x4xbf16, #tpu.memory_space<vmem>>, vector<1x16x16x4xbf16>
    %2 = vector.shape_cast %1 : vector<1x16x16x4xbf16> to vector<16x16x4xbf16>
    %3 = vector.shape_cast %2 : vector<16x16x4xbf16> to vector<256x4xbf16>
    %c0_3 = arith.constant 0 : index
    %c0_4 = arith.constant 0 : index
    %c0_5 = arith.constant 0 : index
    %4 = vector.load %arg2[%c0_3, %c0_4, %c0_5] : memref<9x4x4xbf16, #tpu.memory_space<vmem>>, vector<1x4x4xbf16>
    %5 = vector.shape_cast %4 : vector<1x4x4xbf16> to vector<4x4xbf16>
    %cst_6 = arith.constant dense<0.000000e+00> : vector<256x4xf32>
    %6 = tpu.matmul %3, %5, %cst_6 {dimension_numbers = #tpu.dot_dimension_numbers<[1], [0], [0], [1], [0, 0, 1, 1], [], []>} : vector<256x4xbf16>, vector<4x4xbf16>, vector<256x4xf32> -> vector<256x4xf32>
    %7 = arith.addf %0, %6 : vector<256x4xf32>
    %c0_7 = arith.constant 0 : index
    %c0_8 = arith.constant 0 : index
    %c1 = arith.constant 1 : index
    %c0_9 = arith.constant 0 : index
    %8 = vector.load %arg1[%c0_7, %c0_8, %c1, %c0_9] : memref<1x18x18x4xbf16, #tpu.memory_space<vmem>>, vector<1x16x16x4xbf16>
    %9 = vector.shape_cast %8 : vector<1x16x16x4xbf16> to vector<16x16x4xbf16>
    %10 = vector.shape_cast %9 : vector<16x16x4xbf16> to vector<256x4xbf16>
    %c1_10 = arith.constant 1 : index
    %c0_11 = arith.constant 0 : index
    %c0_12 = arith.constant 0 : index
    %11 = vector.load %arg2[%c1_10, %c0_11, %c0_12] : memref<9x4x4xbf16, #tpu.memory_space<vmem>>, vector<1x4x4xbf16>
    %12 = vector.shape_cast %11 : vector<1x4x4xbf16> to vector<4x4xbf16>
    %cst_13 = arith.constant dense<0.000000e+00> : vector<256x4xf32>
    %13 = tpu.matmul %10, %12, %cst_13 {dimension_numbers = #tpu.dot_dimension_numbers<[1], [0], [0], [1], [0, 0, 1, 1], [], []>} : vector<256x4xbf16>, vector<4x4xbf16>, vector<256x4xf32> -> vector<256x4xf32>
    %14 = arith.addf %7, %13 : vector<256x4xf32>
    %c0_14 = arith.constant 0 : index
    %c0_15 = arith.constant 0 : index
    %c2 = arith.constant 2 : index
    %c0_16 = arith.constant 0 : index
    %15 = vector.load %arg1[%c0_14, %c0_15, %c2, %c0_16] : memref<1x18x18x4xbf16, #tpu.memory_space<vmem>>, vector<1x16x16x4xbf16>
    %16 = vector.shape_cast %15 : vector<1x16x16x4xbf16> to vector<16x16x4xbf16>
    %17 = vector.shape_cast %16 : vector<16x16x4xbf16> to vector<256x4xbf16>
    %c2_17 = arith.constant 2 : index
    %c0_18 = arith.constant 0 : index
    %c0_19 = arith.constant 0 : index
    %18 = vector.load %arg2[%c2_17, %c0_18, %c0_19] : memref<9x4x4xbf16, #tpu.memory_space<vmem>>, vector<1x4x4xbf16>
    %19 = vector.shape_cast %18 : vector<1x4x4xbf16> to vector<4x4xbf16>
    %cst_20 = arith.constant dense<0.000000e+00> : vector<256x4xf32>
    %20 = tpu.matmul %17, %19, %cst_20 {dimension_numbers = #tpu.dot_dimension_numbers<[1], [0], [0], [1], [0, 0, 1, 1], [], []>} : vector<256x4xbf16>, vector<4x4xbf16>, vector<256x4xf32> -> vector<256x4xf32>
    %21 = arith.addf %14, %20 : vector<256x4xf32>
    %c0_21 = arith.constant 0 : index
    %c1_22 = arith.constant 1 : index
    %c0_23 = arith.constant 0 : index
    %c0_24 = arith.constant 0 : index
    %22 = vector.load %arg1[%c0_21, %c1_22, %c0_23, %c0_24] : memref<1x18x18x4xbf16, #tpu.memory_space<vmem>>, vector<1x16x16x4xbf16>
    %23 = vector.shape_cast %22 : vector<1x16x16x4xbf16> to vector<16x16x4xbf16>
    %24 = vector.shape_cast %23 : vector<16x16x4xbf16> to vector<256x4xbf16>
    %c3 = arith.constant 3 : index
    %c0_25 = arith.constant 0 : index
    %c0_26 = arith.constant 0 : index
    %25 = vector.load %arg2[%c3, %c0_25, %c0_26] : memref<9x4x4xbf16, #tpu.memory_space<vmem>>, vector<1x4x4xbf16>
    %26 = vector.shape_cast %25 : vector<1x4x4xbf16> to vector<4x4xbf16>
    %cst_27 = arith.constant dense<0.000000e+00> : vector<256x4xf32>
    %27 = tpu.matmul %24, %26, %cst_27 {dimension_numbers = #tpu.dot_dimension_numbers<[1], [0], [0], [1], [0, 0, 1, 1], [], []>} : vector<256x4xbf16>, vector<4x4xbf16>, vector<256x4xf32> -> vector<256x4xf32>
    %28 = arith.addf %21, %27 : vector<256x4xf32>
    %c0_28 = arith.constant 0 : index
    %c1_29 = arith.constant 1 : index
    %c1_30 = arith.constant 1 : index
    %c0_31 = arith.constant 0 : index
    %29 = vector.load %arg1[%c0_28, %c1_29, %c1_30, %c0_31] : memref<1x18x18x4xbf16, #tpu.memory_space<vmem>>, vector<1x16x16x4xbf16>
    %30 = vector.shape_cast %29 : vector<1x16x16x4xbf16> to vector<16x16x4xbf16>
    %31 = vector.shape_cast %30 : vector<16x16x4xbf16> to vector<256x4xbf16>
    %c4 = arith.constant 4 : index
    %c0_32 = arith.constant 0 : index
    %c0_33 = arith.constant 0 : index
    %32 = vector.load %arg2[%c4, %c0_32, %c0_33] : memref<9x4x4xbf16, #tpu.memory_space<vmem>>, vector<1x4x4xbf16>
    %33 = vector.shape_cast %32 : vector<1x4x4xbf16> to vector<4x4xbf16>
    %cst_34 = arith.constant dense<0.000000e+00> : vector<256x4xf32>
    %34 = tpu.matmul %31, %33, %cst_34 {dimension_numbers = #tpu.dot_dimension_numbers<[1], [0], [0], [1], [0, 0, 1, 1], [], []>} : vector<256x4xbf16>, vector<4x4xbf16>, vector<256x4xf32> -> vector<256x4xf32>
    %35 = arith.addf %28, %34 : vector<256x4xf32>
    %c0_35 = arith.constant 0 : index
    %c1_36 = arith.constant 1 : index
    %c2_37 = arith.constant 2 : index
    %c0_38 = arith.constant 0 : index
    %36 = vector.load %arg1[%c0_35, %c1_36, %c2_37, %c0_38] : memref<1x18x18x4xbf16, #tpu.memory_space<vmem>>, vector<1x16x16x4xbf16>
    %37 = vector.shape_cast %36 : vector<1x16x16x4xbf16> to vector<16x16x4xbf16>
    %38 = vector.shape_cast %37 : vector<16x16x4xbf16> to vector<256x4xbf16>
    %c5 = arith.constant 5 : index
    %c0_39 = arith.constant 0 : index
    %c0_40 = arith.constant 0 : index
    %39 = vector.load %arg2[%c5, %c0_39, %c0_40] : memref<9x4x4xbf16, #tpu.memory_space<vmem>>, vector<1x4x4xbf16>
    %40 = vector.shape_cast %39 : vector<1x4x4xbf16> to vector<4x4xbf16>
    %cst_41 = arith.constant dense<0.000000e+00> : vector<256x4xf32>
    %41 = tpu.matmul %38, %40, %cst_41 {dimension_numbers = #tpu.dot_dimension_numbers<[1], [0], [0], [1], [0, 0, 1, 1], [], []>} : vector<256x4xbf16>, vector<4x4xbf16>, vector<256x4xf32> -> vector<256x4xf32>
    %42 = arith.addf %35, %41 : vector<256x4xf32>
    %c0_42 = arith.constant 0 : index
    %c2_43 = arith.constant 2 : index
    %c0_44 = arith.constant 0 : index
    %c0_45 = arith.constant 0 : index
    %43 = vector.load %arg1[%c0_42, %c2_43, %c0_44, %c0_45] : memref<1x18x18x4xbf16, #tpu.memory_space<vmem>>, vector<1x16x16x4xbf16>
    %44 = vector.shape_cast %43 : vector<1x16x16x4xbf16> to vector<16x16x4xbf16>
    %45 = vector.shape_cast %44 : vector<16x16x4xbf16> to vector<256x4xbf16>
    %c6 = arith.constant 6 : index
    %c0_46 = arith.constant 0 : index
    %c0_47 = arith.constant 0 : index
    %46 = vector.load %arg2[%c6, %c0_46, %c0_47] : memref<9x4x4xbf16, #tpu.memory_space<vmem>>, vector<1x4x4xbf16>
    %47 = vector.shape_cast %46 : vector<1x4x4xbf16> to vector<4x4xbf16>
    %cst_48 = arith.constant dense<0.000000e+00> : vector<256x4xf32>
    %48 = tpu.matmul %45, %47, %cst_48 {dimension_numbers = #tpu.dot_dimension_numbers<[1], [0], [0], [1], [0, 0, 1, 1], [], []>} : vector<256x4xbf16>, vector<4x4xbf16>, vector<256x4xf32> -> vector<256x4xf32>
    %49 = arith.addf %42, %48 : vector<256x4xf32>
    %c0_49 = arith.constant 0 : index
    %c2_50 = arith.constant 2 : index
    %c1_51 = arith.constant 1 : index
    %c0_52 = arith.constant 0 : index
    %50 = vector.load %arg1[%c0_49, %c2_50, %c1_51, %c0_52] : memref<1x18x18x4xbf16, #tpu.memory_space<vmem>>, vector<1x16x16x4xbf16>
    %51 = vector.shape_cast %50 : vector<1x16x16x4xbf16> to vector<16x16x4xbf16>
    %52 = vector.shape_cast %51 : vector<16x16x4xbf16> to vector<256x4xbf16>
    %c7 = arith.constant 7 : index
    %c0_53 = arith.constant 0 : index
    %c0_54 = arith.constant 0 : index
    %53 = vector.load %arg2[%c7, %c0_53, %c0_54] : memref<9x4x4xbf16, #tpu.memory_space<vmem>>, vector<1x4x4xbf16>
    %54 = vector.shape_cast %53 : vector<1x4x4xbf16> to vector<4x4xbf16>
    %cst_55 = arith.constant dense<0.000000e+00> : vector<256x4xf32>
    %55 = tpu.matmul %52, %54, %cst_55 {dimension_numbers = #tpu.dot_dimension_numbers<[1], [0], [0], [1], [0, 0, 1, 1], [], []>} : vector<256x4xbf16>, vector<4x4xbf16>, vector<256x4xf32> -> vector<256x4xf32>
    %56 = arith.addf %49, %55 : vector<256x4xf32>
    %c0_56 = arith.constant 0 : index
    %c2_57 = arith.constant 2 : index
    %c2_58 = arith.constant 2 : index
    %c0_59 = arith.constant 0 : index
    %57 = vector.load %arg1[%c0_56, %c2_57, %c2_58, %c0_59] : memref<1x18x18x4xbf16, #tpu.memory_space<vmem>>, vector<1x16x16x4xbf16>
    %58 = vector.shape_cast %57 : vector<1x16x16x4xbf16> to vector<16x16x4xbf16>
    %59 = vector.shape_cast %58 : vector<16x16x4xbf16> to vector<256x4xbf16>
    %c8 = arith.constant 8 : index
    %c0_60 = arith.constant 0 : index
    %c0_61 = arith.constant 0 : index
    %60 = vector.load %arg2[%c8, %c0_60, %c0_61] : memref<9x4x4xbf16, #tpu.memory_space<vmem>>, vector<1x4x4xbf16>
    %61 = vector.shape_cast %60 : vector<1x4x4xbf16> to vector<4x4xbf16>
    %cst_62 = arith.constant dense<0.000000e+00> : vector<256x4xf32>
    %62 = tpu.matmul %59, %61, %cst_62 {dimension_numbers = #tpu.dot_dimension_numbers<[1], [0], [0], [1], [0, 0, 1, 1], [], []>} : vector<256x4xbf16>, vector<4x4xbf16>, vector<256x4xf32> -> vector<256x4xf32>
    %63 = arith.addf %56, %62 : vector<256x4xf32>
    %c0_63 = arith.constant 0 : index
    %c0_64 = arith.constant 0 : index
    %c0_65 = arith.constant 0 : index
    %64 = vector.load %arg3[%c0_63, %c0_64, %c0_65] : memref<1x256x4xf32, #tpu.memory_space<vmem>>, vector<1x256x4xf32>
    %65 = vector.shape_cast %64 : vector<1x256x4xf32> to vector<256x4xf32>
    %66 = vector.shape_cast %63 : vector<256x4xf32> to vector<1x256x4xf32>
    tpu.vector_store %arg3[%c0_63, %c0_64, %c0_65], %66 {strides = array<i32>} : memref<1x256x4xf32, #tpu.memory_space<vmem>>, vector<1x256x4xf32>,
    %cst_66 = arith.constant dense<0.000000e+00> : vector<4xf32>
    %67 = vector.multi_reduction <add>, %63, %cst_66 [0] : vector<256x4xf32> to vector<4xf32>
    %68 = vector.shape_cast %67 : vector<4xf32> to vector<1x4xf32>
    %c0_67 = arith.constant 0 : index
    %c0_68 = arith.constant 0 : index
    %c0_69 = arith.constant 0 : index
    %69 = vector.load %arg4[%c0_67, %c0_68, %c0_69] : memref<1x1x4xf32, #tpu.memory_space<vmem>>, vector<1x1x4xf32>
    %70 = vector.shape_cast %69 : vector<1x1x4xf32> to vector<1x4xf32>
    %71 = vector.shape_cast %68 : vector<1x4xf32> to vector<1x1x4xf32>
    tpu.vector_store %arg4[%c0_67, %c0_68, %c0_69], %71 {strides = array<i32>} : memref<1x1x4xf32, #tpu.memory_space<vmem>>, vector<1x1x4xf32>,
    %72 = arith.mulf %63, %63 : vector<256x4xf32>
    %cst_70 = arith.constant dense<0.000000e+00> : vector<4xf32>
    %73 = vector.multi_reduction <add>, %72, %cst_70 [0] : vector<256x4xf32> to vector<4xf32>
    %74 = vector.shape_cast %73 : vector<4xf32> to vector<1x4xf32>
    %c0_71 = arith.constant 0 : index
    %c0_72 = arith.constant 0 : index
    %c0_73 = arith.constant 0 : index
    %75 = vector.load %arg5[%c0_71, %c0_72, %c0_73] : memref<1x1x4xf32, #tpu.memory_space<vmem>>, vector<1x1x4xf32>
    %76 = vector.shape_cast %75 : vector<1x1x4xf32> to vector<1x4xf32>
    %77 = vector.shape_cast %74 : vector<1x4xf32> to vector<1x1x4xf32>
    tpu.vector_store %arg5[%c0_71, %c0_72, %c0_73], %77 {strides = array<i32>} : memref<1x1x4xf32, #tpu.memory_space<vmem>>, vector<1x1x4xf32>,
    return
  }
  func.func @transform_0(%arg0: i32) -> (i32, i32, i32, i32) {
    %c0_i32 = arith.constant 0 : i32
    %c0_i32_0 = arith.constant 0 : i32
    %c0_i32_1 = arith.constant 0 : i32
    %c0_i32_2 = arith.constant 0 : i32
    return %arg0, %c0_i32, %c0_i32_0, %c0_i32_1 : i32, i32, i32, i32
  }
  func.func @transform_1(%arg0: i32) -> (i32, i32, i32) {
    %c0_i32 = arith.constant 0 : i32
    %c0_i32_0 = arith.constant 0 : i32
    %c0_i32_1 = arith.constant 0 : i32
    %c0_i32_2 = arith.constant 0 : i32
    return %c0_i32, %c0_i32_0, %c0_i32_1 : i32, i32, i32
  }
  func.func @transform_2(%arg0: i32) -> (i32, i32, i32) {
    %c0_i32 = arith.constant 0 : i32
    %c0_i32_0 = arith.constant 0 : i32
    %c0_i32_1 = arith.constant 0 : i32
    return %arg0, %c0_i32, %c0_i32_0 : i32, i32, i32
  }
  func.func @transform_3(%arg0: i32) -> (i32, i32, i32) {
    %c0_i32 = arith.constant 0 : i32
    %c0_i32_0 = arith.constant 0 : i32
    %c0_i32_1 = arith.constant 0 : i32
    return %arg0, %c0_i32, %c0_i32_0 : i32, i32, i32
  }
  func.func @transform_4(%arg0: i32) -> (i32, i32, i32) {
    %c0_i32 = arith.constant 0 : i32
    %c0_i32_0 = arith.constant 0 : i32
    %c0_i32_1 = arith.constant 0 : i32
    return %arg0, %c0_i32, %c0_i32_0 : i32, i32, i32
  }
}

module attributes {stable_mosaic.version = 11 : i64} {
  func.func @bn_relu_kernel(%arg0: i32, %arg1: memref<1x256x4xf32, #tpu.memory_space<vmem>>, %arg2: memref<1x1x4xf32, #tpu.memory_space<vmem>>, %arg3: memref<1x1x4xf32, #tpu.memory_space<vmem>>, %arg4: memref<1x256x4xf32, #tpu.memory_space<vmem>>) attributes {dimension_semantics = [#tpu.dimension_semantics<parallel>], iteration_bounds = array<i64: 2>, scalar_prefetch = 0 : i64, scratch_operands = 0 : i64, tpu.core_type = #tpu.core_type<tc>, window_params = [{transform_indices = @transform_0, window_bounds = array<i64: 1, 256, 4>}, {pipeline_mode = #tpu.pipeline_mode<synchronous>, transform_indices = @transform_1, window_bounds = array<i64: 1, 1, 4>}, {pipeline_mode = #tpu.pipeline_mode<synchronous>, transform_indices = @transform_2, window_bounds = array<i64: 1, 1, 4>}, {transform_indices = @transform_3, window_bounds = array<i64: 1, 256, 4>}]} {
    %c0 = arith.constant 0 : index
    %c0_0 = arith.constant 0 : index
    %c0_1 = arith.constant 0 : index
    %0 = vector.load %arg1[%c0, %c0_0, %c0_1] : memref<1x256x4xf32, #tpu.memory_space<vmem>>, vector<1x256x4xf32>
    %c0_2 = arith.constant 0 : index
    %c0_3 = arith.constant 0 : index
    %c0_4 = arith.constant 0 : index
    %1 = vector.load %arg2[%c0_2, %c0_3, %c0_4] : memref<1x1x4xf32, #tpu.memory_space<vmem>>, vector<1x1x4xf32>
    %2 = vector.broadcast %1 : vector<1x1x4xf32> to vector<1x256x4xf32>
    %3 = arith.mulf %0, %2 : vector<1x256x4xf32>
    %c0_5 = arith.constant 0 : index
    %c0_6 = arith.constant 0 : index
    %c0_7 = arith.constant 0 : index
    %4 = vector.load %arg3[%c0_5, %c0_6, %c0_7] : memref<1x1x4xf32, #tpu.memory_space<vmem>>, vector<1x1x4xf32>
    %5 = vector.broadcast %4 : vector<1x1x4xf32> to vector<1x256x4xf32>
    %6 = arith.addf %3, %5 : vector<1x256x4xf32>
    %cst = arith.constant 0.000000e+00 : f32
    %7 = vector.broadcast %cst : f32 to vector<1x256x4xf32>
    %8 = arith.maximumf %6, %7 : vector<1x256x4xf32>
    %c0_8 = arith.constant 0 : index
    %c0_9 = arith.constant 0 : index
    %c0_10 = arith.constant 0 : index
    %9 = vector.load %arg4[%c0_8, %c0_9, %c0_10] : memref<1x256x4xf32, #tpu.memory_space<vmem>>, vector<1x256x4xf32>
    tpu.vector_store %arg4[%c0_8, %c0_9, %c0_10], %8 {strides = array<i32>} : memref<1x256x4xf32, #tpu.memory_space<vmem>>, vector<1x256x4xf32>,
    return
  }
  func.func @transform_0(%arg0: i32) -> (i32, i32, i32) {
    %c0_i32 = arith.constant 0 : i32
    %c0_i32_0 = arith.constant 0 : i32
    %c0_i32_1 = arith.constant 0 : i32
    return %arg0, %c0_i32, %c0_i32_0 : i32, i32, i32
  }
  func.func @transform_1(%arg0: i32) -> (i32, i32, i32) {
    %c0_i32 = arith.constant 0 : i32
    %c0_i32_0 = arith.constant 0 : i32
    %c0_i32_1 = arith.constant 0 : i32
    %c0_i32_2 = arith.constant 0 : i32
    return %c0_i32, %c0_i32_0, %c0_i32_1 : i32, i32, i32
  }
  func.func @transform_2(%arg0: i32) -> (i32, i32, i32) {
    %c0_i32 = arith.constant 0 : i32
    %c0_i32_0 = arith.constant 0 : i32
    %c0_i32_1 = arith.constant 0 : i32
    %c0_i32_2 = arith.constant 0 : i32
    return %c0_i32, %c0_i32_0, %c0_i32_1 : i32, i32, i32
  }
  func.func @transform_3(%arg0: i32) -> (i32, i32, i32) {
    %c0_i32 = arith.constant 0 : i32
    %c0_i32_0 = arith.constant 0 : i32
    %c0_i32_1 = arith.constant 0 : i32
    return %arg0, %c0_i32, %c0_i32_0 : i32, i32, i32
  }
}

</mosaic_0001>

<llo_original>
// kernel: resnet_block.3
$region0: #{resnet_block.3}
  #allocation0 [shape = 'u32[]', space=smem, size = 0x4, offset = 0x4, fixed_abs, tag = 'smem constant byte address 0x4 - core index']
  #allocation1 [shape = 'u32[144,128]{1,0:T(1,128)}', space=vmem, size = 0x12000, scoped, tag = 'internal scratch']
  %s0 = inlined_call_operand.vmem [shape: f32[2,256,4], index: 0, kind: input, shape index: {}, may-alias: {0,3}]
  %s1 = inlined_call_operand.vmem [shape: f32[1,1,4], index: 1, kind: input, shape index: {}]
  %s2 = inlined_call_operand.vmem [shape: f32[1,1,4], index: 2, kind: input, shape index: {}]
  %s3 = inlined_call_operand.vmem [shape: f32[2,256,4], index: 3, kind: output, shape index: {}, may-alias: {0,3}]
  %s4 = sld [smem:[#allocation0]]
  $region45: #{resnet_block.3} parent=0
    _
  %s6 = ssub.s32 1, %s4
  %s7 = scalar_select 0, %s6, %s4
  loop: start=0, step=1, limit=4
  $region2: #{resnet_block.3} parent=0 // loop_pre_header
    _
  $region3: #{resnet_block.3} parent=0 // loop_header
    %s9 = sphi 0, %s13
    %p10 = scmp.ge.s32.totalorder %s9, 4
    %s19 = sphi 0, %s21
    %s22 = sphi 0, %s19
    %s23 = sphi 0, %s22
    %s39 = sphi 0, %s23
    %s43 = sphi 0, %s43
    %s45 = sphi 0, %s43
    %s46 = sphi 0, %s45
    %s60 = sphi 0, %s46
    %s64 = sphi 0, %s64
    %s66 = sphi 0, %s64
    %s67 = sphi 0, %s66
    %s81 = sphi 0, %s67
    %s87 = sphi 0, %s89
    %s90 = sphi 0, %s87
    %s91 = sphi 0, %s90
    %s107 = sphi 0, %s91
  $region4: #{resnet_block.3} parent=0 // loop_header_branch
    %12 = sbr.rel (%p10) target = $region8
  $region5: #{resnet_block.3} parent=0 // loop_body
    %s14 = ssub.s32 %s9, 1
    %s15 = ssub.s32 %s9, 2
    %s16 = sadd.s32 %s9, 1
    %s17 = ssub.s32 %s9, %s16
    %p18 = scmp.eq.s32.totalorder %s17, 0
    %s20 = sadd.s32 %s19, 1
    %s21 = scalar_select %p18, %s19, %s20
    %p24 = pneg %p18
    %p25 = scmp.eq.s32.totalorder %s9, 1
    %p26 = por %p24, %p25
    %p27 = scmp.ne.s32.totalorder %s19, %s22
    %p28 = scmp.eq.s32.totalorder %s9, 0
    %p29 = por %p27, %p28
    %p30 = scmp.ne.s32.totalorder %s19, %s22
    %p31 = scmp.eq.s32.totalorder %s14, 1
    %p32 = por %p30, %p31
    %p33 = scmp.ne.s32.totalorder %s22, %s23
    %p34 = scmp.eq.s32.totalorder %s14, 0
    %p35 = por %p33, %p34
    %p36 = scmp.ne.s32.totalorder %s22, %s23
    %p37 = scmp.eq.s32.totalorder %s15, 1
    %p38 = por %p36, %p37
    %p40 = scmp.ne.s32.totalorder %s23, %s39
    %p41 = scmp.eq.s32.totalorder %s15, 0
    %p42 = por %p40, %p41
    %s44 = sadd.s32 %s43, 1
    %p47 = scmp.eq.s32.totalorder %s9, 1
    %p48 = scmp.ne.s32.totalorder %s43, %s45
    %p49 = scmp.eq.s32.totalorder %s9, 0
    %p50 = por %p48, %p49
    %p51 = scmp.ne.s32.totalorder %s43, %s45
    %p52 = scmp.eq.s32.totalorder %s14, 1
    %p53 = por %p51, %p52
    %p54 = scmp.ne.s32.totalorder %s45, %s46
    %p55 = scmp.eq.s32.totalorder %s14, 0
    %p56 = por %p54, %p55
    %p57 = scmp.ne.s32.totalorder %s45, %s46
    %p58 = scmp.eq.s32.totalorder %s15, 1
    %p59 = por %p57, %p58
    %p61 = scmp.ne.s32.totalorder %s46, %s60
    %p62 = scmp.eq.s32.totalorder %s15, 0
    %p63 = por %p61, %p62
    %s65 = sadd.s32 %s64, 1
    %p68 = scmp.eq.s32.totalorder %s9, 1
    %p69 = scmp.ne.s32.totalorder %s64, %s66
    %p70 = scmp.eq.s32.totalorder %s9, 0
    %p71 = por %p69, %p70
    %p72 = scmp.ne.s32.totalorder %s64, %s66
    %p73 = scmp.eq.s32.totalorder %s14, 1
    %p74 = por %p72, %p73
    %p75 = scmp.ne.s32.totalorder %s66, %s67
    %p76 = scmp.eq.s32.totalorder %s14, 0
    %p77 = por %p75, %p76
    %p78 = scmp.ne.s32.totalorder %s66, %s67
    %p79 = scmp.eq.s32.totalorder %s15, 1
    %p80 = por %p78, %p79
    %p82 = scmp.ne.s32.totalorder %s67, %s81
    %p83 = scmp.eq.s32.totalorder %s15, 0
    %p84 = por %p82, %p83
    %s85 = ssub.s32 %s9, %s16
    %p86 = scmp.eq.s32.totalorder %s85, 0
    %s88 = sadd.s32 %s87, 1
    %s89 = scalar_select %p86, %s87, %s88
    %p92 = pneg %p86
    %p93 = scmp.eq.s32.totalorder %s9, 1
    %p94 = por %p92, %p93
    %p95 = scmp.ne.s32.totalorder %s87, %s90
    %p96 = scmp.eq.s32.totalorder %s9, 0
    %p97 = por %p95, %p96
    %p98 = scmp.ne.s32.totalorder %s87, %s90
    %p99 = scmp.eq.s32.totalorder %s14, 1
    %p100 = por %p98, %p99
    %p101 = scmp.ne.s32.totalorder %s90, %s91
    %p102 = scmp.eq.s32.totalorder %s14, 0
    %p103 = por %p101, %p102
    %p104 = scmp.ne.s32.totalorder %s90, %s91
    %p105 = scmp.eq.s32.totalorder %s15, 1
    %p106 = por %p104, %p105
    %p108 = scmp.ne.s32.totalorder %s91, %s107
    %p109 = scmp.eq.s32.totalorder %s15, 0
    %p110 = por %p108, %p109
    %p111 = scmp.le.s32.totalorder 1, %s9
    %p112 = scmp.lt.s32.totalorder %s9, 3
    %p113 = pnand %p111, %p112
    %p114 = pneg %p113
    // Predicated region
    $region9: #{resnet_block.3} parent=5 // pred_check
      _
    $region10: #{resnet_block.3} parent=5 // pred_check_branch
      %116 = sbr.rel (%p113) target = $region12
    $region11: #{resnet_block.3} parent=5 // pred_region
      %s117 = ssub.s32 %s9, 1
      // Predicated region
      $region13: #{resnet_block.3} parent=11 // pred_check
        %p118 = pneg %p56
      $region14: #{resnet_block.3} parent=11 // pred_check_branch
        %120 = sbr.rel (%p118) target = $region16
      $region15: #{resnet_block.3} parent=11 // pred_region
        _
      $region16: #{resnet_block.3} parent=11 // pred_fallthru
        _
      // Predicated region
      $region17: #{resnet_block.3} parent=11 // pred_check
        %p121 = pneg %p77
      $region18: #{resnet_block.3} parent=11 // pred_check_branch
        %123 = sbr.rel (%p121) target = $region20
      $region19: #{resnet_block.3} parent=11 // pred_region
        _
      $region20: #{resnet_block.3} parent=11 // pred_fallthru
        _
    $region12: #{resnet_block.3} parent=5 // pred_fallthru
      _
    %p124 = scmp.lt.s32.totalorder %s9, 2
    // Predicated region
    $region21: #{resnet_block.3} parent=5 // pred_check
      %p125 = pneg %p124
    $region22: #{resnet_block.3} parent=5 // pred_check_branch
      %127 = sbr.rel (%p125) target = $region24
    $region23: #{resnet_block.3} parent=5 // pred_region
      // Predicated region
      $region25: #{resnet_block.3} parent=23 // pred_check
        %p128 = pneg %p29
      $region26: #{resnet_block.3} parent=23 // pred_check_branch
        %130 = sbr.rel (%p128) target = $region28
      $region27: #{resnet_block.3} parent=23 // pred_region
        %p131 = scmp.lt.s32.totalorder %s9, 1
        %s132 = scalar_select %p131, %s9, 1
        %s133 = smul.addr %s132, 32
        %s134 = smul.addr %s133, 8
        %s135 = scalar_lea.vmem %s0, %s134
      $region28: #{resnet_block.3} parent=23 // pred_fallthru
        _
    $region24: #{resnet_block.3} parent=5 // pred_fallthru
      _
    %p136 = scmp.le.s32.totalorder 1, %s9
    %p137 = scmp.lt.s32.totalorder %s9, 3
    %p138 = pnand %p136, %p137
    %p139 = pneg %p138
    // Predicated region
    $region29: #{resnet_block.3} parent=5 // pred_check
      _
    $region30: #{resnet_block.3} parent=5 // pred_check_branch
      %141 = sbr.rel (%p138) target = $region32
    $region31: #{resnet_block.3} parent=5 // pred_region
      %s142 = ssub.s32 %s9, 1
      %p143 = scmp.lt.s32.totalorder %s14, 1
      %s144 = scalar_select %p143, %s14, 1
      %s145 = smul.addr %s144, 32
      %s146 = smul.addr %s145, 8
      %s147 = scalar_lea.vmem %s0, %s146
      %p148 = pneg %p35
      %p149 = pneg %p32
      %p150 = pneg %p56
      %p151 = pneg %p53
      %p152 = pneg %p77
      %p153 = pneg %p74
      %p154 = pneg %p103
      %p155 = pneg %p100
      %p156 = scmp.lt.s32.totalorder %s14, 1
      %s157 = scalar_select %p156, %s14, 1
      %s158 = smul.addr %s157, 32
      %s159 = smul.addr %s158, 8
      %s160 = scalar_lea.vmem %s3, %s159
      %p161 = scmp.lt.s32.totalorder %s14, 1
      %s162 = scalar_select %p161, %s14, 1
      %s163 = smul.addr %s162, 32
      %s164 = smul.addr %s163, 8
      %s165 = scalar_lea.vmem %s0, %s164
      %p166 = scmp.lt.s32.totalorder %s14, 1
      %s167 = scalar_select %p166, %s14, 1
      %s168 = smul.addr %s167, 32
      %s169 = smul.addr %s168, 8
      %s170 = scalar_lea.vmem %s3, %s169
      %v171 = vld [vmem:[%s165] sm:$0xff]
      %v172 = vld [vmem:[%s165 + $0x8] sm:$0xff]
      %v173 = vld [vmem:[%s165 + $0x10] sm:$0xff]
      %v174 = vld [vmem:[%s165 + $0x18] sm:$0xff]
      %v175 = vld [vmem:[%s165 + $0x20] sm:$0xff]
      %v176 = vld [vmem:[%s165 + $0x28] sm:$0xff]
      %v177 = vld [vmem:[%s165 + $0x30] sm:$0xff]
      %v178 = vld [vmem:[%s165 + $0x38] sm:$0xff]
      %v179 = vld [vmem:[%s165 + $0x40] sm:$0xff]
      %v180 = vld [vmem:[%s165 + $0x48] sm:$0xff]
      %v181 = vld [vmem:[%s165 + $0x50] sm:$0xff]
      %v182 = vld [vmem:[%s165 + $0x58] sm:$0xff]
      %v183 = vld [vmem:[%s165 + $0x60] sm:$0xff]
      %v184 = vld [vmem:[%s165 + $0x68] sm:$0xff]
      %v185 = vld [vmem:[%s165 + $0x70] sm:$0xff]
      %v186 = vld [vmem:[%s165 + $0x78] sm:$0xff]
      %v187 = vld [vmem:[%s165 + $0x80] sm:$0xff]
      %v188 = vld [vmem:[%s165 + $0x88] sm:$0xff]
      %v189 = vld [vmem:[%s165 + $0x90] sm:$0xff]
      %v190 = vld [vmem:[%s165 + $0x98] sm:$0xff]
      %v191 = vld [vmem:[%s165 + $0xa0] sm:$0xff]
      %v192 = vld [vmem:[%s165 + $0xa8] sm:$0xff]
      %v193 = vld [vmem:[%s165 + $0xb0] sm:$0xff]
      %v194 = vld [vmem:[%s165 + $0xb8] sm:$0xff]
      %v195 = vld [vmem:[%s165 + $0xc0] sm:$0xff]
      %v196 = vld [vmem:[%s165 + $0xc8] sm:$0xff]
      %v197 = vld [vmem:[%s165 + $0xd0] sm:$0xff]
      %v198 = vld [vmem:[%s165 + $0xd8] sm:$0xff]
      %v199 = vld [vmem:[%s165 + $0xe0] sm:$0xff]
      %v200 = vld [vmem:[%s165 + $0xe8] sm:$0xff]
      %v201 = vld [vmem:[%s165 + $0xf0] sm:$0xff]
      %v202 = vld [vmem:[%s165 + $0xf8] sm:$0xff]
      %v203 = vld [vmem:[%s1] sm:$0x1]
      %v205 = vlaneseq
      %v206 = vshrl.u32 %v205, 7
      %v207 = vsub.s32 0, %v206
      %v208 = vrot.slane %v203, %v207
      %v210 = vmul.f32 %v171, %v208
      %v211 = vmul.f32 %v172, %v208
      %v212 = vmul.f32 %v173, %v208
      %v213 = vmul.f32 %v174, %v208
      %v214 = vmul.f32 %v175, %v208
      %v215 = vmul.f32 %v176, %v208
      %v216 = vmul.f32 %v177, %v208
      %v217 = vmul.f32 %v178, %v208
      %v218 = vmul.f32 %v179, %v208
      %v219 = vmul.f32 %v180, %v208
      %v220 = vmul.f32 %v181, %v208
      %v221 = vmul.f32 %v182, %v208
      %v222 = vmul.f32 %v183, %v208
      %v223 = vmul.f32 %v184, %v208
      %v224 = vmul.f32 %v185, %v208
      %v225 = vmul.f32 %v186, %v208
      %v226 = vmul.f32 %v187, %v208
      %v227 = vmul.f32 %v188, %v208
      %v228 = vmul.f32 %v189, %v208
      %v229 = vmul.f32 %v190, %v208
      %v230 = vmul.f32 %v191, %v208
      %v231 = vmul.f32 %v192, %v208
      %v232 = vmul.f32 %v193, %v208
      %v233 = vmul.f32 %v194, %v208
      %v234 = vmul.f32 %v195, %v208
      %v235 = vmul.f32 %v196, %v208
      %v236 = vmul.f32 %v197, %v208
      %v237 = vmul.f32 %v198, %v208
      %v238 = vmul.f32 %v199, %v208
      %v239 = vmul.f32 %v200, %v208
      %v240 = vmul.f32 %v201, %v208
      %v241 = vmul.f32 %v202, %v208
      %v242 = vld [vmem:[%s2] sm:$0x1]
      %v244 = vlaneseq
      %v245 = vshrl.u32 %v244, 7
      %v246 = vsub.s32 0, %v245
      %v247 = vrot.slane %v242, %v246
      %v249 = vadd.f32 %v210, %v247
      %v250 = vadd.f32 %v211, %v247
      %v251 = vadd.f32 %v212, %v247
      %v252 = vadd.f32 %v213, %v247
      %v253 = vadd.f32 %v214, %v247
      %v254 = vadd.f32 %v215, %v247
      %v255 = vadd.f32 %v216, %v247
      %v256 = vadd.f32 %v217, %v247
      %v257 = vadd.f32 %v218, %v247
      %v258 = vadd.f32 %v219, %v247
      %v259 = vadd.f32 %v220, %v247
      %v260 = vadd.f32 %v221, %v247
      %v261 = vadd.f32 %v222, %v247
      %v262 = vadd.f32 %v223, %v247
      %v263 = vadd.f32 %v224, %v247
      %v264 = vadd.f32 %v225, %v247
      %v265 = vadd.f32 %v226, %v247
      %v266 = vadd.f32 %v227, %v247
      %v267 = vadd.f32 %v228, %v247
      %v268 = vadd.f32 %v229, %v247
      %v269 = vadd.f32 %v230, %v247
      %v270 = vadd.f32 %v231, %v247
      %v271 = vadd.f32 %v232, %v247
      %v272 = vadd.f32 %v233, %v247
      %v273 = vadd.f32 %v234, %v247
      %v274 = vadd.f32 %v235, %v247
      %v275 = vadd.f32 %v236, %v247
      %v276 = vadd.f32 %v237, %v247
      %v277 = vadd.f32 %v238, %v247
      %v278 = vadd.f32 %v239, %v247
      %v279 = vadd.f32 %v240, %v247
      %v280 = vadd.f32 %v241, %v247
      %v281 = vmax.f32 %v249, 0.0
      %v282 = vmax.f32 %v250, 0.0
      %v283 = vmax.f32 %v251, 0.0
      %v284 = vmax.f32 %v252, 0.0
      %v285 = vmax.f32 %v253, 0.0
      %v286 = vmax.f32 %v254, 0.0
      %v287 = vmax.f32 %v255, 0.0
      %v288 = vmax.f32 %v256, 0.0
      %v289 = vmax.f32 %v257, 0.0
      %v290 = vmax.f32 %v258, 0.0
      %v291 = vmax.f32 %v259, 0.0
      %v292 = vmax.f32 %v260, 0.0
      %v293 = vmax.f32 %v261, 0.0
      %v294 = vmax.f32 %v262, 0.0
      %v295 = vmax.f32 %v263, 0.0
      %v296 = vmax.f32 %v264, 0.0
      %v297 = vmax.f32 %v265, 0.0
      %v298 = vmax.f32 %v266, 0.0
      %v299 = vmax.f32 %v267, 0.0
      %v300 = vmax.f32 %v268, 0.0
      %v301 = vmax.f32 %v269, 0.0
      %v302 = vmax.f32 %v270, 0.0
      %v303 = vmax.f32 %v271, 0.0
      %v304 = vmax.f32 %v272, 0.0
      %v305 = vmax.f32 %v273, 0.0
      %v306 = vmax.f32 %v274, 0.0
      %v307 = vmax.f32 %v275, 0.0
      %v308 = vmax.f32 %v276, 0.0
      %v309 = vmax.f32 %v277, 0.0
      %v310 = vmax.f32 %v278, 0.0
      %v311 = vmax.f32 %v279, 0.0
      %v312 = vmax.f32 %v280, 0.0
      %vm313 = vcmask 31744
      %314 = vst.msk [vmem:[%s170] sm:$0xff] %vm313, %v281
      %315 = vst.msk [vmem:[%s170 + $0x8] sm:$0xff] %vm313, %v282
      %316 = vst.msk [vmem:[%s170 + $0x10] sm:$0xff] %vm313, %v283
      %317 = vst.msk [vmem:[%s170 + $0x18] sm:$0xff] %vm313, %v284
      %318 = vst.msk [vmem:[%s170 + $0x20] sm:$0xff] %vm313, %v285
      %319 = vst.msk [vmem:[%s170 + $0x28] sm:$0xff] %vm313, %v286
      %320 = vst.msk [vmem:[%s170 + $0x30] sm:$0xff] %vm313, %v287
      %321 = vst.msk [vmem:[%s170 + $0x38] sm:$0xff] %vm313, %v288
      %322 = vst.msk [vmem:[%s170 + $0x40] sm:$0xff] %vm313, %v289
      %323 = vst.msk [vmem:[%s170 + $0x48] sm:$0xff] %vm313, %v290
      %324 = vst.msk [vmem:[%s170 + $0x50] sm:$0xff] %vm313, %v291
      %325 = vst.msk [vmem:[%s170 + $0x58] sm:$0xff] %vm313, %v292
      %326 = vst.msk [vmem:[%s170 + $0x60] sm:$0xff] %vm313, %v293
      %327 = vst.msk [vmem:[%s170 + $0x68] sm:$0xff] %vm313, %v294
      %328 = vst.msk [vmem:[%s170 + $0x70] sm:$0xff] %vm313, %v295
      %329 = vst.msk [vmem:[%s170 + $0x78] sm:$0xff] %vm313, %v296
      %330 = vst.msk [vmem:[%s170 + $0x80] sm:$0xff] %vm313, %v297
      %331 = vst.msk [vmem:[%s170 + $0x88] sm:$0xff] %vm313, %v298
      %332 = vst.msk [vmem:[%s170 + $0x90] sm:$0xff] %vm313, %v299
      %333 = vst.msk [vmem:[%s170 + $0x98] sm:$0xff] %vm313, %v300
      %334 = vst.msk [vmem:[%s170 + $0xa0] sm:$0xff] %vm313, %v301
      %335 = vst.msk [vmem:[%s170 + $0xa8] sm:$0xff] %vm313, %v302
      %336 = vst.msk [vmem:[%s170 + $0xb0] sm:$0xff] %vm313, %v303
      %337 = vst.msk [vmem:[%s170 + $0xb8] sm:$0xff] %vm313, %v304
      %338 = vst.msk [vmem:[%s170 + $0xc0] sm:$0xff] %vm313, %v305
      %339 = vst.msk [vmem:[%s170 + $0xc8] sm:$0xff] %vm313, %v306
      %340 = vst.msk [vmem:[%s170 + $0xd0] sm:$0xff] %vm313, %v307
      %341 = vst.msk [vmem:[%s170 + $0xd8] sm:$0xff] %vm313, %v308
      %342 = vst.msk [vmem:[%s170 + $0xe0] sm:$0xff] %vm313, %v309
      %343 = vst.msk [vmem:[%s170 + $0xe8] sm:$0xff] %vm313, %v310
      %344 = vst.msk [vmem:[%s170 + $0xf0] sm:$0xff] %vm313, %v311
      %345 = vst.msk [vmem:[%s170 + $0xf8] sm:$0xff] %vm313, %v312
      %p346 = scmp.lt.s32.totalorder %s14, 1
      %s347 = scalar_select %p346, %s14, 1
      %s348 = smul.addr %s347, 32
      %s349 = smul.addr %s348, 8
      %s350 = scalar_lea.vmem %s3, %s349
      // Predicated region
      $region33: #{resnet_block.3} parent=31 // pred_check
        %p351 = pneg %p100
      $region34: #{resnet_block.3} parent=31 // pred_check_branch
        %353 = sbr.rel (%p351) target = $region36
      $region35: #{resnet_block.3} parent=31 // pred_region
        _
      $region36: #{resnet_block.3} parent=31 // pred_fallthru
        _
    $region32: #{resnet_block.3} parent=5 // pred_fallthru
      _
    %p354 = scmp.le.s32.totalorder 2, %s9
    // Predicated region
    $region37: #{resnet_block.3} parent=5 // pred_check
      %p355 = pneg %p354
    $region38: #{resnet_block.3} parent=5 // pred_check_branch
      %357 = sbr.rel (%p355) target = $region40
    $region39: #{resnet_block.3} parent=5 // pred_region
      %s358 = ssub.s32 %s9, 2
      // Predicated region
      $region41: #{resnet_block.3} parent=39 // pred_check
        %p359 = pneg %p106
      $region42: #{resnet_block.3} parent=39 // pred_check_branch
        %361 = sbr.rel (%p359) target = $region44
      $region43: #{resnet_block.3} parent=39 // pred_region
        %p362 = scmp.lt.s32.totalorder %s15, 1
        %s363 = scalar_select %p362, %s15, 1
        %s364 = smul.addr %s363, 32
        %s365 = smul.addr %s364, 8
        %s366 = scalar_lea.vmem %s3, %s365
      $region44: #{resnet_block.3} parent=39 // pred_fallthru
        _
    $region40: #{resnet_block.3} parent=5 // pred_fallthru
      _
  $region6: #{resnet_block.3} parent=0 // loop_footer
    %s13 = sadd.s32 1, %s9
  $region7: #{resnet_block.3} parent=0 // loop_footer_branch
    %8 = sbr.rel target = $region3
  $region8: #{resnet_block.3} parent=0 // loop_exit
    _

// kernel: resnet_block.2
$region0: #{resnet_block.2}
  #allocation0 [shape = 'u32[]', space=smem, size = 0x4, offset = 0x4, fixed_abs, tag = 'smem constant byte address 0x4 - core index']
  #allocation1 [shape = 'u32[144,128]{1,0:T(1,128)}', space=vmem, size = 0x12000, scoped, tag = 'internal scratch']
  %s0 = inlined_call_operand.vmem [shape: bf16[2,18,18,4], index: 0, kind: input, shape index: {}]
  %s1 = inlined_call_operand.vmem [shape: bf16[9,4,4], index: 1, kind: input, shape index: {}]
  %s2 = inlined_call_operand.vmem [shape: f32[2,256,4], index: 2, kind: output, shape index: {0}]
  %s3 = inlined_call_operand.vmem [shape: f32[2,1,4], index: 3, kind: output, shape index: {1}]
  %s4 = inlined_call_operand.vmem [shape: f32[2,1,4], index: 4, kind: output, shape index: {2}]
  %5 = xla_tuple %s2, %s3, %s4
  %s6 = sld [smem:[#allocation0]]
  $region57: #{resnet_block.2} parent=0
    _
  %s8 = ssub.s32 1, %s6
  %s9 = scalar_select 0, %s8, %s6
  loop: start=0, step=1, limit=4
  $region2: #{resnet_block.2} parent=0 // loop_pre_header
    _
  $region3: #{resnet_block.2} parent=0 // loop_header
    %s11 = sphi 0, %s15
    %p12 = scmp.ge.s32.totalorder %s11, 4
    %s21 = sphi 0, %s23
    %s24 = sphi 0, %s21
    %s25 = sphi 0, %s24
    %s41 = sphi 0, %s25
    %s45 = sphi 0, %s45
    %s47 = sphi 0, %s45
    %s48 = sphi 0, %s47
    %s62 = sphi 0, %s48
    %s68 = sphi 0, %s70
    %s71 = sphi 0, %s68
    %s72 = sphi 0, %s71
    %s88 = sphi 0, %s72
    %s94 = sphi 0, %s96
    %s97 = sphi 0, %s94
    %s98 = sphi 0, %s97
    %s114 = sphi 0, %s98
    %s120 = sphi 0, %s122
    %s123 = sphi 0, %s120
    %s124 = sphi 0, %s123
    %s140 = sphi 0, %s124
  $region4: #{resnet_block.2} parent=0 // loop_header_branch
    %14 = sbr.rel (%p12) target = $region8
  $region5: #{resnet_block.2} parent=0 // loop_body
    %s16 = ssub.s32 %s11, 1
    %s17 = ssub.s32 %s11, 2
    %s18 = sadd.s32 %s11, 1
    %s19 = ssub.s32 %s11, %s18
    %p20 = scmp.eq.s32.totalorder %s19, 0
    %s22 = sadd.s32 %s21, 1
    %s23 = scalar_select %p20, %s21, %s22
    %p26 = pneg %p20
    %p27 = scmp.eq.s32.totalorder %s11, 1
    %p28 = por %p26, %p27
    %p29 = scmp.ne.s32.totalorder %s21, %s24
    %p30 = scmp.eq.s32.totalorder %s11, 0
    %p31 = por %p29, %p30
    %p32 = scmp.ne.s32.totalorder %s21, %s24
    %p33 = scmp.eq.s32.totalorder %s16, 1
    %p34 = por %p32, %p33
    %p35 = scmp.ne.s32.totalorder %s24, %s25
    %p36 = scmp.eq.s32.totalorder %s16, 0
    %p37 = por %p35, %p36
    %p38 = scmp.ne.s32.totalorder %s24, %s25
    %p39 = scmp.eq.s32.totalorder %s17, 1
    %p40 = por %p38, %p39
    %p42 = scmp.ne.s32.totalorder %s25, %s41
    %p43 = scmp.eq.s32.totalorder %s17, 0
    %p44 = por %p42, %p43
    %s46 = sadd.s32 %s45, 1
    %p49 = scmp.eq.s32.totalorder %s11, 1
    %p50 = scmp.ne.s32.totalorder %s45, %s47
    %p51 = scmp.eq.s32.totalorder %s11, 0
    %p52 = por %p50, %p51
    %p53 = scmp.ne.s32.totalorder %s45, %s47
    %p54 = scmp.eq.s32.totalorder %s16, 1
    %p55 = por %p53, %p54
    %p56 = scmp.ne.s32.totalorder %s47, %s48
    %p57 = scmp.eq.s32.totalorder %s16, 0
    %p58 = por %p56, %p57
    %p59 = scmp.ne.s32.totalorder %s47, %s48
    %p60 = scmp.eq.s32.totalorder %s17, 1
    %p61 = por %p59, %p60
    %p63 = scmp.ne.s32.totalorder %s48, %s62
    %p64 = scmp.eq.s32.totalorder %s17, 0
    %p65 = por %p63, %p64
    %s66 = ssub.s32 %s11, %s18
    %p67 = scmp.eq.s32.totalorder %s66, 0
    %s69 = sadd.s32 %s68, 1
    %s70 = scalar_select %p67, %s68, %s69
    %p73 = pneg %p67
    %p74 = scmp.eq.s32.totalorder %s11, 1
    %p75 = por %p73, %p74
    %p76 = scmp.ne.s32.totalorder %s68, %s71
    %p77 = scmp.eq.s32.totalorder %s11, 0
    %p78 = por %p76, %p77
    %p79 = scmp.ne.s32.totalorder %s68, %s71
    %p80 = scmp.eq.s32.totalorder %s16, 1
    %p81 = por %p79, %p80
    %p82 = scmp.ne.s32.totalorder %s71, %s72
    %p83 = scmp.eq.s32.totalorder %s16, 0
    %p84 = por %p82, %p83
    %p85 = scmp.ne.s32.totalorder %s71, %s72
    %p86 = scmp.eq.s32.totalorder %s17, 1
    %p87 = por %p85, %p86
    %p89 = scmp.ne.s32.totalorder %s72, %s88
    %p90 = scmp.eq.s32.totalorder %s17, 0
    %p91 = por %p89, %p90
    %s92 = ssub.s32 %s11, %s18
    %p93 = scmp.eq.s32.totalorder %s92, 0
    %s95 = sadd.s32 %s94, 1
    %s96 = scalar_select %p93, %s94, %s95
    %p99 = pneg %p93
    %p100 = scmp.eq.s32.totalorder %s11, 1
    %p101 = por %p99, %p100
    %p102 = scmp.ne.s32.totalorder %s94, %s97
    %p103 = scmp.eq.s32.totalorder %s11, 0
    %p104 = por %p102, %p103
    %p105 = scmp.ne.s32.totalorder %s94, %s97
    %p106 = scmp.eq.s32.totalorder %s16, 1
    %p107 = por %p105, %p106
    %p108 = scmp.ne.s32.totalorder %s97, %s98
    %p109 = scmp.eq.s32.totalorder %s16, 0
    %p110 = por %p108, %p109
    %p111 = scmp.ne.s32.totalorder %s97, %s98
    %p112 = scmp.eq.s32.totalorder %s17, 1
    %p113 = por %p111, %p112
    %p115 = scmp.ne.s32.totalorder %s98, %s114
    %p116 = scmp.eq.s32.totalorder %s17, 0
    %p117 = por %p115, %p116
    %s118 = ssub.s32 %s11, %s18
    %p119 = scmp.eq.s32.totalorder %s118, 0
    %s121 = sadd.s32 %s120, 1
    %s122 = scalar_select %p119, %s120, %s121
    %p125 = pneg %p119
    %p126 = scmp.eq.s32.totalorder %s11, 1
    %p127 = por %p125, %p126
    %p128 = scmp.ne.s32.totalorder %s120, %s123
    %p129 = scmp.eq.s32.totalorder %s11, 0
    %p130 = por %p128, %p129
    %p131 = scmp.ne.s32.totalorder %s120, %s123
    %p132 = scmp.eq.s32.totalorder %s16, 1
    %p133 = por %p131, %p132
    %p134 = scmp.ne.s32.totalorder %s123, %s124
    %p135 = scmp.eq.s32.totalorder %s16, 0
    %p136 = por %p134, %p135
    %p137 = scmp.ne.s32.totalorder %s123, %s124
    %p138 = scmp.eq.s32.totalorder %s17, 1
    %p139 = por %p137, %p138
    %p141 = scmp.ne.s32.totalorder %s124, %s140
    %p142 = scmp.eq.s32.totalorder %s17, 0
    %p143 = por %p141, %p142
    %p144 = scmp.le.s32.totalorder 1, %s11
    %p145 = scmp.lt.s32.totalorder %s11, 3
    %p146 = pnand %p144, %p145
    %p147 = pneg %p146
    // Predicated region
    $region9: #{resnet_block.2} parent=5 // pred_check
      _
    $region10: #{resnet_block.2} parent=5 // pred_check_branch
      %149 = sbr.rel (%p146) target = $region12
    $region11: #{resnet_block.2} parent=5 // pred_region
      %s150 = ssub.s32 %s11, 1
      // Predicated region
      $region13: #{resnet_block.2} parent=11 // pred_check
        %p151 = pneg %p58
      $region14: #{resnet_block.2} parent=11 // pred_check_branch
        %153 = sbr.rel (%p151) target = $region16
      $region15: #{resnet_block.2} parent=11 // pred_region
        _
      $region16: #{resnet_block.2} parent=11 // pred_fallthru
        _
    $region12: #{resnet_block.2} parent=5 // pred_fallthru
      _
    %p154 = scmp.lt.s32.totalorder %s11, 2
    // Predicated region
    $region17: #{resnet_block.2} parent=5 // pred_check
      %p155 = pneg %p154
    $region18: #{resnet_block.2} parent=5 // pred_check_branch
      %157 = sbr.rel (%p155) target = $region20
    $region19: #{resnet_block.2} parent=5 // pred_region
      // Predicated region
      $region21: #{resnet_block.2} parent=19 // pred_check
        %p158 = pneg %p31
      $region22: #{resnet_block.2} parent=19 // pred_check_branch
        %160 = sbr.rel (%p158) target = $region24
      $region23: #{resnet_block.2} parent=19 // pred_region
        %p161 = scmp.lt.s32.totalorder %s11, 1
        %s162 = scalar_select %p161, %s11, 1
        %s163 = smul.addr %s162, 54
        %s164 = smul.addr %s163, 4
        %s165 = scalar_lea.vmem %s0, %s164
      $region24: #{resnet_block.2} parent=19 // pred_fallthru
        _
    $region20: #{resnet_block.2} parent=5 // pred_fallthru
      _
    %p166 = scmp.le.s32.totalorder 1, %s11
    %p167 = scmp.lt.s32.totalorder %s11, 3
    %p168 = pnand %p166, %p167
    %p169 = pneg %p168
    // Predicated region
    $region25: #{resnet_block.2} parent=5 // pred_check
      _
    $region26: #{resnet_block.2} parent=5 // pred_check_branch
      %171 = sbr.rel (%p168) target = $region28
    $region27: #{resnet_block.2} parent=5 // pred_region
      %s172 = ssub.s32 %s11, 1
      %p173 = scmp.lt.s32.totalorder %s16, 1
      %s174 = scalar_select %p173, %s16, 1
      %s175 = smul.addr %s174, 54
      %s176 = smul.addr %s175, 4
      %s177 = scalar_lea.vmem %s0, %s176
      %p178 = pneg %p37
      %p179 = pneg %p34
      %p180 = pneg %p58
      %p181 = pneg %p55
      %p182 = pneg %p84
      %p183 = pneg %p81
      %p184 = scmp.lt.s32.totalorder %s16, 1
      %s185 = scalar_select %p184, %s16, 1
      %s186 = smul.addr %s185, 32
      %s187 = smul.addr %s186, 8
      %s188 = scalar_lea.vmem %s2, %s187
      %p189 = pneg %p110
      %p190 = pneg %p107
      %p191 = scmp.lt.s32.totalorder %s16, 1
      %s192 = scalar_select %p191, %s16, 1
      %s193 = scalar_lea.vmem %s3, %s192
      %p194 = pneg %p136
      %p195 = pneg %p133
      %p196 = scmp.lt.s32.totalorder %s16, 1
      %s197 = scalar_select %p196, %s16, 1
      %s198 = scalar_lea.vmem %s4, %s197
      %p199 = scmp.lt.s32.totalorder %s16, 1
      %s200 = scalar_select %p199, %s16, 1
      %s201 = smul.addr %s200, 54
      %s202 = smul.addr %s201, 4
      %s203 = scalar_lea.vmem %s0, %s202
      %p204 = scmp.lt.s32.totalorder %s16, 1
      %s205 = scalar_select %p204, %s16, 1
      %s206 = smul.addr %s205, 32
      %s207 = smul.addr %s206, 8
      %s208 = scalar_lea.vmem %s2, %s207
      %p209 = scmp.lt.s32.totalorder %s16, 1
      %s210 = scalar_select %p209, %s16, 1
      %s211 = scalar_lea.vmem %s3, %s210
      %p212 = scmp.lt.s32.totalorder %s16, 1
      %s213 = scalar_select %p212, %s16, 1
      %s214 = scalar_lea.vmem %s4, %s213
      %v216 = vld [vmem:[%s203] sm:$0xf]
      %v217 = vld [vmem:[%s203 + $0x4] sm:$0xf]
      %v218 = vld [vmem:[%s203 + $0xc] sm:$0xf]
      %v219 = vld [vmem:[%s203 + $0x10] sm:$0xf]
      %v220 = vld [vmem:[%s203 + $0x18] sm:$0xf]
      %v221 = vld [vmem:[%s203 + $0x1c] sm:$0xf]
      %v222 = vld [vmem:[%s203 + $0x24] sm:$0xf]
      %v223 = vld [vmem:[%s203 + $0x28] sm:$0xf]
      %v224 = vld [vmem:[%s203 + $0x30] sm:$0xf]
      %v225 = vld [vmem:[%s203 + $0x34] sm:$0xf]
      %v226 = vld [vmem:[%s203 + $0x3c] sm:$0xf]
      %v227 = vld [vmem:[%s203 + $0x40] sm:$0xf]
      %v228 = vld [vmem:[%s203 + $0x48] sm:$0xf]
      %v229 = vld [vmem:[%s203 + $0x4c] sm:$0xf]
      %v230 = vld [vmem:[%s203 + $0x54] sm:$0xf]
      %v231 = vld [vmem:[%s203 + $0x58] sm:$0xf]
      %v232 = vld [vmem:[%s203 + $0x60] sm:$0xf]
      %v233 = vld [vmem:[%s203 + $0x64] sm:$0xf]
      %v234 = vld [vmem:[%s203 + $0x6c] sm:$0xf]
      %v235 = vld [vmem:[%s203 + $0x70] sm:$0xf]
      %v236 = vld [vmem:[%s203 + $0x78] sm:$0xf]
      %v237 = vld [vmem:[%s203 + $0x7c] sm:$0xf]
      %v238 = vld [vmem:[%s203 + $0x84] sm:$0xf]
      %v239 = vld [vmem:[%s203 + $0x88] sm:$0xf]
      %v240 = vld [vmem:[%s203 + $0x90] sm:$0xf]
      %v241 = vld [vmem:[%s203 + $0x94] sm:$0xf]
      %v242 = vld [vmem:[%s203 + $0x9c] sm:$0xf]
      %v243 = vld [vmem:[%s203 + $0xa0] sm:$0xf]
      %v244 = vld [vmem:[%s203 + $0xa8] sm:$0xf]
      %v245 = vld [vmem:[%s203 + $0xac] sm:$0xf]
      %v246 = vld [vmem:[%s203 + $0xb4] sm:$0xf]
      %v247 = vld [vmem:[%s203 + $0xb8] sm:$0xf]
      %v248 = vld [vmem:[%s1] sm:$0x3]
      %v249 = vld [vmem:[%s203 + $0x8] sm:$0x1]
      %v250 = vld [vmem:[%s203 + $0x14] sm:$0x1]
      %v251 = vld [vmem:[%s203 + $0x20] sm:$0x1]
      %v252 = vld [vmem:[%s203 + $0x2c] sm:$0x1]
      %v253 = vld [vmem:[%s203 + $0x38] sm:$0x1]
      %v254 = vld [vmem:[%s203 + $0x44] sm:$0x1]
      %v255 = vld [vmem:[%s203 + $0x50] sm:$0x1]
      %v256 = vld [vmem:[%s203 + $0x5c] sm:$0x1]
      %v257 = vld [vmem:[%s203 + $0x68] sm:$0x1]
      %v258 = vld [vmem:[%s203 + $0x74] sm:$0x1]
      %v259 = vld [vmem:[%s203 + $0x80] sm:$0x1]
      %v260 = vld [vmem:[%s203 + $0x8c] sm:$0x1]
      %v261 = vld [vmem:[%s203 + $0x98] sm:$0x1]
      %v262 = vld [vmem:[%s203 + $0xa4] sm:$0x1]
      %v263 = vld [vmem:[%s203 + $0xb0] sm:$0x1]
      %v264 = vld [vmem:[%s203 + $0xbc] sm:$0x1]
      %vm265 = vsmask.f32 3328
      %vm266 = vsmask.f32 7440
      %vm267 = vmor %vm265, %vm266
      %v269 = vshrl.u32 %v216, 16
      %v271 = vrot.slane %v269, 4
      %v272 = vshll.u32 %v216, 16
      %v274 = vrot.slane %v272, 5
      %v275 = vor.u32 %v271, %v274
      %v276 = vrot.slane %v275, 4
      %v278 = vshll.u32 %v217, 16
      %v280 = vrot.slane %v278, 5
      %v281 = vsel %vm267, %v276, %v280
      %v282 = vshrl.u32 %v217, 16
      %v284 = vrot.slane %v282, 4
      %v285 = vor.u32 %v284, %v280
      %v286 = vrot.slane %v285, 4
      %v288 = vshll.u32 %v249, 16
      %v290 = vrot.slane %v288, 5
      %v291 = vsel %vm267, %v286, %v290
      %v293 = vshrl.u32 %v218, 16
      %v295 = vrot.slane %v293, 4
      %v296 = vshll.u32 %v218, 16
      %v298 = vrot.slane %v296, 5
      %v299 = vor.u32 %v295, %v298
      %v300 = vrot.slane %v299, 4
      %v302 = vshll.u32 %v219, 16
      %v304 = vrot.slane %v302, 5
      %v305 = vsel %vm267, %v300, %v304
      %v306 = vshrl.u32 %v219, 16
      %v308 = vrot.slane %v306, 4
      %v309 = vor.u32 %v308, %v304
      %v310 = vrot.slane %v309, 4
      %v312 = vshll.u32 %v250, 16
      %v314 = vrot.slane %v312, 5
      %v315 = vsel %vm267, %v310, %v314
      %v317 = vshrl.u32 %v220, 16
      %v319 = vrot.slane %v317, 4
      %v320 = vshll.u32 %v220, 16
      %v322 = vrot.slane %v320, 5
      %v323 = vor.u32 %v319, %v322
      %v324 = vrot.slane %v323, 4
      %v326 = vshll.u32 %v221, 16
      %v328 = vrot.slane %v326, 5
      %v329 = vsel %vm267, %v324, %v328
      %v330 = vshrl.u32 %v221, 16
      %v332 = vrot.slane %v330, 4
      %v333 = vor.u32 %v332, %v328
      %v334 = vrot.slane %v333, 4
      %v336 = vshll.u32 %v251, 16
      %v338 = vrot.slane %v336, 5
      %v339 = vsel %vm267, %v334, %v338
      %v341 = vshrl.u32 %v222, 16
      %v343 = vrot.slane %v341, 4
      %v344 = vshll.u32 %v222, 16
      %v346 = vrot.slane %v344, 5
      %v347 = vor.u32 %v343, %v346
      %v348 = vrot.slane %v347, 4
      %v350 = vshll.u32 %v223, 16
      %v352 = vrot.slane %v350, 5
      %v353 = vsel %vm267, %v348, %v352
      %v354 = vshrl.u32 %v223, 16
      %v356 = vrot.slane %v354, 4
      %v357 = vor.u32 %v356, %v352
      %v358 = vrot.slane %v357, 4
      %v360 = vshll.u32 %v252, 16
      %v362 = vrot.slane %v360, 5
      %v363 = vsel %vm267, %v358, %v362
      %v365 = vshrl.u32 %v224, 16
      %v367 = vrot.slane %v365, 4
      %v368 = vshll.u32 %v224, 16
      %v370 = vrot.slane %v368, 5
      %v371 = vor.u32 %v367, %v370
      %v372 = vrot.slane %v371, 4
      %v374 = vshll.u32 %v225, 16
      %v376 = vrot.slane %v374, 5
      %v377 = vsel %vm267, %v372, %v376
      %v378 = vshrl.u32 %v225, 16
      %v380 = vrot.slane %v378, 4
      %v381 = vor.u32 %v380, %v376
      %v382 = vrot.slane %v381, 4
      %v384 = vshll.u32 %v253, 16
      %v386 = vrot.slane %v384, 5
      %v387 = vsel %vm267, %v382, %v386
      %v389 = vshrl.u32 %v226, 16
      %v391 = vrot.slane %v389, 4
      %v392 = vshll.u32 %v226, 16
      %v394 = vrot.slane %v392, 5
      %v395 = vor.u32 %v391, %v394
      %v396 = vrot.slane %v395, 4
      %v398 = vshll.u32 %v227, 16
      %v400 = vrot.slane %v398, 5
      %v401 = vsel %vm267, %v396, %v400
      %v402 = vshrl.u32 %v227, 16
      %v404 = vrot.slane %v402, 4
      %v405 = vor.u32 %v404, %v400
      %v406 = vrot.slane %v405, 4
      %v408 = vshll.u32 %v254, 16
      %v410 = vrot.slane %v408, 5
      %v411 = vsel %vm267, %v406, %v410
      %v413 = vshrl.u32 %v228, 16
      %v415 = vrot.slane %v413, 4
      %v416 = vshll.u32 %v228, 16
      %v418 = vrot.slane %v416, 5
      %v419 = vor.u32 %v415, %v418
      %v420 = vrot.slane %v419, 4
      %v422 = vshll.u32 %v229, 16
      %v424 = vrot.slane %v422, 5
      %v425 = vsel %vm267, %v420, %v424
      %v426 = vshrl.u32 %v229, 16
      %v428 = vrot.slane %v426, 4
      %v429 = vor.u32 %v428, %v424
      %v430 = vrot.slane %v429, 4
      %v432 = vshll.u32 %v255, 16
      %v434 = vrot.slane %v432, 5
      %v435 = vsel %vm267, %v430, %v434
      %v437 = vshrl.u32 %v230, 16
      %v439 = vrot.slane %v437, 4
      %v440 = vshll.u32 %v230, 16
      %v442 = vrot.slane %v440, 5
      %v443 = vor.u32 %v439, %v442
      %v444 = vrot.slane %v443, 4
      %v446 = vshll.u32 %v231, 16
      %v448 = vrot.slane %v446, 5
      %v449 = vsel %vm267, %v444, %v448
      %v450 = vshrl.u32 %v231, 16
      %v452 = vrot.slane %v450, 4
      %v453 = vor.u32 %v452, %v448
      %v454 = vrot.slane %v453, 4
      %v456 = vshll.u32 %v256, 16
      %v458 = vrot.slane %v456, 5
      %v459 = vsel %vm267, %v454, %v458
      %v461 = vshrl.u32 %v232, 16
      %v463 = vrot.slane %v461, 4
      %v464 = vshll.u32 %v232, 16
      %v466 = vrot.slane %v464, 5
      %v467 = vor.u32 %v463, %v466
      %v468 = vrot.slane %v467, 4
      %v470 = vshll.u32 %v233, 16
      %v472 = vrot.slane %v470, 5
      %v473 = vsel %vm267, %v468, %v472
      %v474 = vshrl.u32 %v233, 16
      %v476 = vrot.slane %v474, 4
      %v477 = vor.u32 %v476, %v472
      %v478 = vrot.slane %v477, 4
      %v480 = vshll.u32 %v257, 16
      %v482 = vrot.slane %v480, 5
      %v483 = vsel %vm267, %v478, %v482
      %v485 = vshrl.u32 %v234, 16
      %v487 = vrot.slane %v485, 4
      %v488 = vshll.u32 %v234, 16
      %v490 = vrot.slane %v488, 5
      %v491 = vor.u32 %v487, %v490
      %v492 = vrot.slane %v491, 4
      %v494 = vshll.u32 %v235, 16
      %v496 = vrot.slane %v494, 5
      %v497 = vsel %vm267, %v492, %v496
      %v498 = vshrl.u32 %v235, 16
      %v500 = vrot.slane %v498, 4
      %v501 = vor.u32 %v500, %v496
      %v502 = vrot.slane %v501, 4
      %v504 = vshll.u32 %v258, 16
      %v506 = vrot.slane %v504, 5
      %v507 = vsel %vm267, %v502, %v506
      %v509 = vshrl.u32 %v236, 16
      %v511 = vrot.slane %v509, 4
      %v512 = vshll.u32 %v236, 16
      %v514 = vrot.slane %v512, 5
      %v515 = vor.u32 %v511, %v514
      %v516 = vrot.slane %v515, 4
      %v518 = vshll.u32 %v237, 16
      %v520 = vrot.slane %v518, 5
      %v521 = vsel %vm267, %v516, %v520
      %v522 = vshrl.u32 %v237, 16
      %v524 = vrot.slane %v522, 4
      %v525 = vor.u32 %v524, %v520
      %v526 = vrot.slane %v525, 4
      %v528 = vshll.u32 %v259, 16
      %v530 = vrot.slane %v528, 5
      %v531 = vsel %vm267, %v526, %v530
      %v533 = vshrl.u32 %v238, 16
      %v535 = vrot.slane %v533, 4
      %v536 = vshll.u32 %v238, 16
      %v538 = vrot.slane %v536, 5
      %v539 = vor.u32 %v535, %v538
      %v540 = vrot.slane %v539, 4
      %v542 = vshll.u32 %v239, 16
      %v544 = vrot.slane %v542, 5
      %v545 = vsel %vm267, %v540, %v544
      %v546 = vshrl.u32 %v239, 16
      %v548 = vrot.slane %v546, 4
      %v549 = vor.u32 %v548, %v544
      %v550 = vrot.slane %v549, 4
      %v552 = vshll.u32 %v260, 16
      %v554 = vrot.slane %v552, 5
      %v555 = vsel %vm267, %v550, %v554
      %v557 = vshrl.u32 %v240, 16
      %v559 = vrot.slane %v557, 4
      %v560 = vshll.u32 %v240, 16
      %v562 = vrot.slane %v560, 5
      %v563 = vor.u32 %v559, %v562
      %v564 = vrot.slane %v563, 4
      %v566 = vshll.u32 %v241, 16
      %v568 = vrot.slane %v566, 5
      %v569 = vsel %vm267, %v564, %v568
      %v570 = vshrl.u32 %v241, 16
      %v572 = vrot.slane %v570, 4
      %v573 = vor.u32 %v572, %v568
      %v574 = vrot.slane %v573, 4
      %v576 = vshll.u32 %v261, 16
      %v578 = vrot.slane %v576, 5
      %v579 = vsel %vm267, %v574, %v578
      %v581 = vshrl.u32 %v242, 16
      %v583 = vrot.slane %v581, 4
      %v584 = vshll.u32 %v242, 16
      %v586 = vrot.slane %v584, 5
      %v587 = vor.u32 %v583, %v586
      %v588 = vrot.slane %v587, 4
      %v590 = vshll.u32 %v243, 16
      %v592 = vrot.slane %v590, 5
      %v593 = vsel %vm267, %v588, %v592
      %v594 = vshrl.u32 %v243, 16
      %v596 = vrot.slane %v594, 4
      %v597 = vor.u32 %v596, %v592
      %v598 = vrot.slane %v597, 4
      %v600 = vshll.u32 %v262, 16
      %v602 = vrot.slane %v600, 5
      %v603 = vsel %vm267, %v598, %v602
      %v605 = vshrl.u32 %v244, 16
      %v607 = vrot.slane %v605, 4
      %v608 = vshll.u32 %v244, 16
      %v610 = vrot.slane %v608, 5
      %v611 = vor.u32 %v607, %v610
      %v612 = vrot.slane %v611, 4
      %v614 = vshll.u32 %v245, 16
      %v616 = vrot.slane %v614, 5
      %v617 = vsel %vm267, %v612, %v616
      %v618 = vshrl.u32 %v245, 16
      %v620 = vrot.slane %v618, 4
      %v621 = vor.u32 %v620, %v616
      %v622 = vrot.slane %v621, 4
      %v624 = vshll.u32 %v263, 16
      %v626 = vrot.slane %v624, 5
      %v627 = vsel %vm267, %v622, %v626
      %v629 = vshrl.u32 %v246, 16
      %v631 = vrot.slane %v629, 4
      %v632 = vshll.u32 %v246, 16
      %v634 = vrot.slane %v632, 5
      %v635 = vor.u32 %v631, %v634
      %v636 = vrot.slane %v635, 4
      %v638 = vshll.u32 %v247, 16
      %v640 = vrot.slane %v638, 5
      %v641 = vsel %vm267, %v636, %v640
      %v642 = vshrl.u32 %v247, 16
      %v644 = vrot.slane %v642, 4
      %v645 = vor.u32 %v644, %v640
      %v646 = vrot.slane %v645, 4
      %v648 = vshll.u32 %v264, 16
      %v650 = vrot.slane %v648, 5
      %v651 = vsel %vm267, %v646, %v650
      %s652 = scalar_lea.vmem %s1, 2
      %v653 = vld [vmem:[%s652] sm:$0x3]
      %v654 = vunpack.c.l.b16 %v281
      %v655 = vunpack.c.l.b16 %v291
      %v656 = vunpack.c.l.b16 %v305
      %v657 = vunpack.c.l.b16 %v315
      %v658 = vunpack.c.l.b16 %v329
      %v659 = vunpack.c.l.b16 %v339
      %v660 = vunpack.c.l.b16 %v353
      %v661 = vunpack.c.l.b16 %v363
      %v662 = vunpack.c.l.b16 %v377
      %v663 = vunpack.c.l.b16 %v387
      %v664 = vunpack.c.l.b16 %v401
      %v665 = vunpack.c.l.b16 %v411
      %v666 = vunpack.c.l.b16 %v425
      %v667 = vunpack.c.l.b16 %v435
      %v668 = vunpack.c.l.b16 %v449
      %v669 = vunpack.c.l.b16 %v459
      %v670 = vunpack.c.l.b16 %v473
      %v671 = vunpack.c.l.b16 %v483
      %v672 = vunpack.c.l.b16 %v497
      %v673 = vunpack.c.l.b16 %v507
      %v674 = vunpack.c.l.b16 %v521
      %v675 = vunpack.c.l.b16 %v531
      %v676 = vunpack.c.l.b16 %v545
      %v677 = vunpack.c.l.b16 %v555
      %v678 = vunpack.c.l.b16 %v569
      %v679 = vunpack.c.l.b16 %v579
      %v680 = vunpack.c.l.b16 %v593
      %v681 = vunpack.c.l.b16 %v603
      %v682 = vunpack.c.l.b16 %v617
      %v683 = vunpack.c.l.b16 %v627
      %v684 = vunpack.c.l.b16 %v641
      %v685 = vunpack.c.l.b16 %v651
      %v686 = vpack.c.b16 %v655, %v654
      %v687 = vpack.c.b16 %v657, %v656
      %v688 = vpack.c.b16 %v659, %v658
      %v689 = vpack.c.b16 %v661, %v660
      %v690 = vpack.c.b16 %v663, %v662
      %v691 = vpack.c.b16 %v665, %v664
      %v692 = vpack.c.b16 %v667, %v666
      %v693 = vpack.c.b16 %v669, %v668
      %v694 = vpack.c.b16 %v671, %v670
      %v695 = vpack.c.b16 %v673, %v672
      %v696 = vpack.c.b16 %v675, %v674
      %v697 = vpack.c.b16 %v677, %v676
      %v698 = vpack.c.b16 %v679, %v678
      %v699 = vpack.c.b16 %v681, %v680
      %v700 = vpack.c.b16 %v683, %v682
      %v701 = vpack.c.b16 %v685, %v684
      %vm702 = vcmask 31744
      %v704 = vsel %vm702, %v686, 0
      %v707 = vsel %vm702, %v687, 0
      %v710 = vsel %vm702, %v688, 0
      %v713 = vsel %vm702, %v689, 0
      %v716 = vsel %vm702, %v690, 0
      %v719 = vsel %vm702, %v691, 0
      %v722 = vsel %vm702, %v692, 0
      %v725 = vsel %vm702, %v693, 0
      %v728 = vsel %vm702, %v694, 0
      %v731 = vsel %vm702, %v695, 0
      %v734 = vsel %vm702, %v696, 0
      %v737 = vsel %vm702, %v697, 0
      %v740 = vsel %vm702, %v698, 0
      %v743 = vsel %vm702, %v699, 0
      %v746 = vsel %vm702, %v700, 0
      %v749 = vsel %vm702, %v701, 0
      %vm751 = vcmask 1041408
      %v753 = vsel %vm751, %v653, 0
      %755 = vmatprep.subr.bf16.mxu0 0
      %756 = vmatpush1.bf16.msra.mxu0 0
      %757 = vmatprep.subr.bf16.mxu0 0
      %758 = vmatpush1.bf16.msra.mxu0 0
      %759 = vmatprep.subr.bf16.mxu0 0
      %760 = vmatpush1.bf16.msra.mxu0 0
      %761 = vmatprep.subr.bf16.mxu0 0
      %762 = vmatpush1.bf16.msra.mxu0 0
      %763 = vmatprep.subr.bf16.mxu0 0
      %764 = vmatpush1.bf16.msra.mxu0 0
      %765 = vmatprep.subr.bf16.mxu0 0
      %766 = vmatpush1.bf16.msra.mxu0 0
      %767 = vmatprep.subr.bf16.mxu0 0
      %768 = vmatpush1.bf16.msra.mxu0 0
      %769 = vmatprep.subr.bf16.mxu0 0
      %770 = vmatpush1.bf16.msra.mxu0 %v753
      %771 = vmatprep.subr.bf16.mxu0 0
      %772 = vmatpush2.bf16.msra.mxu0 0
      %773 = vmatprep.subr.bf16.mxu0 0
      %774 = vmatpush2.bf16.msra.mxu0 0
      %775 = vmatprep.subr.bf16.mxu0 0
      %776 = vmatpush2.bf16.msra.mxu0 0
      %777 = vmatprep.subr.bf16.mxu0 0
      %778 = vmatpush2.bf16.msra.mxu0 0
      %779 = vmatprep.subr.bf16.mxu0 0
      %780 = vmatpush2.bf16.msra.mxu0 0
      %781 = vmatprep.subr.bf16.mxu0 0
      %782 = vmatpush2.bf16.msra.mxu0 0
      %783 = vmatprep.subr.bf16.mxu0 0
      %784 = vmatpush2.bf16.msra.mxu0 0
      %785 = vmatprep.subr.bf16.mxu0 0
      %786 = vmatpush2.bf16.msra.mxu0 0
      %787 = vmatprep.mubr.bf16.mxu0 0
      %788 = vmatmul.mubr.bf16.gmra.mxu0 %v704
      %v789 = vpop.f32.mrf.mxu0
      %v790 = vadd.f32 0.0, %v789
      %v791 = vpop.f32.mrf.mxu0
      %v792 = vpop.f32.mrf.mxu0
      %v793 = vadd.f32 0.0, %v792
      %v794 = vpop.f32.mrf.mxu0
      %795 = vmatprep.mubr.bf16.mxu0 0
      %796 = vmatmul.mubr.bf16.gmra.mxu0 %v707
      %v797 = vpop.f32.mrf.mxu0
      %v798 = vadd.f32 0.0, %v797
      %v799 = vpop.f32.mrf.mxu0
      %v800 = vpop.f32.mrf.mxu0
      %v801 = vadd.f32 0.0, %v800
      %v802 = vpop.f32.mrf.mxu0
      %803 = vmatprep.mubr.bf16.mxu0 0
      %804 = vmatmul.mubr.bf16.gmra.mxu0 %v710
      %v805 = vpop.f32.mrf.mxu0
      %v806 = vadd.f32 0.0, %v805
      %v807 = vpop.f32.mrf.mxu0
      %v808 = vpop.f32.mrf.mxu0
      %v809 = vadd.f32 0.0, %v808
      %v810 = vpop.f32.mrf.mxu0
      %811 = vmatprep.mubr.bf16.mxu0 0
      %812 = vmatmul.mubr.bf16.gmra.mxu0 %v713
      %v813 = vpop.f32.mrf.mxu0
      %v814 = vadd.f32 0.0, %v813
      %v815 = vpop.f32.mrf.mxu0
      %v816 = vpop.f32.mrf.mxu0
      %v817 = vadd.f32 0.0, %v816
      %v818 = vpop.f32.mrf.mxu0
      %819 = vmatprep.mubr.bf16.mxu0 0
      %820 = vmatmul.mubr.bf16.gmra.mxu0 %v716
      %v821 = vpop.f32.mrf.mxu0
      %v822 = vadd.f32 0.0, %v821
      %v823 = vpop.f32.mrf.mxu0
      %v824 = vpop.f32.mrf.mxu0
      %v825 = vadd.f32 0.0, %v824
      %v826 = vpop.f32.mrf.mxu0
      %827 = vmatprep.mubr.bf16.mxu0 0
      %828 = vmatmul.mubr.bf16.gmra.mxu0 %v719
      %v829 = vpop.f32.mrf.mxu0
      %v830 = vadd.f32 0.0, %v829
      %v831 = vpop.f32.mrf.mxu0
      %v832 = vpop.f32.mrf.mxu0
      %v833 = vadd.f32 0.0, %v832
      %v834 = vpop.f32.mrf.mxu0
      %835 = vmatprep.mubr.bf16.mxu0 0
      %836 = vmatmul.mubr.bf16.gmra.mxu0 %v722
      %v837 = vpop.f32.mrf.mxu0
      %v838 = vadd.f32 0.0, %v837
      %v839 = vpop.f32.mrf.mxu0
      %v840 = vpop.f32.mrf.mxu0
      %v841 = vadd.f32 0.0, %v840
      %v842 = vpop.f32.mrf.mxu0
      %843 = vmatprep.mubr.bf16.mxu0 0
      %844 = vmatmul.mubr.bf16.gmra.mxu0 %v725
      %v845 = vpop.f32.mrf.mxu0
      %v846 = vadd.f32 0.0, %v845
      %v847 = vpop.f32.mrf.mxu0
      %v848 = vpop.f32.mrf.mxu0
      %v849 = vadd.f32 0.0, %v848
      %v850 = vpop.f32.mrf.mxu0
      %851 = vmatprep.mubr.bf16.mxu0 0
      %852 = vmatmul.mubr.bf16.gmra.mxu0 %v728
      %v853 = vpop.f32.mrf.mxu0
      %v854 = vadd.f32 0.0, %v853
      %v855 = vpop.f32.mrf.mxu0
      %v856 = vpop.f32.mrf.mxu0
      %v857 = vadd.f32 0.0, %v856
      %v858 = vpop.f32.mrf.mxu0
      %859 = vmatprep.mubr.bf16.mxu0 0
      %860 = vmatmul.mubr.bf16.gmra.mxu0 %v731
      %v861 = vpop.f32.mrf.mxu0
      %v862 = vadd.f32 0.0, %v861
      %v863 = vpop.f32.mrf.mxu0
      %v864 = vpop.f32.mrf.mxu0
      %v865 = vadd.f32 0.0, %v864
      %v866 = vpop.f32.mrf.mxu0
      %867 = vmatprep.mubr.bf16.mxu0 0
      %868 = vmatmul.mubr.bf16.gmra.mxu0 %v734
      %v869 = vpop.f32.mrf.mxu0
      %v870 = vadd.f32 0.0, %v869
      %v871 = vpop.f32.mrf.mxu0
      %v872 = vpop.f32.mrf.mxu0
      %v873 = vadd.f32 0.0, %v872
      %v874 = vpop.f32.mrf.mxu0
      %875 = vmatprep.mubr.bf16.mxu0 0
      %876 = vmatmul.mubr.bf16.gmra.mxu0 %v737
      %v877 = vpop.f32.mrf.mxu0
      %v878 = vadd.f32 0.0, %v877
      %v879 = vpop.f32.mrf.mxu0
      %v880 = vpop.f32.mrf.mxu0
      %v881 = vadd.f32 0.0, %v880
      %v882 = vpop.f32.mrf.mxu0
      %883 = vmatprep.mubr.bf16.mxu0 0
      %884 = vmatmul.mubr.bf16.gmra.mxu0 %v740
      %v885 = vpop.f32.mrf.mxu0
      %v886 = vadd.f32 0.0, %v885
      %v887 = vpop.f32.mrf.mxu0
      %v888 = vpop.f32.mrf.mxu0
      %v889 = vadd.f32 0.0, %v888
      %v890 = vpop.f32.mrf.mxu0
      %891 = vmatprep.mubr.bf16.mxu0 0
      %892 = vmatmul.mubr.bf16.gmra.mxu0 %v743
      %v893 = vpop.f32.mrf.mxu0
      %v894 = vadd.f32 0.0, %v893
      %v895 = vpop.f32.mrf.mxu0
      %v896 = vpop.f32.mrf.mxu0
      %v897 = vadd.f32 0.0, %v896
      %v898 = vpop.f32.mrf.mxu0
      %899 = vmatprep.mubr.bf16.mxu0 0
      %900 = vmatmul.mubr.bf16.gmra.mxu0 %v746
      %v901 = vpop.f32.mrf.mxu0
      %v902 = vadd.f32 0.0, %v901
      %v903 = vpop.f32.mrf.mxu0
      %v904 = vpop.f32.mrf.mxu0
      %v905 = vadd.f32 0.0, %v904
      %v906 = vpop.f32.mrf.mxu0
      %907 = vmatprep.mubr.bf16.mxu0 0
      %908 = vmatmul.mubr.bf16.gmra.mxu0 %v749
      %v909 = vpop.f32.mrf.mxu0
      %v910 = vadd.f32 0.0, %v909
      %v911 = vpop.f32.mrf.mxu0
      %v912 = vpop.f32.mrf.mxu0
      %v913 = vadd.f32 0.0, %v912
      %v914 = vpop.f32.mrf.mxu0
      %915 = vdwg.mxu0
      %v948 = vunpack.c.l.b16 %v216
      %v949 = vunpack.c.l.b16 %v217
      %v950 = vunpack.c.l.b16 %v218
      %v951 = vunpack.c.l.b16 %v219
      %v952 = vunpack.c.l.b16 %v220
      %v953 = vunpack.c.l.b16 %v221
      %v954 = vunpack.c.l.b16 %v222
      %v955 = vunpack.c.l.b16 %v223
      %v956 = vunpack.c.l.b16 %v224
      %v957 = vunpack.c.l.b16 %v225
      %v958 = vunpack.c.l.b16 %v226
      %v959 = vunpack.c.l.b16 %v227
      %v960 = vunpack.c.l.b16 %v228
      %v961 = vunpack.c.l.b16 %v229
      %v962 = vunpack.c.l.b16 %v230
      %v963 = vunpack.c.l.b16 %v231
      %v964 = vunpack.c.l.b16 %v232
      %v965 = vunpack.c.l.b16 %v233
      %v966 = vunpack.c.l.b16 %v234
      %v967 = vunpack.c.l.b16 %v235
      %v968 = vunpack.c.l.b16 %v236
      %v969 = vunpack.c.l.b16 %v237
      %v970 = vunpack.c.l.b16 %v238
      %v971 = vunpack.c.l.b16 %v239
      %v972 = vunpack.c.l.b16 %v240
      %v973 = vunpack.c.l.b16 %v241
      %v974 = vunpack.c.l.b16 %v242
      %v975 = vunpack.c.l.b16 %v243
      %v976 = vunpack.c.l.b16 %v244
      %v977 = vunpack.c.l.b16 %v245
      %v978 = vunpack.c.l.b16 %v246
      %v979 = vunpack.c.l.b16 %v247
      %v980 = vpack.c.b16 %v949, %v948
      %v981 = vpack.c.b16 %v951, %v950
      %v982 = vpack.c.b16 %v953, %v952
      %v983 = vpack.c.b16 %v955, %v954
      %v984 = vpack.c.b16 %v957, %v956
      %v985 = vpack.c.b16 %v959, %v958
      %v986 = vpack.c.b16 %v961, %v960
      %v987 = vpack.c.b16 %v963, %v962
      %v988 = vpack.c.b16 %v965, %v964
      %v989 = vpack.c.b16 %v967, %v966
      %v990 = vpack.c.b16 %v969, %v968
      %v991 = vpack.c.b16 %v971, %v970
      %v992 = vpack.c.b16 %v973, %v972
      %v993 = vpack.c.b16 %v975, %v974
      %v994 = vpack.c.b16 %v977, %v976
      %v995 = vpack.c.b16 %v979, %v978
      %v997 = vsel %vm702, %v980, 0
      %v1000 = vsel %vm702, %v981, 0
      %v1003 = vsel %vm702, %v982, 0
      %v1006 = vsel %vm702, %v983, 0
      %v1009 = vsel %vm702, %v984, 0
      %v1012 = vsel %vm702, %v985, 0
      %v1015 = vsel %vm702, %v986, 0
      %v1018 = vsel %vm702, %v987, 0
      %v1021 = vsel %vm702, %v988, 0
      %v1024 = vsel %vm702, %v989, 0
      %v1027 = vsel %vm702, %v990, 0
      %v1030 = vsel %vm702, %v991, 0
      %v1033 = vsel %vm702, %v992, 0
      %v1036 = vsel %vm702, %v993, 0
      %v1039 = vsel %vm702, %v994, 0
      %v1042 = vsel %vm702, %v995, 0
      %v1045 = vsel %vm751, %v248, 0
      %1047 = vmatprep.subr.bf16.mxu0 0
      %1048 = vmatpush1.bf16.msra.mxu0 0
      %1049 = vmatprep.subr.bf16.mxu0 0
      %1050 = vmatpush1.bf16.msra.mxu0 0
      %1051 = vmatprep.subr.bf16.mxu0 0
      %1052 = vmatpush1.bf16.msra.mxu0 0
      %1053 = vmatprep.subr.bf16.mxu0 0
      %1054 = vmatpush1.bf16.msra.mxu0 0
      %1055 = vmatprep.subr.bf16.mxu0 0
      %1056 = vmatpush1.bf16.msra.mxu0 0
      %1057 = vmatprep.subr.bf16.mxu0 0
      %1058 = vmatpush1.bf16.msra.mxu0 0
      %1059 = vmatprep.subr.bf16.mxu0 0
      %1060 = vmatpush1.bf16.msra.mxu0 0
      %1061 = vmatprep.subr.bf16.mxu0 0
      %1062 = vmatpush1.bf16.msra.mxu0 %v1045
      %1063 = vmatprep.subr.bf16.mxu0 0
      %1064 = vmatpush2.bf16.msra.mxu0 0
      %1065 = vmatprep.subr.bf16.mxu0 0
      %1066 = vmatpush2.bf16.msra.mxu0 0
      %1067 = vmatprep.subr.bf16.mxu0 0
      %1068 = vmatpush2.bf16.msra.mxu0 0
      %1069 = vmatprep.subr.bf16.mxu0 0
      %1070 = vmatpush2.bf16.msra.mxu0 0
      %1071 = vmatprep.subr.bf16.mxu0 0
      %1072 = vmatpush2.bf16.msra.mxu0 0
      %1073 = vmatprep.subr.bf16.mxu0 0
      %1074 = vmatpush2.bf16.msra.mxu0 0
      %1075 = vmatprep.subr.bf16.mxu0 0
      %1076 = vmatpush2.bf16.msra.mxu0 0
      %1077 = vmatprep.subr.bf16.mxu0 0
      %1078 = vmatpush2.bf16.msra.mxu0 0
      %1079 = vmatprep.mubr.bf16.mxu0 0
      %1080 = vmatmul.mubr.bf16.gmra.mxu0 %v997
      %v1081 = vpop.f32.mrf.mxu0
      %v1082 = vadd.f32 %v790, %v1081
      %v1083 = vpop.f32.mrf.mxu0
      %v1084 = vpop.f32.mrf.mxu0
      %v1085 = vadd.f32 %v793, %v1084
      %v1086 = vpop.f32.mrf.mxu0
      %1087 = vmatprep.mubr.bf16.mxu0 0
      %1088 = vmatmul.mubr.bf16.gmra.mxu0 %v1000
      %v1089 = vpop.f32.mrf.mxu0
      %v1090 = vadd.f32 %v798, %v1089
      %v1091 = vpop.f32.mrf.mxu0
      %v1092 = vpop.f32.mrf.mxu0
      %v1093 = vadd.f32 %v801, %v1092
      %v1094 = vpop.f32.mrf.mxu0
      %1095 = vmatprep.mubr.bf16.mxu0 0
      %1096 = vmatmul.mubr.bf16.gmra.mxu0 %v1003
      %v1097 = vpop.f32.mrf.mxu0
      %v1098 = vadd.f32 %v806, %v1097
      %v1099 = vpop.f32.mrf.mxu0
      %v1100 = vpop.f32.mrf.mxu0
      %v1101 = vadd.f32 %v809, %v1100
      %v1102 = vpop.f32.mrf.mxu0
      %1103 = vmatprep.mubr.bf16.mxu0 0
      %1104 = vmatmul.mubr.bf16.gmra.mxu0 %v1006
      %v1105 = vpop.f32.mrf.mxu0
      %v1106 = vadd.f32 %v814, %v1105
      %v1107 = vpop.f32.mrf.mxu0
      %v1108 = vpop.f32.mrf.mxu0
      %v1109 = vadd.f32 %v817, %v1108
      %v1110 = vpop.f32.mrf.mxu0
      %1111 = vmatprep.mubr.bf16.mxu0 0
      %1112 = vmatmul.mubr.bf16.gmra.mxu0 %v1009
      %v1113 = vpop.f32.mrf.mxu0
      %v1114 = vadd.f32 %v822, %v1113
      %v1115 = vpop.f32.mrf.mxu0
      %v1116 = vpop.f32.mrf.mxu0
      %v1117 = vadd.f32 %v825, %v1116
      %v1118 = vpop.f32.mrf.mxu0
      %1119 = vmatprep.mubr.bf16.mxu0 0
      %1120 = vmatmul.mubr.bf16.gmra.mxu0 %v1012
      %v1121 = vpop.f32.mrf.mxu0
      %v1122 = vadd.f32 %v830, %v1121
      %v1123 = vpop.f32.mrf.mxu0
      %v1124 = vpop.f32.mrf.mxu0
      %v1125 = vadd.f32 %v833, %v1124
      %v1126 = vpop.f32.mrf.mxu0
      %1127 = vmatprep.mubr.bf16.mxu0 0
      %1128 = vmatmul.mubr.bf16.gmra.mxu0 %v1015
      %v1129 = vpop.f32.mrf.mxu0
      %v1130 = vadd.f32 %v838, %v1129
      %v1131 = vpop.f32.mrf.mxu0
      %v1132 = vpop.f32.mrf.mxu0
      %v1133 = vadd.f32 %v841, %v1132
      %v1134 = vpop.f32.mrf.mxu0
      %1135 = vmatprep.mubr.bf16.mxu0 0
      %1136 = vmatmul.mubr.bf16.gmra.mxu0 %v1018
      %v1137 = vpop.f32.mrf.mxu0
      %v1138 = vadd.f32 %v846, %v1137
      %v1139 = vpop.f32.mrf.mxu0
      %v1140 = vpop.f32.mrf.mxu0
      %v1141 = vadd.f32 %v849, %v1140
      %v1142 = vpop.f32.mrf.mxu0
      %1143 = vmatprep.mubr.bf16.mxu0 0
      %1144 = vmatmul.mubr.bf16.gmra.mxu0 %v1021
      %v1145 = vpop.f32.mrf.mxu0
      %v1146 = vadd.f32 %v854, %v1145
      %v1147 = vpop.f32.mrf.mxu0
      %v1148 = vpop.f32.mrf.mxu0
      %v1149 = vadd.f32 %v857, %v1148
      %v1150 = vpop.f32.mrf.mxu0
      %1151 = vmatprep.mubr.bf16.mxu0 0
      %1152 = vmatmul.mubr.bf16.gmra.mxu0 %v1024
      %v1153 = vpop.f32.mrf.mxu0
      %v1154 = vadd.f32 %v862, %v1153
      %v1155 = vpop.f32.mrf.mxu0
      %v1156 = vpop.f32.mrf.mxu0
      %v1157 = vadd.f32 %v865, %v1156
      %v1158 = vpop.f32.mrf.mxu0
      %1159 = vmatprep.mubr.bf16.mxu0 0
      %1160 = vmatmul.mubr.bf16.gmra.mxu0 %v1027
      %v1161 = vpop.f32.mrf.mxu0
      %v1162 = vadd.f32 %v870, %v1161
      %v1163 = vpop.f32.mrf.mxu0
      %v1164 = vpop.f32.mrf.mxu0
      %v1165 = vadd.f32 %v873, %v1164
      %v1166 = vpop.f32.mrf.mxu0
      %1167 = vmatprep.mubr.bf16.mxu0 0
      %1168 = vmatmul.mubr.bf16.gmra.mxu0 %v1030
      %v1169 = vpop.f32.mrf.mxu0
      %v1170 = vadd.f32 %v878, %v1169
      %v1171 = vpop.f32.mrf.mxu0
      %v1172 = vpop.f32.mrf.mxu0
      %v1173 = vadd.f32 %v881, %v1172
      %v1174 = vpop.f32.mrf.mxu0
      %1175 = vmatprep.mubr.bf16.mxu0 0
      %1176 = vmatmul.mubr.bf16.gmra.mxu0 %v1033
      %v1177 = vpop.f32.mrf.mxu0
      %v1178 = vadd.f32 %v886, %v1177
      %v1179 = vpop.f32.mrf.mxu0
      %v1180 = vpop.f32.mrf.mxu0
      %v1181 = vadd.f32 %v889, %v1180
      %v1182 = vpop.f32.mrf.mxu0
      %1183 = vmatprep.mubr.bf16.mxu0 0
      %1184 = vmatmul.mubr.bf16.gmra.mxu0 %v1036
      %v1185 = vpop.f32.mrf.mxu0
      %v1186 = vadd.f32 %v894, %v1185
      %v1187 = vpop.f32.mrf.mxu0
      %v1188 = vpop.f32.mrf.mxu0
      %v1189 = vadd.f32 %v897, %v1188
      %v1190 = vpop.f32.mrf.mxu0
      %1191 = vmatprep.mubr.bf16.mxu0 0
      %1192 = vmatmul.mubr.bf16.gmra.mxu0 %v1039
      %v1193 = vpop.f32.mrf.mxu0
      %v1194 = vadd.f32 %v902, %v1193
      %v1195 = vpop.f32.mrf.mxu0
      %v1196 = vpop.f32.mrf.mxu0
      %v1197 = vadd.f32 %v905, %v1196
      %v1198 = vpop.f32.mrf.mxu0
      %1199 = vmatprep.mubr.bf16.mxu0 0
      %1200 = vmatmul.mubr.bf16.gmra.mxu0 %v1042
      %v1201 = vpop.f32.mrf.mxu0
      %v1202 = vadd.f32 %v910, %v1201
      %v1203 = vpop.f32.mrf.mxu0
      %v1204 = vpop.f32.mrf.mxu0
      %v1205 = vadd.f32 %v913, %v1204
      %v1206 = vpop.f32.mrf.mxu0
      %1207 = vdwg.mxu0
      %v1208 = vld [vmem:[%s203] sm:$0xe]
      %v1209 = vld [vmem:[%s203 + $0xc] sm:$0xe]
      %v1210 = vld [vmem:[%s203 + $0x18] sm:$0xe]
      %v1211 = vld [vmem:[%s203 + $0x24] sm:$0xe]
      %v1212 = vld [vmem:[%s203 + $0x30] sm:$0xe]
      %v1213 = vld [vmem:[%s203 + $0x3c] sm:$0xe]
      %v1214 = vld [vmem:[%s203 + $0x48] sm:$0xe]
      %v1215 = vld [vmem:[%s203 + $0x54] sm:$0xe]
      %v1216 = vld [vmem:[%s203 + $0x60] sm:$0xe]
      %v1217 = vld [vmem:[%s203 + $0x6c] sm:$0xe]
      %v1218 = vld [vmem:[%s203 + $0x78] sm:$0xe]
      %v1219 = vld [vmem:[%s203 + $0x84] sm:$0xe]
      %v1220 = vld [vmem:[%s203 + $0x90] sm:$0xe]
      %v1221 = vld [vmem:[%s203 + $0x9c] sm:$0xe]
      %v1222 = vld [vmem:[%s203 + $0xa8] sm:$0xe]
      %v1223 = vld [vmem:[%s203 + $0xb4] sm:$0xe]
      %vm1256 = vcmask 1042432
      %vm1257 = vcmask 1046532
      %vm1258 = vmor %vm1256, %vm1257
      %v1259 = vrot.slane %v1208, 5
      %v1260 = vrot.slane %v1259, 4
      %v1261 = vrot.slane %v217, 5
      %v1262 = vsel %vm1258, %v1260, %v1261
      %v1263 = vrot.slane %v1261, 4
      %v1264 = vrot.slane %v249, 5
      %v1265 = vsel %vm1258, %v1263, %v1264
      %v1266 = vrot.slane %v1209, 5
      %v1267 = vrot.slane %v1266, 4
      %v1268 = vrot.slane %v219, 5
      %v1269 = vsel %vm1258, %v1267, %v1268
      %v1270 = vrot.slane %v1268, 4
      %v1271 = vrot.slane %v250, 5
      %v1272 = vsel %vm1258, %v1270, %v1271
      %v1273 = vrot.slane %v1210, 5
      %v1274 = vrot.slane %v1273, 4
      %v1275 = vrot.slane %v221, 5
      %v1276 = vsel %vm1258, %v1274, %v1275
      %v1277 = vrot.slane %v1275, 4
      %v1278 = vrot.slane %v251, 5
      %v1279 = vsel %vm1258, %v1277, %v1278
      %v1280 = vrot.slane %v1211, 5
      %v1281 = vrot.slane %v1280, 4
      %v1282 = vrot.slane %v223, 5
      %v1283 = vsel %vm1258, %v1281, %v1282
      %v1284 = vrot.slane %v1282, 4
      %v1285 = vrot.slane %v252, 5
      %v1286 = vsel %vm1258, %v1284, %v1285
      %v1287 = vrot.slane %v1212, 5
      %v1288 = vrot.slane %v1287, 4
      %v1289 = vrot.slane %v225, 5
      %v1290 = vsel %vm1258, %v1288, %v1289
      %v1291 = vrot.slane %v1289, 4
      %v1292 = vrot.slane %v253, 5
      %v1293 = vsel %vm1258, %v1291, %v1292
      %v1294 = vrot.slane %v1213, 5
      %v1295 = vrot.slane %v1294, 4
      %v1296 = vrot.slane %v227, 5
      %v1297 = vsel %vm1258, %v1295, %v1296
      %v1298 = vrot.slane %v1296, 4
      %v1299 = vrot.slane %v254, 5
      %v1300 = vsel %vm1258, %v1298, %v1299
      %v1301 = vrot.slane %v1214, 5
      %v1302 = vrot.slane %v1301, 4
      %v1303 = vrot.slane %v229, 5
      %v1304 = vsel %vm1258, %v1302, %v1303
      %v1305 = vrot.slane %v1303, 4
      %v1306 = vrot.slane %v255, 5
      %v1307 = vsel %vm1258, %v1305, %v1306
      %v1308 = vrot.slane %v1215, 5
      %v1309 = vrot.slane %v1308, 4
      %v1310 = vrot.slane %v231, 5
      %v1311 = vsel %vm1258, %v1309, %v1310
      %v1312 = vrot.slane %v1310, 4
      %v1313 = vrot.slane %v256, 5
      %v1314 = vsel %vm1258, %v1312, %v1313
      %v1315 = vrot.slane %v1216, 5
      %v1316 = vrot.slane %v1315, 4
      %v1317 = vrot.slane %v233, 5
      %v1318 = vsel %vm1258, %v1316, %v1317
      %v1319 = vrot.slane %v1317, 4
      %v1320 = vrot.slane %v257, 5
      %v1321 = vsel %vm1258, %v1319, %v1320
      %v1322 = vrot.slane %v1217, 5
      %v1323 = vrot.slane %v1322, 4
      %v1324 = vrot.slane %v235, 5
      %v1325 = vsel %vm1258, %v1323, %v1324
      %v1326 = vrot.slane %v1324, 4
      %v1327 = vrot.slane %v258, 5
      %v1328 = vsel %vm1258, %v1326, %v1327
      %v1329 = vrot.slane %v1218, 5
      %v1330 = vrot.slane %v1329, 4
      %v1331 = vrot.slane %v237, 5
      %v1332 = vsel %vm1258, %v1330, %v1331
      %v1333 = vrot.slane %v1331, 4
      %v1334 = vrot.slane %v259, 5
      %v1335 = vsel %vm1258, %v1333, %v1334
      %v1336 = vrot.slane %v1219, 5
      %v1337 = vrot.slane %v1336, 4
      %v1338 = vrot.slane %v239, 5
      %v1339 = vsel %vm1258, %v1337, %v1338
      %v1340 = vrot.slane %v1338, 4
      %v1341 = vrot.slane %v260, 5
      %v1342 = vsel %vm1258, %v1340, %v1341
      %v1343 = vrot.slane %v1220, 5
      %v1344 = vrot.slane %v1343, 4
      %v1345 = vrot.slane %v241, 5
      %v1346 = vsel %vm1258, %v1344, %v1345
      %v1347 = vrot.slane %v1345, 4
      %v1348 = vrot.slane %v261, 5
      %v1349 = vsel %vm1258, %v1347, %v1348
      %v1350 = vrot.slane %v1221, 5
      %v1351 = vrot.slane %v1350, 4
      %v1352 = vrot.slane %v243, 5
      %v1353 = vsel %vm1258, %v1351, %v1352
      %v1354 = vrot.slane %v1352, 4
      %v1355 = vrot.slane %v262, 5
      %v1356 = vsel %vm1258, %v1354, %v1355
      %v1357 = vrot.slane %v1222, 5
      %v1358 = vrot.slane %v1357, 4
      %v1359 = vrot.slane %v245, 5
      %v1360 = vsel %vm1258, %v1358, %v1359
      %v1361 = vrot.slane %v1359, 4
      %v1362 = vrot.slane %v263, 5
      %v1363 = vsel %vm1258, %v1361, %v1362
      %v1364 = vrot.slane %v1223, 5
      %v1365 = vrot.slane %v1364, 4
      %v1366 = vrot.slane %v247, 5
      %v1367 = vsel %vm1258, %v1365, %v1366
      %v1368 = vrot.slane %v1366, 4
      %v1369 = vrot.slane %v264, 5
      %v1370 = vsel %vm1258, %v1368, %v1369
      %s1371 = scalar_lea.vmem %s1, 4
      %v1372 = vld [vmem:[%s1371] sm:$0x3]
      %v1373 = vunpack.c.l.b16 %v1262
      %v1374 = vunpack.c.l.b16 %v1265
      %v1375 = vunpack.c.l.b16 %v1269
      %v1376 = vunpack.c.l.b16 %v1272
      %v1377 = vunpack.c.l.b16 %v1276
      %v1378 = vunpack.c.l.b16 %v1279
      %v1379 = vunpack.c.l.b16 %v1283
      %v1380 = vunpack.c.l.b16 %v1286
      %v1381 = vunpack.c.l.b16 %v1290
      %v1382 = vunpack.c.l.b16 %v1293
      %v1383 = vunpack.c.l.b16 %v1297
      %v1384 = vunpack.c.l.b16 %v1300
      %v1385 = vunpack.c.l.b16 %v1304
      %v1386 = vunpack.c.l.b16 %v1307
      %v1387 = vunpack.c.l.b16 %v1311
      %v1388 = vunpack.c.l.b16 %v1314
      %v1389 = vunpack.c.l.b16 %v1318
      %v1390 = vunpack.c.l.b16 %v1321
      %v1391 = vunpack.c.l.b16 %v1325
      %v1392 = vunpack.c.l.b16 %v1328
      %v1393 = vunpack.c.l.b16 %v1332
      %v1394 = vunpack.c.l.b16 %v1335
      %v1395 = vunpack.c.l.b16 %v1339
      %v1396 = vunpack.c.l.b16 %v1342
      %v1397 = vunpack.c.l.b16 %v1346
      %v1398 = vunpack.c.l.b16 %v1349
      %v1399 = vunpack.c.l.b16 %v1353
      %v1400 = vunpack.c.l.b16 %v1356
      %v1401 = vunpack.c.l.b16 %v1360
      %v1402 = vunpack.c.l.b16 %v1363
      %v1403 = vunpack.c.l.b16 %v1367
      %v1404 = vunpack.c.l.b16 %v1370
      %v1405 = vpack.c.b16 %v1374, %v1373
      %v1406 = vpack.c.b16 %v1376, %v1375
      %v1407 = vpack.c.b16 %v1378, %v1377
      %v1408 = vpack.c.b16 %v1380, %v1379
      %v1409 = vpack.c.b16 %v1382, %v1381
      %v1410 = vpack.c.b16 %v1384, %v1383
      %v1411 = vpack.c.b16 %v1386, %v1385
      %v1412 = vpack.c.b16 %v1388, %v1387
      %v1413 = vpack.c.b16 %v1390, %v1389
      %v1414 = vpack.c.b16 %v1392, %v1391
      %v1415 = vpack.c.b16 %v1394, %v1393
      %v1416 = vpack.c.b16 %v1396, %v1395
      %v1417 = vpack.c.b16 %v1398, %v1397
      %v1418 = vpack.c.b16 %v1400, %v1399
      %v1419 = vpack.c.b16 %v1402, %v1401
      %v1420 = vpack.c.b16 %v1404, %v1403
      %v1422 = vsel %vm702, %v1405, 0
      %v1425 = vsel %vm702, %v1406, 0
      %v1428 = vsel %vm702, %v1407, 0
      %v1431 = vsel %vm702, %v1408, 0
      %v1434 = vsel %vm702, %v1409, 0
      %v1437 = vsel %vm702, %v1410, 0
      %v1440 = vsel %vm702, %v1411, 0
      %v1443 = vsel %vm702, %v1412, 0
      %v1446 = vsel %vm702, %v1413, 0
      %v1449 = vsel %vm702, %v1414, 0
      %v1452 = vsel %vm702, %v1415, 0
      %v1455 = vsel %vm702, %v1416, 0
      %v1458 = vsel %vm702, %v1417, 0
      %v1461 = vsel %vm702, %v1418, 0
      %v1464 = vsel %vm702, %v1419, 0
      %v1467 = vsel %vm702, %v1420, 0
      %v1470 = vsel %vm751, %v1372, 0
      %1472 = vmatprep.subr.bf16.mxu0 0
      %1473 = vmatpush1.bf16.msra.mxu0 0
      %1474 = vmatprep.subr.bf16.mxu0 0
      %1475 = vmatpush1.bf16.msra.mxu0 0
      %1476 = vmatprep.subr.bf16.mxu0 0
      %1477 = vmatpush1.bf16.msra.mxu0 0
      %1478 = vmatprep.subr.bf16.mxu0 0
      %1479 = vmatpush1.bf16.msra.mxu0 0
      %1480 = vmatprep.subr.bf16.mxu0 0
      %1481 = vmatpush1.bf16.msra.mxu0 0
      %1482 = vmatprep.subr.bf16.mxu0 0
      %1483 = vmatpush1.bf16.msra.mxu0 0
      %1484 = vmatprep.subr.bf16.mxu0 0
      %1485 = vmatpush1.bf16.msra.mxu0 0
      %1486 = vmatprep.subr.bf16.mxu0 0
      %1487 = vmatpush1.bf16.msra.mxu0 %v1470
      %1488 = vmatprep.subr.bf16.mxu0 0
      %1489 = vmatpush2.bf16.msra.mxu0 0
      %1490 = vmatprep.subr.bf16.mxu0 0
      %1491 = vmatpush2.bf16.msra.mxu0 0
      %1492 = vmatprep.subr.bf16.mxu0 0
      %1493 = vmatpush2.bf16.msra.mxu0 0
      %1494 = vmatprep.subr.bf16.mxu0 0
      %1495 = vmatpush2.bf16.msra.mxu0 0
      %1496 = vmatprep.subr.bf16.mxu0 0
      %1497 = vmatpush2.bf16.msra.mxu0 0
      %1498 = vmatprep.subr.bf16.mxu0 0
      %1499 = vmatpush2.bf16.msra.mxu0 0
      %1500 = vmatprep.subr.bf16.mxu0 0
      %1501 = vmatpush2.bf16.msra.mxu0 0
      %1502 = vmatprep.subr.bf16.mxu0 0
      %1503 = vmatpush2.bf16.msra.mxu0 0
      %1504 = vmatprep.mubr.bf16.mxu0 0
      %1505 = vmatmul.mubr.bf16.gmra.mxu0 %v1422
      %v1506 = vpop.f32.mrf.mxu0
      %v1507 = vadd.f32 0.0, %v1506
      %v1508 = vpop.f32.mrf.mxu0
      %v1509 = vpop.f32.mrf.mxu0
      %v1510 = vadd.f32 0.0, %v1509
      %v1511 = vpop.f32.mrf.mxu0
      %1512 = vmatprep.mubr.bf16.mxu0 0
      %1513 = vmatmul.mubr.bf16.gmra.mxu0 %v1425
      %v1514 = vpop.f32.mrf.mxu0
      %v1515 = vadd.f32 0.0, %v1514
      %v1516 = vpop.f32.mrf.mxu0
      %v1517 = vpop.f32.mrf.mxu0
      %v1518 = vadd.f32 0.0, %v1517
      %v1519 = vpop.f32.mrf.mxu0
      %1520 = vmatprep.mubr.bf16.mxu0 0
      %1521 = vmatmul.mubr.bf16.gmra.mxu0 %v1428
      %v1522 = vpop.f32.mrf.mxu0
      %v1523 = vadd.f32 0.0, %v1522
      %v1524 = vpop.f32.mrf.mxu0
      %v1525 = vpop.f32.mrf.mxu0
      %v1526 = vadd.f32 0.0, %v1525
      %v1527 = vpop.f32.mrf.mxu0
      %1528 = vmatprep.mubr.bf16.mxu0 0
      %1529 = vmatmul.mubr.bf16.gmra.mxu0 %v1431
      %v1530 = vpop.f32.mrf.mxu0
      %v1531 = vadd.f32 0.0, %v1530
      %v1532 = vpop.f32.mrf.mxu0
      %v1533 = vpop.f32.mrf.mxu0
      %v1534 = vadd.f32 0.0, %v1533
      %v1535 = vpop.f32.mrf.mxu0
      %1536 = vmatprep.mubr.bf16.mxu0 0
      %1537 = vmatmul.mubr.bf16.gmra.mxu0 %v1434
      %v1538 = vpop.f32.mrf.mxu0
      %v1539 = vadd.f32 0.0, %v1538
      %v1540 = vpop.f32.mrf.mxu0
      %v1541 = vpop.f32.mrf.mxu0
      %v1542 = vadd.f32 0.0, %v1541
      %v1543 = vpop.f32.mrf.mxu0
      %1544 = vmatprep.mubr.bf16.mxu0 0
      %1545 = vmatmul.mubr.bf16.gmra.mxu0 %v1437
      %v1546 = vpop.f32.mrf.mxu0
      %v1547 = vadd.f32 0.0, %v1546
      %v1548 = vpop.f32.mrf.mxu0
      %v1549 = vpop.f32.mrf.mxu0
      %v1550 = vadd.f32 0.0, %v1549
      %v1551 = vpop.f32.mrf.mxu0
      %1552 = vmatprep.mubr.bf16.mxu0 0
      %1553 = vmatmul.mubr.bf16.gmra.mxu0 %v1440
      %v1554 = vpop.f32.mrf.mxu0
      %v1555 = vadd.f32 0.0, %v1554
      %v1556 = vpop.f32.mrf.mxu0
      %v1557 = vpop.f32.mrf.mxu0
      %v1558 = vadd.f32 0.0, %v1557
      %v1559 = vpop.f32.mrf.mxu0
      %1560 = vmatprep.mubr.bf16.mxu0 0
      %1561 = vmatmul.mubr.bf16.gmra.mxu0 %v1443
      %v1562 = vpop.f32.mrf.mxu0
      %v1563 = vadd.f32 0.0, %v1562
      %v1564 = vpop.f32.mrf.mxu0
      %v1565 = vpop.f32.mrf.mxu0
      %v1566 = vadd.f32 0.0, %v1565
      %v1567 = vpop.f32.mrf.mxu0
      %1568 = vmatprep.mubr.bf16.mxu0 0
      %1569 = vmatmul.mubr.bf16.gmra.mxu0 %v1446
      %v1570 = vpop.f32.mrf.mxu0
      %v1571 = vadd.f32 0.0, %v1570
      %v1572 = vpop.f32.mrf.mxu0
      %v1573 = vpop.f32.mrf.mxu0
      %v1574 = vadd.f32 0.0, %v1573
      %v1575 = vpop.f32.mrf.mxu0
      %1576 = vmatprep.mubr.bf16.mxu0 0
      %1577 = vmatmul.mubr.bf16.gmra.mxu0 %v1449
      %v1578 = vpop.f32.mrf.mxu0
      %v1579 = vadd.f32 0.0, %v1578
      %v1580 = vpop.f32.mrf.mxu0
      %v1581 = vpop.f32.mrf.mxu0
      %v1582 = vadd.f32 0.0, %v1581
      %v1583 = vpop.f32.mrf.mxu0
      %1584 = vmatprep.mubr.bf16.mxu0 0
      %1585 = vmatmul.mubr.bf16.gmra.mxu0 %v1452
      %v1586 = vpop.f32.mrf.mxu0
      %v1587 = vadd.f32 0.0, %v1586
      %v1588 = vpop.f32.mrf.mxu0
      %v1589 = vpop.f32.mrf.mxu0
      %v1590 = vadd.f32 0.0, %v1589
      %v1591 = vpop.f32.mrf.mxu0
      %1592 = vmatprep.mubr.bf16.mxu0 0
      %1593 = vmatmul.mubr.bf16.gmra.mxu0 %v1455
      %v1594 = vpop.f32.mrf.mxu0
      %v1595 = vadd.f32 0.0, %v1594
      %v1596 = vpop.f32.mrf.mxu0
      %v1597 = vpop.f32.mrf.mxu0
      %v1598 = vadd.f32 0.0, %v1597
      %v1599 = vpop.f32.mrf.mxu0
      %1600 = vmatprep.mubr.bf16.mxu0 0
      %1601 = vmatmul.mubr.bf16.gmra.mxu0 %v1458
      %v1602 = vpop.f32.mrf.mxu0
      %v1603 = vadd.f32 0.0, %v1602
      %v1604 = vpop.f32.mrf.mxu0
      %v1605 = vpop.f32.mrf.mxu0
      %v1606 = vadd.f32 0.0, %v1605
      %v1607 = vpop.f32.mrf.mxu0
      %1608 = vmatprep.mubr.bf16.mxu0 0
      %1609 = vmatmul.mubr.bf16.gmra.mxu0 %v1461
      %v1610 = vpop.f32.mrf.mxu0
      %v1611 = vadd.f32 0.0, %v1610
      %v1612 = vpop.f32.mrf.mxu0
      %v1613 = vpop.f32.mrf.mxu0
      %v1614 = vadd.f32 0.0, %v1613
      %v1615 = vpop.f32.mrf.mxu0
      %1616 = vmatprep.mubr.bf16.mxu0 0
      %1617 = vmatmul.mubr.bf16.gmra.mxu0 %v1464
      %v1618 = vpop.f32.mrf.mxu0
      %v1619 = vadd.f32 0.0, %v1618
      %v1620 = vpop.f32.mrf.mxu0
      %v1621 = vpop.f32.mrf.mxu0
      %v1622 = vadd.f32 0.0, %v1621
      %v1623 = vpop.f32.mrf.mxu0
      %1624 = vmatprep.mubr.bf16.mxu0 0
      %1625 = vmatmul.mubr.bf16.gmra.mxu0 %v1467
      %v1626 = vpop.f32.mrf.mxu0
      %v1627 = vadd.f32 0.0, %v1626
      %v1628 = vpop.f32.mrf.mxu0
      %v1629 = vpop.f32.mrf.mxu0
      %v1630 = vadd.f32 0.0, %v1629
      %v1631 = vpop.f32.mrf.mxu0
      %1632 = vdwg.mxu0
      %v1633 = vadd.f32 %v1082, %v1507
      %v1634 = vadd.f32 %v1085, %v1510
      %v1635 = vadd.f32 %v1090, %v1515
      %v1636 = vadd.f32 %v1093, %v1518
      %v1637 = vadd.f32 %v1098, %v1523
      %v1638 = vadd.f32 %v1101, %v1526
      %v1639 = vadd.f32 %v1106, %v1531
      %v1640 = vadd.f32 %v1109, %v1534
      %v1641 = vadd.f32 %v1114, %v1539
      %v1642 = vadd.f32 %v1117, %v1542
      %v1643 = vadd.f32 %v1122, %v1547
      %v1644 = vadd.f32 %v1125, %v1550
      %v1645 = vadd.f32 %v1130, %v1555
      %v1646 = vadd.f32 %v1133, %v1558
      %v1647 = vadd.f32 %v1138, %v1563
      %v1648 = vadd.f32 %v1141, %v1566
      %v1649 = vadd.f32 %v1146, %v1571
      %v1650 = vadd.f32 %v1149, %v1574
      %v1651 = vadd.f32 %v1154, %v1579
      %v1652 = vadd.f32 %v1157, %v1582
      %v1653 = vadd.f32 %v1162, %v1587
      %v1654 = vadd.f32 %v1165, %v1590
      %v1655 = vadd.f32 %v1170, %v1595
      %v1656 = vadd.f32 %v1173, %v1598
      %v1657 = vadd.f32 %v1178, %v1603
      %v1658 = vadd.f32 %v1181, %v1606
      %v1659 = vadd.f32 %v1186, %v1611
      %v1660 = vadd.f32 %v1189, %v1614
      %v1661 = vadd.f32 %v1194, %v1619
      %v1662 = vadd.f32 %v1197, %v1622
      %v1663 = vadd.f32 %v1202, %v1627
      %v1664 = vadd.f32 %v1205, %v1630
      %s1665 = scalar_lea.vmem %s203, 12
      %v1666 = vld [vmem:[%s1665] sm:$0xf]
      %v1667 = vld [vmem:[%s1665 + $0x4] sm:$0xf]
      %v1668 = vld [vmem:[%s1665 + $0xc] sm:$0xf]
      %v1669 = vld [vmem:[%s1665 + $0x10] sm:$0xf]
      %v1670 = vld [vmem:[%s1665 + $0x18] sm:$0xf]
      %v1671 = vld [vmem:[%s1665 + $0x1c] sm:$0xf]
      %v1672 = vld [vmem:[%s1665 + $0x24] sm:$0xf]
      %v1673 = vld [vmem:[%s1665 + $0x28] sm:$0xf]
      %v1674 = vld [vmem:[%s1665 + $0x30] sm:$0xf]
      %v1675 = vld [vmem:[%s1665 + $0x34] sm:$0xf]
      %v1676 = vld [vmem:[%s1665 + $0x3c] sm:$0xf]
      %v1677 = vld [vmem:[%s1665 + $0x40] sm:$0xf]
      %v1678 = vld [vmem:[%s1665 + $0x48] sm:$0xf]
      %v1679 = vld [vmem:[%s1665 + $0x4c] sm:$0xf]
      %v1680 = vld [vmem:[%s1665 + $0x54] sm:$0xf]
      %v1681 = vld [vmem:[%s1665 + $0x58] sm:$0xf]
      %v1682 = vld [vmem:[%s1665 + $0x60] sm:$0xf]
      %v1683 = vld [vmem:[%s1665 + $0x64] sm:$0xf]
      %v1684 = vld [vmem:[%s1665 + $0x6c] sm:$0xf]
      %v1685 = vld [vmem:[%s1665 + $0x70] sm:$0xf]
      %v1686 = vld [vmem:[%s1665 + $0x78] sm:$0xf]
      %v1687 = vld [vmem:[%s1665 + $0x7c] sm:$0xf]
      %v1688 = vld [vmem:[%s1665 + $0x84] sm:$0xf]
      %v1689 = vld [vmem:[%s1665 + $0x88] sm:$0xf]
      %v1690 = vld [vmem:[%s1665 + $0x90] sm:$0xf]
      %v1691 = vld [vmem:[%s1665 + $0x94] sm:$0xf]
      %v1692 = vld [vmem:[%s1665 + $0x9c] sm:$0xf]
      %v1693 = vld [vmem:[%s1665 + $0xa0] sm:$0xf]
      %v1694 = vld [vmem:[%s1665 + $0xa8] sm:$0xf]
      %v1695 = vld [vmem:[%s1665 + $0xac] sm:$0xf]
      %v1696 = vld [vmem:[%s1665 + $0xb4] sm:$0xf]
      %v1697 = vld [vmem:[%s1665 + $0xb8] sm:$0xf]
      %s1698 = scalar_lea.vmem %s1, 6
      %v1699 = vld [vmem:[%s1698] sm:$0x3]
      %v1732 = vunpack.c.l.b16 %v1666
      %v1733 = vunpack.c.l.b16 %v1667
      %v1734 = vunpack.c.l.b16 %v1668
      %v1735 = vunpack.c.l.b16 %v1669
      %v1736 = vunpack.c.l.b16 %v1670
      %v1737 = vunpack.c.l.b16 %v1671
      %v1738 = vunpack.c.l.b16 %v1672
      %v1739 = vunpack.c.l.b16 %v1673
      %v1740 = vunpack.c.l.b16 %v1674
      %v1741 = vunpack.c.l.b16 %v1675
      %v1742 = vunpack.c.l.b16 %v1676
      %v1743 = vunpack.c.l.b16 %v1677
      %v1744 = vunpack.c.l.b16 %v1678
      %v1745 = vunpack.c.l.b16 %v1679
      %v1746 = vunpack.c.l.b16 %v1680
      %v1747 = vunpack.c.l.b16 %v1681
      %v1748 = vunpack.c.l.b16 %v1682
      %v1749 = vunpack.c.l.b16 %v1683
      %v1750 = vunpack.c.l.b16 %v1684
      %v1751 = vunpack.c.l.b16 %v1685
      %v1752 = vunpack.c.l.b16 %v1686
      %v1753 = vunpack.c.l.b16 %v1687
      %v1754 = vunpack.c.l.b16 %v1688
      %v1755 = vunpack.c.l.b16 %v1689
      %v1756 = vunpack.c.l.b16 %v1690
      %v1757 = vunpack.c.l.b16 %v1691
      %v1758 = vunpack.c.l.b16 %v1692
      %v1759 = vunpack.c.l.b16 %v1693
      %v1760 = vunpack.c.l.b16 %v1694
      %v1761 = vunpack.c.l.b16 %v1695
      %v1762 = vunpack.c.l.b16 %v1696
      %v1763 = vunpack.c.l.b16 %v1697
      %v1764 = vpack.c.b16 %v1733, %v1732
      %v1765 = vpack.c.b16 %v1735, %v1734
      %v1766 = vpack.c.b16 %v1737, %v1736
      %v1767 = vpack.c.b16 %v1739, %v1738
      %v1768 = vpack.c.b16 %v1741, %v1740
      %v1769 = vpack.c.b16 %v1743, %v1742
      %v1770 = vpack.c.b16 %v1745, %v1744
      %v1771 = vpack.c.b16 %v1747, %v1746
      %v1772 = vpack.c.b16 %v1749, %v1748
      %v1773 = vpack.c.b16 %v1751, %v1750
      %v1774 = vpack.c.b16 %v1753, %v1752
      %v1775 = vpack.c.b16 %v1755, %v1754
      %v1776 = vpack.c.b16 %v1757, %v1756
      %v1777 = vpack.c.b16 %v1759, %v1758
      %v1778 = vpack.c.b16 %v1761, %v1760
      %v1779 = vpack.c.b16 %v1763, %v1762
      %v1781 = vsel %vm702, %v1764, 0
      %v1784 = vsel %vm702, %v1765, 0
      %v1787 = vsel %vm702, %v1766, 0
      %v1790 = vsel %vm702, %v1767, 0
      %v1793 = vsel %vm702, %v1768, 0
      %v1796 = vsel %vm702, %v1769, 0
      %v1799 = vsel %vm702, %v1770, 0
      %v1802 = vsel %vm702, %v1771, 0
      %v1805 = vsel %vm702, %v1772, 0
      %v1808 = vsel %vm702, %v1773, 0
      %v1811 = vsel %vm702, %v1774, 0
      %v1814 = vsel %vm702, %v1775, 0
      %v1817 = vsel %vm702, %v1776, 0
      %v1820 = vsel %vm702, %v1777, 0
      %v1823 = vsel %vm702, %v1778, 0
      %v1826 = vsel %vm702, %v1779, 0
      %v1829 = vsel %vm751, %v1699, 0
      %1831 = vmatprep.subr.bf16.mxu0 0
      %1832 = vmatpush1.bf16.msra.mxu0 0
      %1833 = vmatprep.subr.bf16.mxu0 0
      %1834 = vmatpush1.bf16.msra.mxu0 0
      %1835 = vmatprep.subr.bf16.mxu0 0
      %1836 = vmatpush1.bf16.msra.mxu0 0
      %1837 = vmatprep.subr.bf16.mxu0 0
      %1838 = vmatpush1.bf16.msra.mxu0 0
      %1839 = vmatprep.subr.bf16.mxu0 0
      %1840 = vmatpush1.bf16.msra.mxu0 0
      %1841 = vmatprep.subr.bf16.mxu0 0
      %1842 = vmatpush1.bf16.msra.mxu0 0
      %1843 = vmatprep.subr.bf16.mxu0 0
      %1844 = vmatpush1.bf16.msra.mxu0 0
      %1845 = vmatprep.subr.bf16.mxu0 0
      %1846 = vmatpush1.bf16.msra.mxu0 %v1829
      %1847 = vmatprep.subr.bf16.mxu0 0
      %1848 = vmatpush2.bf16.msra.mxu0 0
      %1849 = vmatprep.subr.bf16.mxu0 0
      %1850 = vmatpush2.bf16.msra.mxu0 0
      %1851 = vmatprep.subr.bf16.mxu0 0
      %1852 = vmatpush2.bf16.msra.mxu0 0
      %1853 = vmatprep.subr.bf16.mxu0 0
      %1854 = vmatpush2.bf16.msra.mxu0 0
      %1855 = vmatprep.subr.bf16.mxu0 0
      %1856 = vmatpush2.bf16.msra.mxu0 0
      %1857 = vmatprep.subr.bf16.mxu0 0
      %1858 = vmatpush2.bf16.msra.mxu0 0
      %1859 = vmatprep.subr.bf16.mxu0 0
      %1860 = vmatpush2.bf16.msra.mxu0 0
      %1861 = vmatprep.subr.bf16.mxu0 0
      %1862 = vmatpush2.bf16.msra.mxu0 0
      %1863 = vmatprep.mubr.bf16.mxu0 0
      %1864 = vmatmul.mubr.bf16.gmra.mxu0 %v1781
      %v1865 = vpop.f32.mrf.mxu0
      %v1866 = vadd.f32 0.0, %v1865
      %v1867 = vpop.f32.mrf.mxu0
      %v1868 = vpop.f32.mrf.mxu0
      %v1869 = vadd.f32 0.0, %v1868
      %v1870 = vpop.f32.mrf.mxu0
      %1871 = vmatprep.mubr.bf16.mxu0 0
      %1872 = vmatmul.mubr.bf16.gmra.mxu0 %v1784
      %v1873 = vpop.f32.mrf.mxu0
      %v1874 = vadd.f32 0.0, %v1873
      %v1875 = vpop.f32.mrf.mxu0
      %v1876 = vpop.f32.mrf.mxu0
      %v1877 = vadd.f32 0.0, %v1876
      %v1878 = vpop.f32.mrf.mxu0
      %1879 = vmatprep.mubr.bf16.mxu0 0
      %1880 = vmatmul.mubr.bf16.gmra.mxu0 %v1787
      %v1881 = vpop.f32.mrf.mxu0
      %v1882 = vadd.f32 0.0, %v1881
      %v1883 = vpop.f32.mrf.mxu0
      %v1884 = vpop.f32.mrf.mxu0
      %v1885 = vadd.f32 0.0, %v1884
      %v1886 = vpop.f32.mrf.mxu0
      %1887 = vmatprep.mubr.bf16.mxu0 0
      %1888 = vmatmul.mubr.bf16.gmra.mxu0 %v1790
      %v1889 = vpop.f32.mrf.mxu0
      %v1890 = vadd.f32 0.0, %v1889
      %v1891 = vpop.f32.mrf.mxu0
      %v1892 = vpop.f32.mrf.mxu0
      %v1893 = vadd.f32 0.0, %v1892
      %v1894 = vpop.f32.mrf.mxu0
      %1895 = vmatprep.mubr.bf16.mxu0 0
      %1896 = vmatmul.mubr.bf16.gmra.mxu0 %v1793
      %v1897 = vpop.f32.mrf.mxu0
      %v1898 = vadd.f32 0.0, %v1897
      %v1899 = vpop.f32.mrf.mxu0
      %v1900 = vpop.f32.mrf.mxu0
      %v1901 = vadd.f32 0.0, %v1900
      %v1902 = vpop.f32.mrf.mxu0
      %1903 = vmatprep.mubr.bf16.mxu0 0
      %1904 = vmatmul.mubr.bf16.gmra.mxu0 %v1796
      %v1905 = vpop.f32.mrf.mxu0
      %v1906 = vadd.f32 0.0, %v1905
      %v1907 = vpop.f32.mrf.mxu0
      %v1908 = vpop.f32.mrf.mxu0
      %v1909 = vadd.f32 0.0, %v1908
      %v1910 = vpop.f32.mrf.mxu0
      %1911 = vmatprep.mubr.bf16.mxu0 0
      %1912 = vmatmul.mubr.bf16.gmra.mxu0 %v1799
      %v1913 = vpop.f32.mrf.mxu0
      %v1914 = vadd.f32 0.0, %v1913
      %v1915 = vpop.f32.mrf.mxu0
      %v1916 = vpop.f32.mrf.mxu0
      %v1917 = vadd.f32 0.0, %v1916
      %v1918 = vpop.f32.mrf.mxu0
      %1919 = vmatprep.mubr.bf16.mxu0 0
      %1920 = vmatmul.mubr.bf16.gmra.mxu0 %v1802
      %v1921 = vpop.f32.mrf.mxu0
      %v1922 = vadd.f32 0.0, %v1921
      %v1923 = vpop.f32.mrf.mxu0
      %v1924 = vpop.f32.mrf.mxu0
      %v1925 = vadd.f32 0.0, %v1924
      %v1926 = vpop.f32.mrf.mxu0
      %1927 = vmatprep.mubr.bf16.mxu0 0
      %1928 = vmatmul.mubr.bf16.gmra.mxu0 %v1805
      %v1929 = vpop.f32.mrf.mxu0
      %v1930 = vadd.f32 0.0, %v1929
      %v1931 = vpop.f32.mrf.mxu0
      %v1932 = vpop.f32.mrf.mxu0
      %v1933 = vadd.f32 0.0, %v1932
      %v1934 = vpop.f32.mrf.mxu0
      %1935 = vmatprep.mubr.bf16.mxu0 0
      %1936 = vmatmul.mubr.bf16.gmra.mxu0 %v1808
      %v1937 = vpop.f32.mrf.mxu0
      %v1938 = vadd.f32 0.0, %v1937
      %v1939 = vpop.f32.mrf.mxu0
      %v1940 = vpop.f32.mrf.mxu0
      %v1941 = vadd.f32 0.0, %v1940
      %v1942 = vpop.f32.mrf.mxu0
      %1943 = vmatprep.mubr.bf16.mxu0 0
      %1944 = vmatmul.mubr.bf16.gmra.mxu0 %v1811
      %v1945 = vpop.f32.mrf.mxu0
      %v1946 = vadd.f32 0.0, %v1945
      %v1947 = vpop.f32.mrf.mxu0
      %v1948 = vpop.f32.mrf.mxu0
      %v1949 = vadd.f32 0.0, %v1948
      %v1950 = vpop.f32.mrf.mxu0
      %1951 = vmatprep.mubr.bf16.mxu0 0
      %1952 = vmatmul.mubr.bf16.gmra.mxu0 %v1814
      %v1953 = vpop.f32.mrf.mxu0
      %v1954 = vadd.f32 0.0, %v1953
      %v1955 = vpop.f32.mrf.mxu0
      %v1956 = vpop.f32.mrf.mxu0
      %v1957 = vadd.f32 0.0, %v1956
      %v1958 = vpop.f32.mrf.mxu0
      %1959 = vmatprep.mubr.bf16.mxu0 0
      %1960 = vmatmul.mubr.bf16.gmra.mxu0 %v1817
      %v1961 = vpop.f32.mrf.mxu0
      %v1962 = vadd.f32 0.0, %v1961
      %v1963 = vpop.f32.mrf.mxu0
      %v1964 = vpop.f32.mrf.mxu0
      %v1965 = vadd.f32 0.0, %v1964
      %v1966 = vpop.f32.mrf.mxu0
      %1967 = vmatprep.mubr.bf16.mxu0 0
      %1968 = vmatmul.mubr.bf16.gmra.mxu0 %v1820
      %v1969 = vpop.f32.mrf.mxu0
      %v1970 = vadd.f32 0.0, %v1969
      %v1971 = vpop.f32.mrf.mxu0
      %v1972 = vpop.f32.mrf.mxu0
      %v1973 = vadd.f32 0.0, %v1972
      %v1974 = vpop.f32.mrf.mxu0
      %1975 = vmatprep.mubr.bf16.mxu0 0
      %1976 = vmatmul.mubr.bf16.gmra.mxu0 %v1823
      %v1977 = vpop.f32.mrf.mxu0
      %v1978 = vadd.f32 0.0, %v1977
      %v1979 = vpop.f32.mrf.mxu0
      %v1980 = vpop.f32.mrf.mxu0
      %v1981 = vadd.f32 0.0, %v1980
      %v1982 = vpop.f32.mrf.mxu0
      %1983 = vmatprep.mubr.bf16.mxu0 0
      %1984 = vmatmul.mubr.bf16.gmra.mxu0 %v1826
      %v1985 = vpop.f32.mrf.mxu0
      %v1986 = vadd.f32 0.0, %v1985
      %v1987 = vpop.f32.mrf.mxu0
      %v1988 = vpop.f32.mrf.mxu0
      %v1989 = vadd.f32 0.0, %v1988
      %v1990 = vpop.f32.mrf.mxu0
      %1991 = vdwg.mxu0
      %v1992 = vadd.f32 %v1633, %v1866
      %v1993 = vadd.f32 %v1634, %v1869
      %v1994 = vadd.f32 %v1635, %v1874
      %v1995 = vadd.f32 %v1636, %v1877
      %v1996 = vadd.f32 %v1637, %v1882
      %v1997 = vadd.f32 %v1638, %v1885
      %v1998 = vadd.f32 %v1639, %v1890
      %v1999 = vadd.f32 %v1640, %v1893
      %v2000 = vadd.f32 %v1641, %v1898
      %v2001 = vadd.f32 %v1642, %v1901
      %v2002 = vadd.f32 %v1643, %v1906
      %v2003 = vadd.f32 %v1644, %v1909
      %v2004 = vadd.f32 %v1645, %v1914
      %v2005 = vadd.f32 %v1646, %v1917
      %v2006 = vadd.f32 %v1647, %v1922
      %v2007 = vadd.f32 %v1648, %v1925
      %v2008 = vadd.f32 %v1649, %v1930
      %v2009 = vadd.f32 %v1650, %v1933
      %v2010 = vadd.f32 %v1651, %v1938
      %v2011 = vadd.f32 %v1652, %v1941
      %v2012 = vadd.f32 %v1653, %v1946
      %v2013 = vadd.f32 %v1654, %v1949
      %v2014 = vadd.f32 %v1655, %v1954
      %v2015 = vadd.f32 %v1656, %v1957
      %v2016 = vadd.f32 %v1657, %v1962
      %v2017 = vadd.f32 %v1658, %v1965
      %v2018 = vadd.f32 %v1659, %v1970
      %v2019 = vadd.f32 %v1660, %v1973
      %v2020 = vadd.f32 %v1661, %v1978
      %v2021 = vadd.f32 %v1662, %v1981
      %v2022 = vadd.f32 %v1663, %v1986
      %v2023 = vadd.f32 %v1664, %v1989
      %v2024 = vld [vmem:[%s1665] sm:$0xf]
      %v2025 = vld [vmem:[%s1665 + $0x4] sm:$0xf]
      %v2026 = vld [vmem:[%s1665 + $0x8] sm:$0x1]
      %v2027 = vld [vmem:[%s1665 + $0xc] sm:$0xf]
      %v2028 = vld [vmem:[%s1665 + $0x10] sm:$0xf]
      %v2029 = vld [vmem:[%s1665 + $0x14] sm:$0x1]
      %v2030 = vld [vmem:[%s1665 + $0x18] sm:$0xf]
      %v2031 = vld [vmem:[%s1665 + $0x1c] sm:$0xf]
      %v2032 = vld [vmem:[%s1665 + $0x20] sm:$0x1]
      %v2033 = vld [vmem:[%s1665 + $0x24] sm:$0xf]
      %v2034 = vld [vmem:[%s1665 + $0x28] sm:$0xf]
      %v2035 = vld [vmem:[%s1665 + $0x2c] sm:$0x1]
      %v2036 = vld [vmem:[%s1665 + $0x30] sm:$0xf]
      %v2037 = vld [vmem:[%s1665 + $0x34] sm:$0xf]
      %v2038 = vld [vmem:[%s1665 + $0x38] sm:$0x1]
      %v2039 = vld [vmem:[%s1665 + $0x3c] sm:$0xf]
      %v2040 = vld [vmem:[%s1665 + $0x40] sm:$0xf]
      %v2041 = vld [vmem:[%s1665 + $0x44] sm:$0x1]
      %v2042 = vld [vmem:[%s1665 + $0x48] sm:$0xf]
      %v2043 = vld [vmem:[%s1665 + $0x4c] sm:$0xf]
      %v2044 = vld [vmem:[%s1665 + $0x50] sm:$0x1]
      %v2045 = vld [vmem:[%s1665 + $0x54] sm:$0xf]
      %v2046 = vld [vmem:[%s1665 + $0x58] sm:$0xf]
      %v2047 = vld [vmem:[%s1665 + $0x5c] sm:$0x1]
      %v2048 = vld [vmem:[%s1665 + $0x60] sm:$0xf]
      %v2049 = vld [vmem:[%s1665 + $0x64] sm:$0xf]
      %v2050 = vld [vmem:[%s1665 + $0x68] sm:$0x1]
      %v2051 = vld [vmem:[%s1665 + $0x6c] sm:$0xf]
      %v2052 = vld [vmem:[%s1665 + $0x70] sm:$0xf]
      %v2053 = vld [vmem:[%s1665 + $0x74] sm:$0x1]
      %v2054 = vld [vmem:[%s1665 + $0x78] sm:$0xf]
      %v2055 = vld [vmem:[%s1665 + $0x7c] sm:$0xf]
      %v2056 = vld [vmem:[%s1665 + $0x80] sm:$0x1]
      %v2057 = vld [vmem:[%s1665 + $0x84] sm:$0xf]
      %v2058 = vld [vmem:[%s1665 + $0x88] sm:$0xf]
      %v2059 = vld [vmem:[%s1665 + $0x8c] sm:$0x1]
      %v2060 = vld [vmem:[%s1665 + $0x90] sm:$0xf]
      %v2061 = vld [vmem:[%s1665 + $0x94] sm:$0xf]
      %v2062 = vld [vmem:[%s1665 + $0x98] sm:$0x1]
      %v2063 = vld [vmem:[%s1665 + $0x9c] sm:$0xf]
      %v2064 = vld [vmem:[%s1665 + $0xa0] sm:$0xf]
      %v2065 = vld [vmem:[%s1665 + $0xa4] sm:$0x1]
      %v2066 = vld [vmem:[%s1665 + $0xa8] sm:$0xf]
      %v2067 = vld [vmem:[%s1665 + $0xac] sm:$0xf]
      %v2068 = vld [vmem:[%s1665 + $0xb0] sm:$0x1]
      %v2069 = vld [vmem:[%s1665 + $0xb4] sm:$0xf]
      %v2070 = vld [vmem:[%s1665 + $0xb8] sm:$0xf]
      %v2071 = vld [vmem:[%s1665 + $0xbc] sm:$0x1]
      %v2073 = vshrl.u32 %v2024, 16
      %v2075 = vrot.slane %v2073, 4
      %v2076 = vshll.u32 %v2024, 16
      %v2078 = vrot.slane %v2076, 5
      %v2079 = vor.u32 %v2075, %v2078
      %v2080 = vrot.slane %v2079, 4
      %v2082 = vshll.u32 %v2025, 16
      %v2084 = vrot.slane %v2082, 5
      %v2085 = vsel %vm267, %v2080, %v2084
      %v2086 = vshrl.u32 %v2025, 16
      %v2088 = vrot.slane %v2086, 4
      %v2089 = vor.u32 %v2088, %v2084
      %v2090 = vrot.slane %v2089, 4
      %v2092 = vshll.u32 %v2026, 16
      %v2094 = vrot.slane %v2092, 5
      %v2095 = vsel %vm267, %v2090, %v2094
      %v2097 = vshrl.u32 %v2027, 16
      %v2099 = vrot.slane %v2097, 4
      %v2100 = vshll.u32 %v2027, 16
      %v2102 = vrot.slane %v2100, 5
      %v2103 = vor.u32 %v2099, %v2102
      %v2104 = vrot.slane %v2103, 4
      %v2106 = vshll.u32 %v2028, 16
      %v2108 = vrot.slane %v2106, 5
      %v2109 = vsel %vm267, %v2104, %v2108
      %v2110 = vshrl.u32 %v2028, 16
      %v2112 = vrot.slane %v2110, 4
      %v2113 = vor.u32 %v2112, %v2108
      %v2114 = vrot.slane %v2113, 4
      %v2116 = vshll.u32 %v2029, 16
      %v2118 = vrot.slane %v2116, 5
      %v2119 = vsel %vm267, %v2114, %v2118
      %v2121 = vshrl.u32 %v2030, 16
      %v2123 = vrot.slane %v2121, 4
      %v2124 = vshll.u32 %v2030, 16
      %v2126 = vrot.slane %v2124, 5
      %v2127 = vor.u32 %v2123, %v2126
      %v2128 = vrot.slane %v2127, 4
      %v2130 = vshll.u32 %v2031, 16
      %v2132 = vrot.slane %v2130, 5
      %v2133 = vsel %vm267, %v2128, %v2132
      %v2134 = vshrl.u32 %v2031, 16
      %v2136 = vrot.slane %v2134, 4
      %v2137 = vor.u32 %v2136, %v2132
      %v2138 = vrot.slane %v2137, 4
      %v2140 = vshll.u32 %v2032, 16
      %v2142 = vrot.slane %v2140, 5
      %v2143 = vsel %vm267, %v2138, %v2142
      %v2145 = vshrl.u32 %v2033, 16
      %v2147 = vrot.slane %v2145, 4
      %v2148 = vshll.u32 %v2033, 16
      %v2150 = vrot.slane %v2148, 5
      %v2151 = vor.u32 %v2147, %v2150
      %v2152 = vrot.slane %v2151, 4
      %v2154 = vshll.u32 %v2034, 16
      %v2156 = vrot.slane %v2154, 5
      %v2157 = vsel %vm267, %v2152, %v2156
      %v2158 = vshrl.u32 %v2034, 16
      %v2160 = vrot.slane %v2158, 4
      %v2161 = vor.u32 %v2160, %v2156
      %v2162 = vrot.slane %v2161, 4
      %v2164 = vshll.u32 %v2035, 16
      %v2166 = vrot.slane %v2164, 5
      %v2167 = vsel %vm267, %v2162, %v2166
      %v2169 = vshrl.u32 %v2036, 16
      %v2171 = vrot.slane %v2169, 4
      %v2172 = vshll.u32 %v2036, 16
      %v2174 = vrot.slane %v2172, 5
      %v2175 = vor.u32 %v2171, %v2174
      %v2176 = vrot.slane %v2175, 4
      %v2178 = vshll.u32 %v2037, 16
      %v2180 = vrot.slane %v2178, 5
      %v2181 = vsel %vm267, %v2176, %v2180
      %v2182 = vshrl.u32 %v2037, 16
      %v2184 = vrot.slane %v2182, 4
      %v2185 = vor.u32 %v2184, %v2180
      %v2186 = vrot.slane %v2185, 4
      %v2188 = vshll.u32 %v2038, 16
      %v2190 = vrot.slane %v2188, 5
      %v2191 = vsel %vm267, %v2186, %v2190
      %v2193 = vshrl.u32 %v2039, 16
      %v2195 = vrot.slane %v2193, 4
      %v2196 = vshll.u32 %v2039, 16
      %v2198 = vrot.slane %v2196, 5
      %v2199 = vor.u32 %v2195, %v2198
      %v2200 = vrot.slane %v2199, 4
      %v2202 = vshll.u32 %v2040, 16
      %v2204 = vrot.slane %v2202, 5
      %v2205 = vsel %vm267, %v2200, %v2204
      %v2206 = vshrl.u32 %v2040, 16
      %v2208 = vrot.slane %v2206, 4
      %v2209 = vor.u32 %v2208, %v2204
      %v2210 = vrot.slane %v2209, 4
      %v2212 = vshll.u32 %v2041, 16
      %v2214 = vrot.slane %v2212, 5
      %v2215 = vsel %vm267, %v2210, %v2214
      %v2217 = vshrl.u32 %v2042, 16
      %v2219 = vrot.slane %v2217, 4
      %v2220 = vshll.u32 %v2042, 16
      %v2222 = vrot.slane %v2220, 5
      %v2223 = vor.u32 %v2219, %v2222
      %v2224 = vrot.slane %v2223, 4
      %v2226 = vshll.u32 %v2043, 16
      %v2228 = vrot.slane %v2226, 5
      %v2229 = vsel %vm267, %v2224, %v2228
      %v2230 = vshrl.u32 %v2043, 16
      %v2232 = vrot.slane %v2230, 4
      %v2233 = vor.u32 %v2232, %v2228
      %v2234 = vrot.slane %v2233, 4
      %v2236 = vshll.u32 %v2044, 16
      %v2238 = vrot.slane %v2236, 5
      %v2239 = vsel %vm267, %v2234, %v2238
      %v2241 = vshrl.u32 %v2045, 16
      %v2243 = vrot.slane %v2241, 4
      %v2244 = vshll.u32 %v2045, 16
      %v2246 = vrot.slane %v2244, 5
      %v2247 = vor.u32 %v2243, %v2246
      %v2248 = vrot.slane %v2247, 4
      %v2250 = vshll.u32 %v2046, 16
      %v2252 = vrot.slane %v2250, 5
      %v2253 = vsel %vm267, %v2248, %v2252
      %v2254 = vshrl.u32 %v2046, 16
      %v2256 = vrot.slane %v2254, 4
      %v2257 = vor.u32 %v2256, %v2252
      %v2258 = vrot.slane %v2257, 4
      %v2260 = vshll.u32 %v2047, 16
      %v2262 = vrot.slane %v2260, 5
      %v2263 = vsel %vm267, %v2258, %v2262
      %v2265 = vshrl.u32 %v2048, 16
      %v2267 = vrot.slane %v2265, 4
      %v2268 = vshll.u32 %v2048, 16
      %v2270 = vrot.slane %v2268, 5
      %v2271 = vor.u32 %v2267, %v2270
      %v2272 = vrot.slane %v2271, 4
      %v2274 = vshll.u32 %v2049, 16
      %v2276 = vrot.slane %v2274, 5
      %v2277 = vsel %vm267, %v2272, %v2276
      %v2278 = vshrl.u32 %v2049, 16
      %v2280 = vrot.slane %v2278, 4
      %v2281 = vor.u32 %v2280, %v2276
      %v2282 = vrot.slane %v2281, 4
      %v2284 = vshll.u32 %v2050, 16
      %v2286 = vrot.slane %v2284, 5
      %v2287 = vsel %vm267, %v2282, %v2286
      %v2289 = vshrl.u32 %v2051, 16
      %v2291 = vrot.slane %v2289, 4
      %v2292 = vshll.u32 %v2051, 16
      %v2294 = vrot.slane %v2292, 5
      %v2295 = vor.u32 %v2291, %v2294
      %v2296 = vrot.slane %v2295, 4
      %v2298 = vshll.u32 %v2052, 16
      %v2300 = vrot.slane %v2298, 5
      %v2301 = vsel %vm267, %v2296, %v2300
      %v2302 = vshrl.u32 %v2052, 16
      %v2304 = vrot.slane %v2302, 4
      %v2305 = vor.u32 %v2304, %v2300
      %v2306 = vrot.slane %v2305, 4
      %v2308 = vshll.u32 %v2053, 16
      %v2310 = vrot.slane %v2308, 5
      %v2311 = vsel %vm267, %v2306, %v2310
      %v2313 = vshrl.u32 %v2054, 16
      %v2315 = vrot.slane %v2313, 4
      %v2316 = vshll.u32 %v2054, 16
      %v2318 = vrot.slane %v2316, 5
      %v2319 = vor.u32 %v2315, %v2318
      %v2320 = vrot.slane %v2319, 4
      %v2322 = vshll.u32 %v2055, 16
      %v2324 = vrot.slane %v2322, 5
      %v2325 = vsel %vm267, %v2320, %v2324
      %v2326 = vshrl.u32 %v2055, 16
      %v2328 = vrot.slane %v2326, 4
      %v2329 = vor.u32 %v2328, %v2324
      %v2330 = vrot.slane %v2329, 4
      %v2332 = vshll.u32 %v2056, 16
      %v2334 = vrot.slane %v2332, 5
      %v2335 = vsel %vm267, %v2330, %v2334
      %v2337 = vshrl.u32 %v2057, 16
      %v2339 = vrot.slane %v2337, 4
      %v2340 = vshll.u32 %v2057, 16
      %v2342 = vrot.slane %v2340, 5
      %v2343 = vor.u32 %v2339, %v2342
      %v2344 = vrot.slane %v2343, 4
      %v2346 = vshll.u32 %v2058, 16
      %v2348 = vrot.slane %v2346, 5
      %v2349 = vsel %vm267, %v2344, %v2348
      %v2350 = vshrl.u32 %v2058, 16
      %v2352 = vrot.slane %v2350, 4
      %v2353 = vor.u32 %v2352, %v2348
      %v2354 = vrot.slane %v2353, 4
      %v2356 = vshll.u32 %v2059, 16
      %v2358 = vrot.slane %v2356, 5
      %v2359 = vsel %vm267, %v2354, %v2358
      %v2361 = vshrl.u32 %v2060, 16
      %v2363 = vrot.slane %v2361, 4
      %v2364 = vshll.u32 %v2060, 16
      %v2366 = vrot.slane %v2364, 5
      %v2367 = vor.u32 %v2363, %v2366
      %v2368 = vrot.slane %v2367, 4
      %v2370 = vshll.u32 %v2061, 16
      %v2372 = vrot.slane %v2370, 5
      %v2373 = vsel %vm267, %v2368, %v2372
      %v2374 = vshrl.u32 %v2061, 16
      %v2376 = vrot.slane %v2374, 4
      %v2377 = vor.u32 %v2376, %v2372
      %v2378 = vrot.slane %v2377, 4
      %v2380 = vshll.u32 %v2062, 16
      %v2382 = vrot.slane %v2380, 5
      %v2383 = vsel %vm267, %v2378, %v2382
      %v2385 = vshrl.u32 %v2063, 16
      %v2387 = vrot.slane %v2385, 4
      %v2388 = vshll.u32 %v2063, 16
      %v2390 = vrot.slane %v2388, 5
      %v2391 = vor.u32 %v2387, %v2390
      %v2392 = vrot.slane %v2391, 4
      %v2394 = vshll.u32 %v2064, 16
      %v2396 = vrot.slane %v2394, 5
      %v2397 = vsel %vm267, %v2392, %v2396
      %v2398 = vshrl.u32 %v2064, 16
      %v2400 = vrot.slane %v2398, 4
      %v2401 = vor.u32 %v2400, %v2396
      %v2402 = vrot.slane %v2401, 4
      %v2404 = vshll.u32 %v2065, 16
      %v2406 = vrot.slane %v2404, 5
      %v2407 = vsel %vm267, %v2402, %v2406
      %v2409 = vshrl.u32 %v2066, 16
      %v2411 = vrot.slane %v2409, 4
      %v2412 = vshll.u32 %v2066, 16
      %v2414 = vrot.slane %v2412, 5
      %v2415 = vor.u32 %v2411, %v2414
      %v2416 = vrot.slane %v2415, 4
      %v2418 = vshll.u32 %v2067, 16
      %v2420 = vrot.slane %v2418, 5
      %v2421 = vsel %vm267, %v2416, %v2420
      %v2422 = vshrl.u32 %v2067, 16
      %v2424 = vrot.slane %v2422, 4
      %v2425 = vor.u32 %v2424, %v2420
      %v2426 = vrot.slane %v2425, 4
      %v2428 = vshll.u32 %v2068, 16
      %v2430 = vrot.slane %v2428, 5
      %v2431 = vsel %vm267, %v2426, %v2430
      %v2433 = vshrl.u32 %v2069, 16
      %v2435 = vrot.slane %v2433, 4
      %v2436 = vshll.u32 %v2069, 16
      %v2438 = vrot.slane %v2436, 5
      %v2439 = vor.u32 %v2435, %v2438
      %v2440 = vrot.slane %v2439, 4
      %v2442 = vshll.u32 %v2070, 16
      %v2444 = vrot.slane %v2442, 5
      %v2445 = vsel %vm267, %v2440, %v2444
      %v2446 = vshrl.u32 %v2070, 16
      %v2448 = vrot.slane %v2446, 4
      %v2449 = vor.u32 %v2448, %v2444
      %v2450 = vrot.slane %v2449, 4
      %v2452 = vshll.u32 %v2071, 16
      %v2454 = vrot.slane %v2452, 5
      %v2455 = vsel %vm267, %v2450, %v2454
      %s2456 = scalar_lea.vmem %s1, 8
      %v2457 = vld [vmem:[%s2456] sm:$0x3]
      %v2458 = vunpack.c.l.b16 %v2085
      %v2459 = vunpack.c.l.b16 %v2095
      %v2460 = vunpack.c.l.b16 %v2109
      %v2461 = vunpack.c.l.b16 %v2119
      %v2462 = vunpack.c.l.b16 %v2133
      %v2463 = vunpack.c.l.b16 %v2143
      %v2464 = vunpack.c.l.b16 %v2157
      %v2465 = vunpack.c.l.b16 %v2167
      %v2466 = vunpack.c.l.b16 %v2181
      %v2467 = vunpack.c.l.b16 %v2191
      %v2468 = vunpack.c.l.b16 %v2205
      %v2469 = vunpack.c.l.b16 %v2215
      %v2470 = vunpack.c.l.b16 %v2229
      %v2471 = vunpack.c.l.b16 %v2239
      %v2472 = vunpack.c.l.b16 %v2253
      %v2473 = vunpack.c.l.b16 %v2263
      %v2474 = vunpack.c.l.b16 %v2277
      %v2475 = vunpack.c.l.b16 %v2287
      %v2476 = vunpack.c.l.b16 %v2301
      %v2477 = vunpack.c.l.b16 %v2311
      %v2478 = vunpack.c.l.b16 %v2325
      %v2479 = vunpack.c.l.b16 %v2335
      %v2480 = vunpack.c.l.b16 %v2349
      %v2481 = vunpack.c.l.b16 %v2359
      %v2482 = vunpack.c.l.b16 %v2373
      %v2483 = vunpack.c.l.b16 %v2383
      %v2484 = vunpack.c.l.b16 %v2397
      %v2485 = vunpack.c.l.b16 %v2407
      %v2486 = vunpack.c.l.b16 %v2421
      %v2487 = vunpack.c.l.b16 %v2431
      %v2488 = vunpack.c.l.b16 %v2445
      %v2489 = vunpack.c.l.b16 %v2455
      %v2490 = vpack.c.b16 %v2459, %v2458
      %v2491 = vpack.c.b16 %v2461, %v2460
      %v2492 = vpack.c.b16 %v2463, %v2462
      %v2493 = vpack.c.b16 %v2465, %v2464
      %v2494 = vpack.c.b16 %v2467, %v2466
      %v2495 = vpack.c.b16 %v2469, %v2468
      %v2496 = vpack.c.b16 %v2471, %v2470
      %v2497 = vpack.c.b16 %v2473, %v2472
      %v2498 = vpack.c.b16 %v2475, %v2474
      %v2499 = vpack.c.b16 %v2477, %v2476
      %v2500 = vpack.c.b16 %v2479, %v2478
      %v2501 = vpack.c.b16 %v2481, %v2480
      %v2502 = vpack.c.b16 %v2483, %v2482
      %v2503 = vpack.c.b16 %v2485, %v2484
      %v2504 = vpack.c.b16 %v2487, %v2486
      %v2505 = vpack.c.b16 %v2489, %v2488
      %v2507 = vsel %vm702, %v2490, 0
      %v2510 = vsel %vm702, %v2491, 0
      %v2513 = vsel %vm702, %v2492, 0
      %v2516 = vsel %vm702, %v2493, 0
      %v2519 = vsel %vm702, %v2494, 0
      %v2522 = vsel %vm702, %v2495, 0
      %v2525 = vsel %vm702, %v2496, 0
      %v2528 = vsel %vm702, %v2497, 0
      %v2531 = vsel %vm702, %v2498, 0
      %v2534 = vsel %vm702, %v2499, 0
      %v2537 = vsel %vm702, %v2500, 0
      %v2540 = vsel %vm702, %v2501, 0
      %v2543 = vsel %vm702, %v2502, 0
      %v2546 = vsel %vm702, %v2503, 0
      %v2549 = vsel %vm702, %v2504, 0
      %v2552 = vsel %vm702, %v2505, 0
      %v2555 = vsel %vm751, %v2457, 0
      %2557 = vmatprep.subr.bf16.mxu0 0
      %2558 = vmatpush1.bf16.msra.mxu0 0
      %2559 = vmatprep.subr.bf16.mxu0 0
      %2560 = vmatpush1.bf16.msra.mxu0 0
      %2561 = vmatprep.subr.bf16.mxu0 0
      %2562 = vmatpush1.bf16.msra.mxu0 0
      %2563 = vmatprep.subr.bf16.mxu0 0
      %2564 = vmatpush1.bf16.msra.mxu0 0
      %2565 = vmatprep.subr.bf16.mxu0 0
      %2566 = vmatpush1.bf16.msra.mxu0 0
      %2567 = vmatprep.subr.bf16.mxu0 0
      %2568 = vmatpush1.bf16.msra.mxu0 0
      %2569 = vmatprep.subr.bf16.mxu0 0
      %2570 = vmatpush1.bf16.msra.mxu0 0
      %2571 = vmatprep.subr.bf16.mxu0 0
      %2572 = vmatpush1.bf16.msra.mxu0 %v2555
      %2573 = vmatprep.subr.bf16.mxu0 0
      %2574 = vmatpush2.bf16.msra.mxu0 0
      %2575 = vmatprep.subr.bf16.mxu0 0
      %2576 = vmatpush2.bf16.msra.mxu0 0
      %2577 = vmatprep.subr.bf16.mxu0 0
      %2578 = vmatpush2.bf16.msra.mxu0 0
      %2579 = vmatprep.subr.bf16.mxu0 0
      %2580 = vmatpush2.bf16.msra.mxu0 0
      %2581 = vmatprep.subr.bf16.mxu0 0
      %2582 = vmatpush2.bf16.msra.mxu0 0
      %2583 = vmatprep.subr.bf16.mxu0 0
      %2584 = vmatpush2.bf16.msra.mxu0 0
      %2585 = vmatprep.subr.bf16.mxu0 0
      %2586 = vmatpush2.bf16.msra.mxu0 0
      %2587 = vmatprep.subr.bf16.mxu0 0
      %2588 = vmatpush2.bf16.msra.mxu0 0
      %2589 = vmatprep.mubr.bf16.mxu0 0
      %2590 = vmatmul.mubr.bf16.gmra.mxu0 %v2507
      %v2591 = vpop.f32.mrf.mxu0
      %v2592 = vadd.f32 0.0, %v2591
      %v2593 = vpop.f32.mrf.mxu0
      %v2594 = vpop.f32.mrf.mxu0
      %v2595 = vadd.f32 0.0, %v2594
      %v2596 = vpop.f32.mrf.mxu0
      %2597 = vmatprep.mubr.bf16.mxu0 0
      %2598 = vmatmul.mubr.bf16.gmra.mxu0 %v2510
      %v2599 = vpop.f32.mrf.mxu0
      %v2600 = vadd.f32 0.0, %v2599
      %v2601 = vpop.f32.mrf.mxu0
      %v2602 = vpop.f32.mrf.mxu0
      %v2603 = vadd.f32 0.0, %v2602
      %v2604 = vpop.f32.mrf.mxu0
      %2605 = vmatprep.mubr.bf16.mxu0 0
      %2606 = vmatmul.mubr.bf16.gmra.mxu0 %v2513
      %v2607 = vpop.f32.mrf.mxu0
      %v2608 = vadd.f32 0.0, %v2607
      %v2609 = vpop.f32.mrf.mxu0
      %v2610 = vpop.f32.mrf.mxu0
      %v2611 = vadd.f32 0.0, %v2610
      %v2612 = vpop.f32.mrf.mxu0
      %2613 = vmatprep.mubr.bf16.mxu0 0
      %2614 = vmatmul.mubr.bf16.gmra.mxu0 %v2516
      %v2615 = vpop.f32.mrf.mxu0
      %v2616 = vadd.f32 0.0, %v2615
      %v2617 = vpop.f32.mrf.mxu0
      %v2618 = vpop.f32.mrf.mxu0
      %v2619 = vadd.f32 0.0, %v2618
      %v2620 = vpop.f32.mrf.mxu0
      %2621 = vmatprep.mubr.bf16.mxu0 0
      %2622 = vmatmul.mubr.bf16.gmra.mxu0 %v2519
      %v2623 = vpop.f32.mrf.mxu0
      %v2624 = vadd.f32 0.0, %v2623
      %v2625 = vpop.f32.mrf.mxu0
      %v2626 = vpop.f32.mrf.mxu0
      %v2627 = vadd.f32 0.0, %v2626
      %v2628 = vpop.f32.mrf.mxu0
      %2629 = vmatprep.mubr.bf16.mxu0 0
      %2630 = vmatmul.mubr.bf16.gmra.mxu0 %v2522
      %v2631 = vpop.f32.mrf.mxu0
      %v2632 = vadd.f32 0.0, %v2631
      %v2633 = vpop.f32.mrf.mxu0
      %v2634 = vpop.f32.mrf.mxu0
      %v2635 = vadd.f32 0.0, %v2634
      %v2636 = vpop.f32.mrf.mxu0
      %2637 = vmatprep.mubr.bf16.mxu0 0
      %2638 = vmatmul.mubr.bf16.gmra.mxu0 %v2525
      %v2639 = vpop.f32.mrf.mxu0
      %v2640 = vadd.f32 0.0, %v2639
      %v2641 = vpop.f32.mrf.mxu0
      %v2642 = vpop.f32.mrf.mxu0
      %v2643 = vadd.f32 0.0, %v2642
      %v2644 = vpop.f32.mrf.mxu0
      %2645 = vmatprep.mubr.bf16.mxu0 0
      %2646 = vmatmul.mubr.bf16.gmra.mxu0 %v2528
      %v2647 = vpop.f32.mrf.mxu0
      %v2648 = vadd.f32 0.0, %v2647
      %v2649 = vpop.f32.mrf.mxu0
      %v2650 = vpop.f32.mrf.mxu0
      %v2651 = vadd.f32 0.0, %v2650
      %v2652 = vpop.f32.mrf.mxu0
      %2653 = vmatprep.mubr.bf16.mxu0 0
      %2654 = vmatmul.mubr.bf16.gmra.mxu0 %v2531
      %v2655 = vpop.f32.mrf.mxu0
      %v2656 = vadd.f32 0.0, %v2655
      %v2657 = vpop.f32.mrf.mxu0
      %v2658 = vpop.f32.mrf.mxu0
      %v2659 = vadd.f32 0.0, %v2658
      %v2660 = vpop.f32.mrf.mxu0
      %2661 = vmatprep.mubr.bf16.mxu0 0
      %2662 = vmatmul.mubr.bf16.gmra.mxu0 %v2534
      %v2663 = vpop.f32.mrf.mxu0
      %v2664 = vadd.f32 0.0, %v2663
      %v2665 = vpop.f32.mrf.mxu0
      %v2666 = vpop.f32.mrf.mxu0
      %v2667 = vadd.f32 0.0, %v2666
      %v2668 = vpop.f32.mrf.mxu0
      %2669 = vmatprep.mubr.bf16.mxu0 0
      %2670 = vmatmul.mubr.bf16.gmra.mxu0 %v2537
      %v2671 = vpop.f32.mrf.mxu0
      %v2672 = vadd.f32 0.0, %v2671
      %v2673 = vpop.f32.mrf.mxu0
      %v2674 = vpop.f32.mrf.mxu0
      %v2675 = vadd.f32 0.0, %v2674
      %v2676 = vpop.f32.mrf.mxu0
      %2677 = vmatprep.mubr.bf16.mxu0 0
      %2678 = vmatmul.mubr.bf16.gmra.mxu0 %v2540
      %v2679 = vpop.f32.mrf.mxu0
      %v2680 = vadd.f32 0.0, %v2679
      %v2681 = vpop.f32.mrf.mxu0
      %v2682 = vpop.f32.mrf.mxu0
      %v2683 = vadd.f32 0.0, %v2682
      %v2684 = vpop.f32.mrf.mxu0
      %2685 = vmatprep.mubr.bf16.mxu0 0
      %2686 = vmatmul.mubr.bf16.gmra.mxu0 %v2543
      %v2687 = vpop.f32.mrf.mxu0
      %v2688 = vadd.f32 0.0, %v2687
      %v2689 = vpop.f32.mrf.mxu0
      %v2690 = vpop.f32.mrf.mxu0
      %v2691 = vadd.f32 0.0, %v2690
      %v2692 = vpop.f32.mrf.mxu0
      %2693 = vmatprep.mubr.bf16.mxu0 0
      %2694 = vmatmul.mubr.bf16.gmra.mxu0 %v2546
      %v2695 = vpop.f32.mrf.mxu0
      %v2696 = vadd.f32 0.0, %v2695
      %v2697 = vpop.f32.mrf.mxu0
      %v2698 = vpop.f32.mrf.mxu0
      %v2699 = vadd.f32 0.0, %v2698
      %v2700 = vpop.f32.mrf.mxu0
      %2701 = vmatprep.mubr.bf16.mxu0 0
      %2702 = vmatmul.mubr.bf16.gmra.mxu0 %v2549
      %v2703 = vpop.f32.mrf.mxu0
      %v2704 = vadd.f32 0.0, %v2703
      %v2705 = vpop.f32.mrf.mxu0
      %v2706 = vpop.f32.mrf.mxu0
      %v2707 = vadd.f32 0.0, %v2706
      %v2708 = vpop.f32.mrf.mxu0
      %2709 = vmatprep.mubr.bf16.mxu0 0
      %2710 = vmatmul.mubr.bf16.gmra.mxu0 %v2552
      %v2711 = vpop.f32.mrf.mxu0
      %v2712 = vadd.f32 0.0, %v2711
      %v2713 = vpop.f32.mrf.mxu0
      %v2714 = vpop.f32.mrf.mxu0
      %v2715 = vadd.f32 0.0, %v2714
      %v2716 = vpop.f32.mrf.mxu0
      %2717 = vdwg.mxu0
      %v2718 = vadd.f32 %v1992, %v2592
      %v2719 = vadd.f32 %v1993, %v2595
      %v2720 = vadd.f32 %v1994, %v2600
      %v2721 = vadd.f32 %v1995, %v2603
      %v2722 = vadd.f32 %v1996, %v2608
      %v2723 = vadd.f32 %v1997, %v2611
      %v2724 = vadd.f32 %v1998, %v2616
      %v2725 = vadd.f32 %v1999, %v2619
      %v2726 = vadd.f32 %v2000, %v2624
      %v2727 = vadd.f32 %v2001, %v2627
      %v2728 = vadd.f32 %v2002, %v2632
      %v2729 = vadd.f32 %v2003, %v2635
      %v2730 = vadd.f32 %v2004, %v2640
      %v2731 = vadd.f32 %v2005, %v2643
      %v2732 = vadd.f32 %v2006, %v2648
      %v2733 = vadd.f32 %v2007, %v2651
      %v2734 = vadd.f32 %v2008, %v2656
      %v2735 = vadd.f32 %v2009, %v2659
      %v2736 = vadd.f32 %v2010, %v2664
      %v2737 = vadd.f32 %v2011, %v2667
      %v2738 = vadd.f32 %v2012, %v2672
      %v2739 = vadd.f32 %v2013, %v2675
      %v2740 = vadd.f32 %v2014, %v2680
      %v2741 = vadd.f32 %v2015, %v2683
      %v2742 = vadd.f32 %v2016, %v2688
      %v2743 = vadd.f32 %v2017, %v2691
      %v2744 = vadd.f32 %v2018, %v2696
      %v2745 = vadd.f32 %v2019, %v2699
      %v2746 = vadd.f32 %v2020, %v2704
      %v2747 = vadd.f32 %v2021, %v2707
      %v2748 = vadd.f32 %v2022, %v2712
      %v2749 = vadd.f32 %v2023, %v2715
      %v2750 = vld [vmem:[%s1665] sm:$0xe]
      %v2751 = vld [vmem:[%s1665 + $0xc] sm:$0xe]
      %v2752 = vld [vmem:[%s1665 + $0x18] sm:$0xe]
      %v2753 = vld [vmem:[%s1665 + $0x24] sm:$0xe]
      %v2754 = vld [vmem:[%s1665 + $0x30] sm:$0xe]
      %v2755 = vld [vmem:[%s1665 + $0x3c] sm:$0xe]
      %v2756 = vld [vmem:[%s1665 + $0x48] sm:$0xe]
      %v2757 = vld [vmem:[%s1665 + $0x54] sm:$0xe]
      %v2758 = vld [vmem:[%s1665 + $0x60] sm:$0xe]
      %v2759 = vld [vmem:[%s1665 + $0x6c] sm:$0xe]
      %v2760 = vld [vmem:[%s1665 + $0x78] sm:$0xe]
      %v2761 = vld [vmem:[%s1665 + $0x84] sm:$0xe]
      %v2762 = vld [vmem:[%s1665 + $0x90] sm:$0xe]
      %v2763 = vld [vmem:[%s1665 + $0x9c] sm:$0xe]
      %v2764 = vld [vmem:[%s1665 + $0xa8] sm:$0xe]
      %v2765 = vld [vmem:[%s1665 + $0xb4] sm:$0xe]
      %v2814 = vrot.slane %v2750, 5
      %v2815 = vrot.slane %v2814, 4
      %v2816 = vrot.slane %v2025, 5
      %v2817 = vsel %vm1258, %v2815, %v2816
      %v2818 = vrot.slane %v2816, 4
      %v2819 = vrot.slane %v2026, 5
      %v2820 = vsel %vm1258, %v2818, %v2819
      %v2821 = vrot.slane %v2751, 5
      %v2822 = vrot.slane %v2821, 4
      %v2823 = vrot.slane %v2028, 5
      %v2824 = vsel %vm1258, %v2822, %v2823
      %v2825 = vrot.slane %v2823, 4
      %v2826 = vrot.slane %v2029, 5
      %v2827 = vsel %vm1258, %v2825, %v2826
      %v2828 = vrot.slane %v2752, 5
      %v2829 = vrot.slane %v2828, 4
      %v2830 = vrot.slane %v2031, 5
      %v2831 = vsel %vm1258, %v2829, %v2830
      %v2832 = vrot.slane %v2830, 4
      %v2833 = vrot.slane %v2032, 5
      %v2834 = vsel %vm1258, %v2832, %v2833
      %v2835 = vrot.slane %v2753, 5
      %v2836 = vrot.slane %v2835, 4
      %v2837 = vrot.slane %v2034, 5
      %v2838 = vsel %vm1258, %v2836, %v2837
      %v2839 = vrot.slane %v2837, 4
      %v2840 = vrot.slane %v2035, 5
      %v2841 = vsel %vm1258, %v2839, %v2840
      %v2842 = vrot.slane %v2754, 5
      %v2843 = vrot.slane %v2842, 4
      %v2844 = vrot.slane %v2037, 5
      %v2845 = vsel %vm1258, %v2843, %v2844
      %v2846 = vrot.slane %v2844, 4
      %v2847 = vrot.slane %v2038, 5
      %v2848 = vsel %vm1258, %v2846, %v2847
      %v2849 = vrot.slane %v2755, 5
      %v2850 = vrot.slane %v2849, 4
      %v2851 = vrot.slane %v2040, 5
      %v2852 = vsel %vm1258, %v2850, %v2851
      %v2853 = vrot.slane %v2851, 4
      %v2854 = vrot.slane %v2041, 5
      %v2855 = vsel %vm1258, %v2853, %v2854
      %v2856 = vrot.slane %v2756, 5
      %v2857 = vrot.slane %v2856, 4
      %v2858 = vrot.slane %v2043, 5
      %v2859 = vsel %vm1258, %v2857, %v2858
      %v2860 = vrot.slane %v2858, 4
      %v2861 = vrot.slane %v2044, 5
      %v2862 = vsel %vm1258, %v2860, %v2861
      %v2863 = vrot.slane %v2757, 5
      %v2864 = vrot.slane %v2863, 4
      %v2865 = vrot.slane %v2046, 5
      %v2866 = vsel %vm1258, %v2864, %v2865
      %v2867 = vrot.slane %v2865, 4
      %v2868 = vrot.slane %v2047, 5
      %v2869 = vsel %vm1258, %v2867, %v2868
      %v2870 = vrot.slane %v2758, 5
      %v2871 = vrot.slane %v2870, 4
      %v2872 = vrot.slane %v2049, 5
      %v2873 = vsel %vm1258, %v2871, %v2872
      %v2874 = vrot.slane %v2872, 4
      %v2875 = vrot.slane %v2050, 5
      %v2876 = vsel %vm1258, %v2874, %v2875
      %v2877 = vrot.slane %v2759, 5
      %v2878 = vrot.slane %v2877, 4
      %v2879 = vrot.slane %v2052, 5
      %v2880 = vsel %vm1258, %v2878, %v2879
      %v2881 = vrot.slane %v2879, 4
      %v2882 = vrot.slane %v2053, 5
      %v2883 = vsel %vm1258, %v2881, %v2882
      %v2884 = vrot.slane %v2760, 5
      %v2885 = vrot.slane %v2884, 4
      %v2886 = vrot.slane %v2055, 5
      %v2887 = vsel %vm1258, %v2885, %v2886
      %v2888 = vrot.slane %v2886, 4
      %v2889 = vrot.slane %v2056, 5
      %v2890 = vsel %vm1258, %v2888, %v2889
      %v2891 = vrot.slane %v2761, 5
      %v2892 = vrot.slane %v2891, 4
      %v2893 = vrot.slane %v2058, 5
      %v2894 = vsel %vm1258, %v2892, %v2893
      %v2895 = vrot.slane %v2893, 4
      %v2896 = vrot.slane %v2059, 5
      %v2897 = vsel %vm1258, %v2895, %v2896
      %v2898 = vrot.slane %v2762, 5
      %v2899 = vrot.slane %v2898, 4
      %v2900 = vrot.slane %v2061, 5
      %v2901 = vsel %vm1258, %v2899, %v2900
      %v2902 = vrot.slane %v2900, 4
      %v2903 = vrot.slane %v2062, 5
      %v2904 = vsel %vm1258, %v2902, %v2903
      %v2905 = vrot.slane %v2763, 5
      %v2906 = vrot.slane %v2905, 4
      %v2907 = vrot.slane %v2064, 5
      %v2908 = vsel %vm1258, %v2906, %v2907
      %v2909 = vrot.slane %v2907, 4
      %v2910 = vrot.slane %v2065, 5
      %v2911 = vsel %vm1258, %v2909, %v2910
      %v2912 = vrot.slane %v2764, 5
      %v2913 = vrot.slane %v2912, 4
      %v2914 = vrot.slane %v2067, 5
      %v2915 = vsel %vm1258, %v2913, %v2914
      %v2916 = vrot.slane %v2914, 4
      %v2917 = vrot.slane %v2068, 5
      %v2918 = vsel %vm1258, %v2916, %v2917
      %v2919 = vrot.slane %v2765, 5
      %v2920 = vrot.slane %v2919, 4
      %v2921 = vrot.slane %v2070, 5
      %v2922 = vsel %vm1258, %v2920, %v2921
      %v2923 = vrot.slane %v2921, 4
      %v2924 = vrot.slane %v2071, 5
      %v2925 = vsel %vm1258, %v2923, %v2924
      %s2926 = scalar_lea.vmem %s1, 10
      %v2927 = vld [vmem:[%s2926] sm:$0x3]
      %v2928 = vunpack.c.l.b16 %v2817
      %v2929 = vunpack.c.l.b16 %v2820
      %v2930 = vunpack.c.l.b16 %v2824
      %v2931 = vunpack.c.l.b16 %v2827
      %v2932 = vunpack.c.l.b16 %v2831
      %v2933 = vunpack.c.l.b16 %v2834
      %v2934 = vunpack.c.l.b16 %v2838
      %v2935 = vunpack.c.l.b16 %v2841
      %v2936 = vunpack.c.l.b16 %v2845
      %v2937 = vunpack.c.l.b16 %v2848
      %v2938 = vunpack.c.l.b16 %v2852
      %v2939 = vunpack.c.l.b16 %v2855
      %v2940 = vunpack.c.l.b16 %v2859
      %v2941 = vunpack.c.l.b16 %v2862
      %v2942 = vunpack.c.l.b16 %v2866
      %v2943 = vunpack.c.l.b16 %v2869
      %v2944 = vunpack.c.l.b16 %v2873
      %v2945 = vunpack.c.l.b16 %v2876
      %v2946 = vunpack.c.l.b16 %v2880
      %v2947 = vunpack.c.l.b16 %v2883
      %v2948 = vunpack.c.l.b16 %v2887
      %v2949 = vunpack.c.l.b16 %v2890
      %v2950 = vunpack.c.l.b16 %v2894
      %v2951 = vunpack.c.l.b16 %v2897
      %v2952 = vunpack.c.l.b16 %v2901
      %v2953 = vunpack.c.l.b16 %v2904
      %v2954 = vunpack.c.l.b16 %v2908
      %v2955 = vunpack.c.l.b16 %v2911
      %v2956 = vunpack.c.l.b16 %v2915
      %v2957 = vunpack.c.l.b16 %v2918
      %v2958 = vunpack.c.l.b16 %v2922
      %v2959 = vunpack.c.l.b16 %v2925
      %v2960 = vpack.c.b16 %v2929, %v2928
      %v2961 = vpack.c.b16 %v2931, %v2930
      %v2962 = vpack.c.b16 %v2933, %v2932
      %v2963 = vpack.c.b16 %v2935, %v2934
      %v2964 = vpack.c.b16 %v2937, %v2936
      %v2965 = vpack.c.b16 %v2939, %v2938
      %v2966 = vpack.c.b16 %v2941, %v2940
      %v2967 = vpack.c.b16 %v2943, %v2942
      %v2968 = vpack.c.b16 %v2945, %v2944
      %v2969 = vpack.c.b16 %v2947, %v2946
      %v2970 = vpack.c.b16 %v2949, %v2948
      %v2971 = vpack.c.b16 %v2951, %v2950
      %v2972 = vpack.c.b16 %v2953, %v2952
      %v2973 = vpack.c.b16 %v2955, %v2954
      %v2974 = vpack.c.b16 %v2957, %v2956
      %v2975 = vpack.c.b16 %v2959, %v2958
      %v2977 = vsel %vm702, %v2960, 0
      %v2980 = vsel %vm702, %v2961, 0
      %v2983 = vsel %vm702, %v2962, 0
      %v2986 = vsel %vm702, %v2963, 0
      %v2989 = vsel %vm702, %v2964, 0
      %v2992 = vsel %vm702, %v2965, 0
      %v2995 = vsel %vm702, %v2966, 0
      %v2998 = vsel %vm702, %v2967, 0
      %v3001 = vsel %vm702, %v2968, 0
      %v3004 = vsel %vm702, %v2969, 0
      %v3007 = vsel %vm702, %v2970, 0
      %v3010 = vsel %vm702, %v2971, 0
      %v3013 = vsel %vm702, %v2972, 0
      %v3016 = vsel %vm702, %v2973, 0
      %v3019 = vsel %vm702, %v2974, 0
      %v3022 = vsel %vm702, %v2975, 0
      %v3025 = vsel %vm751, %v2927, 0
      %3027 = vmatprep.subr.bf16.mxu0 0
      %3028 = vmatpush1.bf16.msra.mxu0 0
      %3029 = vmatprep.subr.bf16.mxu0 0
      %3030 = vmatpush1.bf16.msra.mxu0 0
      %3031 = vmatprep.subr.bf16.mxu0 0
      %3032 = vmatpush1.bf16.msra.mxu0 0
      %3033 = vmatprep.subr.bf16.mxu0 0
      %3034 = vmatpush1.bf16.msra.mxu0 0
      %3035 = vmatprep.subr.bf16.mxu0 0
      %3036 = vmatpush1.bf16.msra.mxu0 0
      %3037 = vmatprep.subr.bf16.mxu0 0
      %3038 = vmatpush1.bf16.msra.mxu0 0
      %3039 = vmatprep.subr.bf16.mxu0 0
      %3040 = vmatpush1.bf16.msra.mxu0 0
      %3041 = vmatprep.subr.bf16.mxu0 0
      %3042 = vmatpush1.bf16.msra.mxu0 %v3025
      %3043 = vmatprep.subr.bf16.mxu0 0
      %3044 = vmatpush2.bf16.msra.mxu0 0
      %3045 = vmatprep.subr.bf16.mxu0 0
      %3046 = vmatpush2.bf16.msra.mxu0 0
      %3047 = vmatprep.subr.bf16.mxu0 0
      %3048 = vmatpush2.bf16.msra.mxu0 0
      %3049 = vmatprep.subr.bf16.mxu0 0
      %3050 = vmatpush2.bf16.msra.mxu0 0
      %3051 = vmatprep.subr.bf16.mxu0 0
      %3052 = vmatpush2.bf16.msra.mxu0 0
      %3053 = vmatprep.subr.bf16.mxu0 0
      %3054 = vmatpush2.bf16.msra.mxu0 0
      %3055 = vmatprep.subr.bf16.mxu0 0
      %3056 = vmatpush2.bf16.msra.mxu0 0
      %3057 = vmatprep.subr.bf16.mxu0 0
      %3058 = vmatpush2.bf16.msra.mxu0 0
      %3059 = vmatprep.mubr.bf16.mxu0 0
      %3060 = vmatmul.mubr.bf16.gmra.mxu0 %v2977
      %v3061 = vpop.f32.mrf.mxu0
      %v3062 = vadd.f32 0.0, %v3061
      %v3063 = vpop.f32.mrf.mxu0
      %v3064 = vpop.f32.mrf.mxu0
      %v3065 = vadd.f32 0.0, %v3064
      %v3066 = vpop.f32.mrf.mxu0
      %3067 = vmatprep.mubr.bf16.mxu0 0
      %3068 = vmatmul.mubr.bf16.gmra.mxu0 %v2980
      %v3069 = vpop.f32.mrf.mxu0
      %v3070 = vadd.f32 0.0, %v3069
      %v3071 = vpop.f32.mrf.mxu0
      %v3072 = vpop.f32.mrf.mxu0
      %v3073 = vadd.f32 0.0, %v3072
      %v3074 = vpop.f32.mrf.mxu0
      %3075 = vmatprep.mubr.bf16.mxu0 0
      %3076 = vmatmul.mubr.bf16.gmra.mxu0 %v2983
      %v3077 = vpop.f32.mrf.mxu0
      %v3078 = vadd.f32 0.0, %v3077
      %v3079 = vpop.f32.mrf.mxu0
      %v3080 = vpop.f32.mrf.mxu0
      %v3081 = vadd.f32 0.0, %v3080
      %v3082 = vpop.f32.mrf.mxu0
      %3083 = vmatprep.mubr.bf16.mxu0 0
      %3084 = vmatmul.mubr.bf16.gmra.mxu0 %v2986
      %v3085 = vpop.f32.mrf.mxu0
      %v3086 = vadd.f32 0.0, %v3085
      %v3087 = vpop.f32.mrf.mxu0
      %v3088 = vpop.f32.mrf.mxu0
      %v3089 = vadd.f32 0.0, %v3088
      %v3090 = vpop.f32.mrf.mxu0
      %3091 = vmatprep.mubr.bf16.mxu0 0
      %3092 = vmatmul.mubr.bf16.gmra.mxu0 %v2989
      %v3093 = vpop.f32.mrf.mxu0
      %v3094 = vadd.f32 0.0, %v3093
      %v3095 = vpop.f32.mrf.mxu0
      %v3096 = vpop.f32.mrf.mxu0
      %v3097 = vadd.f32 0.0, %v3096
      %v3098 = vpop.f32.mrf.mxu0
      %3099 = vmatprep.mubr.bf16.mxu0 0
      %3100 = vmatmul.mubr.bf16.gmra.mxu0 %v2992
      %v3101 = vpop.f32.mrf.mxu0
      %v3102 = vadd.f32 0.0, %v3101
      %v3103 = vpop.f32.mrf.mxu0
      %v3104 = vpop.f32.mrf.mxu0
      %v3105 = vadd.f32 0.0, %v3104
      %v3106 = vpop.f32.mrf.mxu0
      %3107 = vmatprep.mubr.bf16.mxu0 0
      %3108 = vmatmul.mubr.bf16.gmra.mxu0 %v2995
      %v3109 = vpop.f32.mrf.mxu0
      %v3110 = vadd.f32 0.0, %v3109
      %v3111 = vpop.f32.mrf.mxu0
      %v3112 = vpop.f32.mrf.mxu0
      %v3113 = vadd.f32 0.0, %v3112
      %v3114 = vpop.f32.mrf.mxu0
      %3115 = vmatprep.mubr.bf16.mxu0 0
      %3116 = vmatmul.mubr.bf16.gmra.mxu0 %v2998
      %v3117 = vpop.f32.mrf.mxu0
      %v3118 = vadd.f32 0.0, %v3117
      %v3119 = vpop.f32.mrf.mxu0
      %v3120 = vpop.f32.mrf.mxu0
      %v3121 = vadd.f32 0.0, %v3120
      %v3122 = vpop.f32.mrf.mxu0
      %3123 = vmatprep.mubr.bf16.mxu0 0
      %3124 = vmatmul.mubr.bf16.gmra.mxu0 %v3001
      %v3125 = vpop.f32.mrf.mxu0
      %v3126 = vadd.f32 0.0, %v3125
      %v3127 = vpop.f32.mrf.mxu0
      %v3128 = vpop.f32.mrf.mxu0
      %v3129 = vadd.f32 0.0, %v3128
      %v3130 = vpop.f32.mrf.mxu0
      %3131 = vmatprep.mubr.bf16.mxu0 0
      %3132 = vmatmul.mubr.bf16.gmra.mxu0 %v3004
      %v3133 = vpop.f32.mrf.mxu0
      %v3134 = vadd.f32 0.0, %v3133
      %v3135 = vpop.f32.mrf.mxu0
      %v3136 = vpop.f32.mrf.mxu0
      %v3137 = vadd.f32 0.0, %v3136
      %v3138 = vpop.f32.mrf.mxu0
      %3139 = vmatprep.mubr.bf16.mxu0 0
      %3140 = vmatmul.mubr.bf16.gmra.mxu0 %v3007
      %v3141 = vpop.f32.mrf.mxu0
      %v3142 = vadd.f32 0.0, %v3141
      %v3143 = vpop.f32.mrf.mxu0
      %v3144 = vpop.f32.mrf.mxu0
      %v3145 = vadd.f32 0.0, %v3144
      %v3146 = vpop.f32.mrf.mxu0
      %3147 = vmatprep.mubr.bf16.mxu0 0
      %3148 = vmatmul.mubr.bf16.gmra.mxu0 %v3010
      %v3149 = vpop.f32.mrf.mxu0
      %v3150 = vadd.f32 0.0, %v3149
      %v3151 = vpop.f32.mrf.mxu0
      %v3152 = vpop.f32.mrf.mxu0
      %v3153 = vadd.f32 0.0, %v3152
      %v3154 = vpop.f32.mrf.mxu0
      %3155 = vmatprep.mubr.bf16.mxu0 0
      %3156 = vmatmul.mubr.bf16.gmra.mxu0 %v3013
      %v3157 = vpop.f32.mrf.mxu0
      %v3158 = vadd.f32 0.0, %v3157
      %v3159 = vpop.f32.mrf.mxu0
      %v3160 = vpop.f32.mrf.mxu0
      %v3161 = vadd.f32 0.0, %v3160
      %v3162 = vpop.f32.mrf.mxu0
      %3163 = vmatprep.mubr.bf16.mxu0 0
      %3164 = vmatmul.mubr.bf16.gmra.mxu0 %v3016
      %v3165 = vpop.f32.mrf.mxu0
      %v3166 = vadd.f32 0.0, %v3165
      %v3167 = vpop.f32.mrf.mxu0
      %v3168 = vpop.f32.mrf.mxu0
      %v3169 = vadd.f32 0.0, %v3168
      %v3170 = vpop.f32.mrf.mxu0
      %3171 = vmatprep.mubr.bf16.mxu0 0
      %3172 = vmatmul.mubr.bf16.gmra.mxu0 %v3019
      %v3173 = vpop.f32.mrf.mxu0
      %v3174 = vadd.f32 0.0, %v3173
      %v3175 = vpop.f32.mrf.mxu0
      %v3176 = vpop.f32.mrf.mxu0
      %v3177 = vadd.f32 0.0, %v3176
      %v3178 = vpop.f32.mrf.mxu0
      %3179 = vmatprep.mubr.bf16.mxu0 0
      %3180 = vmatmul.mubr.bf16.gmra.mxu0 %v3022
      %v3181 = vpop.f32.mrf.mxu0
      %v3182 = vadd.f32 0.0, %v3181
      %v3183 = vpop.f32.mrf.mxu0
      %v3184 = vpop.f32.mrf.mxu0
      %v3185 = vadd.f32 0.0, %v3184
      %v3186 = vpop.f32.mrf.mxu0
      %3187 = vdwg.mxu0
      %v3188 = vadd.f32 %v2718, %v3062
      %v3189 = vadd.f32 %v2719, %v3065
      %v3190 = vadd.f32 %v2720, %v3070
      %v3191 = vadd.f32 %v2721, %v3073
      %v3192 = vadd.f32 %v2722, %v3078
      %v3193 = vadd.f32 %v2723, %v3081
      %v3194 = vadd.f32 %v2724, %v3086
      %v3195 = vadd.f32 %v2725, %v3089
      %v3196 = vadd.f32 %v2726, %v3094
      %v3197 = vadd.f32 %v2727, %v3097
      %v3198 = vadd.f32 %v2728, %v3102
      %v3199 = vadd.f32 %v2729, %v3105
      %v3200 = vadd.f32 %v2730, %v3110
      %v3201 = vadd.f32 %v2731, %v3113
      %v3202 = vadd.f32 %v2732, %v3118
      %v3203 = vadd.f32 %v2733, %v3121
      %v3204 = vadd.f32 %v2734, %v3126
      %v3205 = vadd.f32 %v2735, %v3129
      %v3206 = vadd.f32 %v2736, %v3134
      %v3207 = vadd.f32 %v2737, %v3137
      %v3208 = vadd.f32 %v2738, %v3142
      %v3209 = vadd.f32 %v2739, %v3145
      %v3210 = vadd.f32 %v2740, %v3150
      %v3211 = vadd.f32 %v2741, %v3153
      %v3212 = vadd.f32 %v2742, %v3158
      %v3213 = vadd.f32 %v2743, %v3161
      %v3214 = vadd.f32 %v2744, %v3166
      %v3215 = vadd.f32 %v2745, %v3169
      %v3216 = vadd.f32 %v2746, %v3174
      %v3217 = vadd.f32 %v2747, %v3177
      %v3218 = vadd.f32 %v2748, %v3182
      %v3219 = vadd.f32 %v2749, %v3185
      %s3220 = scalar_lea.vmem %s203, 24
      %v3221 = vld [vmem:[%s3220] sm:$0xf]
      %v3222 = vld [vmem:[%s3220 + $0x4] sm:$0xf]
      %v3223 = vld [vmem:[%s3220 + $0xc] sm:$0xf]
      %v3224 = vld [vmem:[%s3220 + $0x10] sm:$0xf]
      %v3225 = vld [vmem:[%s3220 + $0x18] sm:$0xf]
      %v3226 = vld [vmem:[%s3220 + $0x1c] sm:$0xf]
      %v3227 = vld [vmem:[%s3220 + $0x24] sm:$0xf]
      %v3228 = vld [vmem:[%s3220 + $0x28] sm:$0xf]
      %v3229 = vld [vmem:[%s3220 + $0x30] sm:$0xf]
      %v3230 = vld [vmem:[%s3220 + $0x34] sm:$0xf]
      %v3231 = vld [vmem:[%s3220 + $0x3c] sm:$0xf]
      %v3232 = vld [vmem:[%s3220 + $0x40] sm:$0xf]
      %v3233 = vld [vmem:[%s3220 + $0x48] sm:$0xf]
      %v3234 = vld [vmem:[%s3220 + $0x4c] sm:$0xf]
      %v3235 = vld [vmem:[%s3220 + $0x54] sm:$0xf]
      %v3236 = vld [vmem:[%s3220 + $0x58] sm:$0xf]
      %v3237 = vld [vmem:[%s3220 + $0x60] sm:$0xf]
      %v3238 = vld [vmem:[%s3220 + $0x64] sm:$0xf]
      %v3239 = vld [vmem:[%s3220 + $0x6c] sm:$0xf]
      %v3240 = vld [vmem:[%s3220 + $0x70] sm:$0xf]
      %v3241 = vld [vmem:[%s3220 + $0x78] sm:$0xf]
      %v3242 = vld [vmem:[%s3220 + $0x7c] sm:$0xf]
      %v3243 = vld [vmem:[%s3220 + $0x84] sm:$0xf]
      %v3244 = vld [vmem:[%s3220 + $0x88] sm:$0xf]
      %v3245 = vld [vmem:[%s3220 + $0x90] sm:$0xf]
      %v3246 = vld [vmem:[%s3220 + $0x94] sm:$0xf]
      %v3247 = vld [vmem:[%s3220 + $0x9c] sm:$0xf]
      %v3248 = vld [vmem:[%s3220 + $0xa0] sm:$0xf]
      %v3249 = vld [vmem:[%s3220 + $0xa8] sm:$0xf]
      %v3250 = vld [vmem:[%s3220 + $0xac] sm:$0xf]
      %v3251 = vld [vmem:[%s3220 + $0xb4] sm:$0xf]
      %v3252 = vld [vmem:[%s3220 + $0xb8] sm:$0xf]
      %s3253 = scalar_lea.vmem %s1, 12
      %v3254 = vld [vmem:[%s3253] sm:$0x3]
      %v3287 = vunpack.c.l.b16 %v3221
      %v3288 = vunpack.c.l.b16 %v3222
      %v3289 = vunpack.c.l.b16 %v3223
      %v3290 = vunpack.c.l.b16 %v3224
      %v3291 = vunpack.c.l.b16 %v3225
      %v3292 = vunpack.c.l.b16 %v3226
      %v3293 = vunpack.c.l.b16 %v3227
      %v3294 = vunpack.c.l.b16 %v3228
      %v3295 = vunpack.c.l.b16 %v3229
      %v3296 = vunpack.c.l.b16 %v3230
      %v3297 = vunpack.c.l.b16 %v3231
      %v3298 = vunpack.c.l.b16 %v3232
      %v3299 = vunpack.c.l.b16 %v3233
      %v3300 = vunpack.c.l.b16 %v3234
      %v3301 = vunpack.c.l.b16 %v3235
      %v3302 = vunpack.c.l.b16 %v3236
      %v3303 = vunpack.c.l.b16 %v3237
      %v3304 = vunpack.c.l.b16 %v3238
      %v3305 = vunpack.c.l.b16 %v3239
      %v3306 = vunpack.c.l.b16 %v3240
      %v3307 = vunpack.c.l.b16 %v3241
      %v3308 = vunpack.c.l.b16 %v3242
      %v3309 = vunpack.c.l.b16 %v3243
      %v3310 = vunpack.c.l.b16 %v3244
      %v3311 = vunpack.c.l.b16 %v3245
      %v3312 = vunpack.c.l.b16 %v3246
      %v3313 = vunpack.c.l.b16 %v3247
      %v3314 = vunpack.c.l.b16 %v3248
      %v3315 = vunpack.c.l.b16 %v3249
      %v3316 = vunpack.c.l.b16 %v3250
      %v3317 = vunpack.c.l.b16 %v3251
      %v3318 = vunpack.c.l.b16 %v3252
      %v3319 = vpack.c.b16 %v3288, %v3287
      %v3320 = vpack.c.b16 %v3290, %v3289
      %v3321 = vpack.c.b16 %v3292, %v3291
      %v3322 = vpack.c.b16 %v3294, %v3293
      %v3323 = vpack.c.b16 %v3296, %v3295
      %v3324 = vpack.c.b16 %v3298, %v3297
      %v3325 = vpack.c.b16 %v3300, %v3299
      %v3326 = vpack.c.b16 %v3302, %v3301
      %v3327 = vpack.c.b16 %v3304, %v3303
      %v3328 = vpack.c.b16 %v3306, %v3305
      %v3329 = vpack.c.b16 %v3308, %v3307
      %v3330 = vpack.c.b16 %v3310, %v3309
      %v3331 = vpack.c.b16 %v3312, %v3311
      %v3332 = vpack.c.b16 %v3314, %v3313
      %v3333 = vpack.c.b16 %v3316, %v3315
      %v3334 = vpack.c.b16 %v3318, %v3317
      %v3336 = vsel %vm702, %v3319, 0
      %v3339 = vsel %vm702, %v3320, 0
      %v3342 = vsel %vm702, %v3321, 0
      %v3345 = vsel %vm702, %v3322, 0
      %v3348 = vsel %vm702, %v3323, 0
      %v3351 = vsel %vm702, %v3324, 0
      %v3354 = vsel %vm702, %v3325, 0
      %v3357 = vsel %vm702, %v3326, 0
      %v3360 = vsel %vm702, %v3327, 0
      %v3363 = vsel %vm702, %v3328, 0
      %v3366 = vsel %vm702, %v3329, 0
      %v3369 = vsel %vm702, %v3330, 0
      %v3372 = vsel %vm702, %v3331, 0
      %v3375 = vsel %vm702, %v3332, 0
      %v3378 = vsel %vm702, %v3333, 0
      %v3381 = vsel %vm702, %v3334, 0
      %v3384 = vsel %vm751, %v3254, 0
      %3386 = vmatprep.subr.bf16.mxu0 0
      %3387 = vmatpush1.bf16.msra.mxu0 0
      %3388 = vmatprep.subr.bf16.mxu0 0
      %3389 = vmatpush1.bf16.msra.mxu0 0
      %3390 = vmatprep.subr.bf16.mxu0 0
      %3391 = vmatpush1.bf16.msra.mxu0 0
      %3392 = vmatprep.subr.bf16.mxu0 0
      %3393 = vmatpush1.bf16.msra.mxu0 0
      %3394 = vmatprep.subr.bf16.mxu0 0
      %3395 = vmatpush1.bf16.msra.mxu0 0
      %3396 = vmatprep.subr.bf16.mxu0 0
      %3397 = vmatpush1.bf16.msra.mxu0 0
      %3398 = vmatprep.subr.bf16.mxu0 0
      %3399 = vmatpush1.bf16.msra.mxu0 0
      %3400 = vmatprep.subr.bf16.mxu0 0
      %3401 = vmatpush1.bf16.msra.mxu0 %v3384
      %3402 = vmatprep.subr.bf16.mxu0 0
      %3403 = vmatpush2.bf16.msra.mxu0 0
      %3404 = vmatprep.subr.bf16.mxu0 0
      %3405 = vmatpush2.bf16.msra.mxu0 0
      %3406 = vmatprep.subr.bf16.mxu0 0
      %3407 = vmatpush2.bf16.msra.mxu0 0
      %3408 = vmatprep.subr.bf16.mxu0 0
      %3409 = vmatpush2.bf16.msra.mxu0 0
      %3410 = vmatprep.subr.bf16.mxu0 0
      %3411 = vmatpush2.bf16.msra.mxu0 0
      %3412 = vmatprep.subr.bf16.mxu0 0
      %3413 = vmatpush2.bf16.msra.mxu0 0
      %3414 = vmatprep.subr.bf16.mxu0 0
      %3415 = vmatpush2.bf16.msra.mxu0 0
      %3416 = vmatprep.subr.bf16.mxu0 0
      %3417 = vmatpush2.bf16.msra.mxu0 0
      %3418 = vmatprep.mubr.bf16.mxu0 0
      %3419 = vmatmul.mubr.bf16.gmra.mxu0 %v3336
      %v3420 = vpop.f32.mrf.mxu0
      %v3421 = vadd.f32 0.0, %v3420
      %v3422 = vpop.f32.mrf.mxu0
      %v3423 = vpop.f32.mrf.mxu0
      %v3424 = vadd.f32 0.0, %v3423
      %v3425 = vpop.f32.mrf.mxu0
      %3426 = vmatprep.mubr.bf16.mxu0 0
      %3427 = vmatmul.mubr.bf16.gmra.mxu0 %v3339
      %v3428 = vpop.f32.mrf.mxu0
      %v3429 = vadd.f32 0.0, %v3428
      %v3430 = vpop.f32.mrf.mxu0
      %v3431 = vpop.f32.mrf.mxu0
      %v3432 = vadd.f32 0.0, %v3431
      %v3433 = vpop.f32.mrf.mxu0
      %3434 = vmatprep.mubr.bf16.mxu0 0
      %3435 = vmatmul.mubr.bf16.gmra.mxu0 %v3342
      %v3436 = vpop.f32.mrf.mxu0
      %v3437 = vadd.f32 0.0, %v3436
      %v3438 = vpop.f32.mrf.mxu0
      %v3439 = vpop.f32.mrf.mxu0
      %v3440 = vadd.f32 0.0, %v3439
      %v3441 = vpop.f32.mrf.mxu0
      %3442 = vmatprep.mubr.bf16.mxu0 0
      %3443 = vmatmul.mubr.bf16.gmra.mxu0 %v3345
      %v3444 = vpop.f32.mrf.mxu0
      %v3445 = vadd.f32 0.0, %v3444
      %v3446 = vpop.f32.mrf.mxu0
      %v3447 = vpop.f32.mrf.mxu0
      %v3448 = vadd.f32 0.0, %v3447
      %v3449 = vpop.f32.mrf.mxu0
      %3450 = vmatprep.mubr.bf16.mxu0 0
      %3451 = vmatmul.mubr.bf16.gmra.mxu0 %v3348
      %v3452 = vpop.f32.mrf.mxu0
      %v3453 = vadd.f32 0.0, %v3452
      %v3454 = vpop.f32.mrf.mxu0
      %v3455 = vpop.f32.mrf.mxu0
      %v3456 = vadd.f32 0.0, %v3455
      %v3457 = vpop.f32.mrf.mxu0
      %3458 = vmatprep.mubr.bf16.mxu0 0
      %3459 = vmatmul.mubr.bf16.gmra.mxu0 %v3351
      %v3460 = vpop.f32.mrf.mxu0
      %v3461 = vadd.f32 0.0, %v3460
      %v3462 = vpop.f32.mrf.mxu0
      %v3463 = vpop.f32.mrf.mxu0
      %v3464 = vadd.f32 0.0, %v3463
      %v3465 = vpop.f32.mrf.mxu0
      %3466 = vmatprep.mubr.bf16.mxu0 0
      %3467 = vmatmul.mubr.bf16.gmra.mxu0 %v3354
      %v3468 = vpop.f32.mrf.mxu0
      %v3469 = vadd.f32 0.0, %v3468
      %v3470 = vpop.f32.mrf.mxu0
      %v3471 = vpop.f32.mrf.mxu0
      %v3472 = vadd.f32 0.0, %v3471
      %v3473 = vpop.f32.mrf.mxu0
      %3474 = vmatprep.mubr.bf16.mxu0 0
      %3475 = vmatmul.mubr.bf16.gmra.mxu0 %v3357
      %v3476 = vpop.f32.mrf.mxu0
      %v3477 = vadd.f32 0.0, %v3476
      %v3478 = vpop.f32.mrf.mxu0
      %v3479 = vpop.f32.mrf.mxu0
      %v3480 = vadd.f32 0.0, %v3479
      %v3481 = vpop.f32.mrf.mxu0
      %3482 = vmatprep.mubr.bf16.mxu0 0
      %3483 = vmatmul.mubr.bf16.gmra.mxu0 %v3360
      %v3484 = vpop.f32.mrf.mxu0
      %v3485 = vadd.f32 0.0, %v3484
      %v3486 = vpop.f32.mrf.mxu0
      %v3487 = vpop.f32.mrf.mxu0
      %v3488 = vadd.f32 0.0, %v3487
      %v3489 = vpop.f32.mrf.mxu0
      %3490 = vmatprep.mubr.bf16.mxu0 0
      %3491 = vmatmul.mubr.bf16.gmra.mxu0 %v3363
      %v3492 = vpop.f32.mrf.mxu0
      %v3493 = vadd.f32 0.0, %v3492
      %v3494 = vpop.f32.mrf.mxu0
      %v3495 = vpop.f32.mrf.mxu0
      %v3496 = vadd.f32 0.0, %v3495
      %v3497 = vpop.f32.mrf.mxu0
      %3498 = vmatprep.mubr.bf16.mxu0 0
      %3499 = vmatmul.mubr.bf16.gmra.mxu0 %v3366
      %v3500 = vpop.f32.mrf.mxu0
      %v3501 = vadd.f32 0.0, %v3500
      %v3502 = vpop.f32.mrf.mxu0
      %v3503 = vpop.f32.mrf.mxu0
      %v3504 = vadd.f32 0.0, %v3503
      %v3505 = vpop.f32.mrf.mxu0
      %3506 = vmatprep.mubr.bf16.mxu0 0
      %3507 = vmatmul.mubr.bf16.gmra.mxu0 %v3369
      %v3508 = vpop.f32.mrf.mxu0
      %v3509 = vadd.f32 0.0, %v3508
      %v3510 = vpop.f32.mrf.mxu0
      %v3511 = vpop.f32.mrf.mxu0
      %v3512 = vadd.f32 0.0, %v3511
      %v3513 = vpop.f32.mrf.mxu0
      %3514 = vmatprep.mubr.bf16.mxu0 0
      %3515 = vmatmul.mubr.bf16.gmra.mxu0 %v3372
      %v3516 = vpop.f32.mrf.mxu0
      %v3517 = vadd.f32 0.0, %v3516
      %v3518 = vpop.f32.mrf.mxu0
      %v3519 = vpop.f32.mrf.mxu0
      %v3520 = vadd.f32 0.0, %v3519
      %v3521 = vpop.f32.mrf.mxu0
      %3522 = vmatprep.mubr.bf16.mxu0 0
      %3523 = vmatmul.mubr.bf16.gmra.mxu0 %v3375
      %v3524 = vpop.f32.mrf.mxu0
      %v3525 = vadd.f32 0.0, %v3524
      %v3526 = vpop.f32.mrf.mxu0
      %v3527 = vpop.f32.mrf.mxu0
      %v3528 = vadd.f32 0.0, %v3527
      %v3529 = vpop.f32.mrf.mxu0
      %3530 = vmatprep.mubr.bf16.mxu0 0
      %3531 = vmatmul.mubr.bf16.gmra.mxu0 %v3378
      %v3532 = vpop.f32.mrf.mxu0
      %v3533 = vadd.f32 0.0, %v3532
      %v3534 = vpop.f32.mrf.mxu0
      %v3535 = vpop.f32.mrf.mxu0
      %v3536 = vadd.f32 0.0, %v3535
      %v3537 = vpop.f32.mrf.mxu0
      %3538 = vmatprep.mubr.bf16.mxu0 0
      %3539 = vmatmul.mubr.bf16.gmra.mxu0 %v3381
      %v3540 = vpop.f32.mrf.mxu0
      %v3541 = vadd.f32 0.0, %v3540
      %v3542 = vpop.f32.mrf.mxu0
      %v3543 = vpop.f32.mrf.mxu0
      %v3544 = vadd.f32 0.0, %v3543
      %v3545 = vpop.f32.mrf.mxu0
      %3546 = vdwg.mxu0
      %v3547 = vadd.f32 %v3188, %v3421
      %v3548 = vadd.f32 %v3189, %v3424
      %v3549 = vadd.f32 %v3190, %v3429
      %v3550 = vadd.f32 %v3191, %v3432
      %v3551 = vadd.f32 %v3192, %v3437
      %v3552 = vadd.f32 %v3193, %v3440
      %v3553 = vadd.f32 %v3194, %v3445
      %v3554 = vadd.f32 %v3195, %v3448
      %v3555 = vadd.f32 %v3196, %v3453
      %v3556 = vadd.f32 %v3197, %v3456
      %v3557 = vadd.f32 %v3198, %v3461
      %v3558 = vadd.f32 %v3199, %v3464
      %v3559 = vadd.f32 %v3200, %v3469
      %v3560 = vadd.f32 %v3201, %v3472
      %v3561 = vadd.f32 %v3202, %v3477
      %v3562 = vadd.f32 %v3203, %v3480
      %v3563 = vadd.f32 %v3204, %v3485
      %v3564 = vadd.f32 %v3205, %v3488
      %v3565 = vadd.f32 %v3206, %v3493
      %v3566 = vadd.f32 %v3207, %v3496
      %v3567 = vadd.f32 %v3208, %v3501
      %v3568 = vadd.f32 %v3209, %v3504
      %v3569 = vadd.f32 %v3210, %v3509
      %v3570 = vadd.f32 %v3211, %v3512
      %v3571 = vadd.f32 %v3212, %v3517
      %v3572 = vadd.f32 %v3213, %v3520
      %v3573 = vadd.f32 %v3214, %v3525
      %v3574 = vadd.f32 %v3215, %v3528
      %v3575 = vadd.f32 %v3216, %v3533
      %v3576 = vadd.f32 %v3217, %v3536
      %v3577 = vadd.f32 %v3218, %v3541
      %v3578 = vadd.f32 %v3219, %v3544
      %v3579 = vld [vmem:[%s3220] sm:$0xf]
      %v3580 = vld [vmem:[%s3220 + $0x4] sm:$0xf]
      %v3581 = vld [vmem:[%s3220 + $0x8] sm:$0x1]
      %v3582 = vld [vmem:[%s3220 + $0xc] sm:$0xf]
      %v3583 = vld [vmem:[%s3220 + $0x10] sm:$0xf]
      %v3584 = vld [vmem:[%s3220 + $0x14] sm:$0x1]
      %v3585 = vld [vmem:[%s3220 + $0x18] sm:$0xf]
      %v3586 = vld [vmem:[%s3220 + $0x1c] sm:$0xf]
      %v3587 = vld [vmem:[%s3220 + $0x20] sm:$0x1]
      %v3588 = vld [vmem:[%s3220 + $0x24] sm:$0xf]
      %v3589 = vld [vmem:[%s3220 + $0x28] sm:$0xf]
      %v3590 = vld [vmem:[%s3220 + $0x2c] sm:$0x1]
      %v3591 = vld [vmem:[%s3220 + $0x30] sm:$0xf]
      %v3592 = vld [vmem:[%s3220 + $0x34] sm:$0xf]
      %v3593 = vld [vmem:[%s3220 + $0x38] sm:$0x1]
      %v3594 = vld [vmem:[%s3220 + $0x3c] sm:$0xf]
      %v3595 = vld [vmem:[%s3220 + $0x40] sm:$0xf]
      %v3596 = vld [vmem:[%s3220 + $0x44] sm:$0x1]
      %v3597 = vld [vmem:[%s3220 + $0x48] sm:$0xf]
      %v3598 = vld [vmem:[%s3220 + $0x4c] sm:$0xf]
      %v3599 = vld [vmem:[%s3220 + $0x50] sm:$0x1]
      %v3600 = vld [vmem:[%s3220 + $0x54] sm:$0xf]
      %v3601 = vld [vmem:[%s3220 + $0x58] sm:$0xf]
      %v3602 = vld [vmem:[%s3220 + $0x5c] sm:$0x1]
      %v3603 = vld [vmem:[%s3220 + $0x60] sm:$0xf]
      %v3604 = vld [vmem:[%s3220 + $0x64] sm:$0xf]
      %v3605 = vld [vmem:[%s3220 + $0x68] sm:$0x1]
      %v3606 = vld [vmem:[%s3220 + $0x6c] sm:$0xf]
      %v3607 = vld [vmem:[%s3220 + $0x70] sm:$0xf]
      %v3608 = vld [vmem:[%s3220 + $0x74] sm:$0x1]
      %v3609 = vld [vmem:[%s3220 + $0x78] sm:$0xf]
      %v3610 = vld [vmem:[%s3220 + $0x7c] sm:$0xf]
      %v3611 = vld [vmem:[%s3220 + $0x80] sm:$0x1]
      %v3612 = vld [vmem:[%s3220 + $0x84] sm:$0xf]
      %v3613 = vld [vmem:[%s3220 + $0x88] sm:$0xf]
      %v3614 = vld [vmem:[%s3220 + $0x8c] sm:$0x1]
      %v3615 = vld [vmem:[%s3220 + $0x90] sm:$0xf]
      %v3616 = vld [vmem:[%s3220 + $0x94] sm:$0xf]
      %v3617 = vld [vmem:[%s3220 + $0x98] sm:$0x1]
      %v3618 = vld [vmem:[%s3220 + $0x9c] sm:$0xf]
      %v3619 = vld [vmem:[%s3220 + $0xa0] sm:$0xf]
      %v3620 = vld [vmem:[%s3220 + $0xa4] sm:$0x1]
      %v3621 = vld [vmem:[%s3220 + $0xa8] sm:$0xf]
      %v3622 = vld [vmem:[%s3220 + $0xac] sm:$0xf]
      %v3623 = vld [vmem:[%s3220 + $0xb0] sm:$0x1]
      %v3624 = vld [vmem:[%s3220 + $0xb4] sm:$0xf]
      %v3625 = vld [vmem:[%s3220 + $0xb8] sm:$0xf]
      %v3626 = vld [vmem:[%s3220 + $0xbc] sm:$0x1]
      %v3628 = vshrl.u32 %v3579, 16
      %v3630 = vrot.slane %v3628, 4
      %v3631 = vshll.u32 %v3579, 16
      %v3633 = vrot.slane %v3631, 5
      %v3634 = vor.u32 %v3630, %v3633
      %v3635 = vrot.slane %v3634, 4
      %v3637 = vshll.u32 %v3580, 16
      %v3639 = vrot.slane %v3637, 5
      %v3640 = vsel %vm267, %v3635, %v3639
      %v3641 = vshrl.u32 %v3580, 16
      %v3643 = vrot.slane %v3641, 4
      %v3644 = vor.u32 %v3643, %v3639
      %v3645 = vrot.slane %v3644, 4
      %v3647 = vshll.u32 %v3581, 16
      %v3649 = vrot.slane %v3647, 5
      %v3650 = vsel %vm267, %v3645, %v3649
      %v3652 = vshrl.u32 %v3582, 16
      %v3654 = vrot.slane %v3652, 4
      %v3655 = vshll.u32 %v3582, 16
      %v3657 = vrot.slane %v3655, 5
      %v3658 = vor.u32 %v3654, %v3657
      %v3659 = vrot.slane %v3658, 4
      %v3661 = vshll.u32 %v3583, 16
      %v3663 = vrot.slane %v3661, 5
      %v3664 = vsel %vm267, %v3659, %v3663
      %v3665 = vshrl.u32 %v3583, 16
      %v3667 = vrot.slane %v3665, 4
      %v3668 = vor.u32 %v3667, %v3663
      %v3669 = vrot.slane %v3668, 4
      %v3671 = vshll.u32 %v3584, 16
      %v3673 = vrot.slane %v3671, 5
      %v3674 = vsel %vm267, %v3669, %v3673
      %v3676 = vshrl.u32 %v3585, 16
      %v3678 = vrot.slane %v3676, 4
      %v3679 = vshll.u32 %v3585, 16
      %v3681 = vrot.slane %v3679, 5
      %v3682 = vor.u32 %v3678, %v3681
      %v3683 = vrot.slane %v3682, 4
      %v3685 = vshll.u32 %v3586, 16
      %v3687 = vrot.slane %v3685, 5
      %v3688 = vsel %vm267, %v3683, %v3687
      %v3689 = vshrl.u32 %v3586, 16
      %v3691 = vrot.slane %v3689, 4
      %v3692 = vor.u32 %v3691, %v3687
      %v3693 = vrot.slane %v3692, 4
      %v3695 = vshll.u32 %v3587, 16
      %v3697 = vrot.slane %v3695, 5
      %v3698 = vsel %vm267, %v3693, %v3697
      %v3700 = vshrl.u32 %v3588, 16
      %v3702 = vrot.slane %v3700, 4
      %v3703 = vshll.u32 %v3588, 16
      %v3705 = vrot.slane %v3703, 5
      %v3706 = vor.u32 %v3702, %v3705
      %v3707 = vrot.slane %v3706, 4
      %v3709 = vshll.u32 %v3589, 16
      %v3711 = vrot.slane %v3709, 5
      %v3712 = vsel %vm267, %v3707, %v3711
      %v3713 = vshrl.u32 %v3589, 16
      %v3715 = vrot.slane %v3713, 4
      %v3716 = vor.u32 %v3715, %v3711
      %v3717 = vrot.slane %v3716, 4
      %v3719 = vshll.u32 %v3590, 16
      %v3721 = vrot.slane %v3719, 5
      %v3722 = vsel %vm267, %v3717, %v3721
      %v3724 = vshrl.u32 %v3591, 16
      %v3726 = vrot.slane %v3724, 4
      %v3727 = vshll.u32 %v3591, 16
      %v3729 = vrot.slane %v3727, 5
      %v3730 = vor.u32 %v3726, %v3729
      %v3731 = vrot.slane %v3730, 4
      %v3733 = vshll.u32 %v3592, 16
      %v3735 = vrot.slane %v3733, 5
      %v3736 = vsel %vm267, %v3731, %v3735
      %v3737 = vshrl.u32 %v3592, 16
      %v3739 = vrot.slane %v3737, 4
      %v3740 = vor.u32 %v3739, %v3735
      %v3741 = vrot.slane %v3740, 4
      %v3743 = vshll.u32 %v3593, 16
      %v3745 = vrot.slane %v3743, 5
      %v3746 = vsel %vm267, %v3741, %v3745
      %v3748 = vshrl.u32 %v3594, 16
      %v3750 = vrot.slane %v3748, 4
      %v3751 = vshll.u32 %v3594, 16
      %v3753 = vrot.slane %v3751, 5
      %v3754 = vor.u32 %v3750, %v3753
      %v3755 = vrot.slane %v3754, 4
      %v3757 = vshll.u32 %v3595, 16
      %v3759 = vrot.slane %v3757, 5
      %v3760 = vsel %vm267, %v3755, %v3759
      %v3761 = vshrl.u32 %v3595, 16
      %v3763 = vrot.slane %v3761, 4
      %v3764 = vor.u32 %v3763, %v3759
      %v3765 = vrot.slane %v3764, 4
      %v3767 = vshll.u32 %v3596, 16
      %v3769 = vrot.slane %v3767, 5
      %v3770 = vsel %vm267, %v3765, %v3769
      %v3772 = vshrl.u32 %v3597, 16
      %v3774 = vrot.slane %v3772, 4
      %v3775 = vshll.u32 %v3597, 16
      %v3777 = vrot.slane %v3775, 5
      %v3778 = vor.u32 %v3774, %v3777
      %v3779 = vrot.slane %v3778, 4
      %v3781 = vshll.u32 %v3598, 16
      %v3783 = vrot.slane %v3781, 5
      %v3784 = vsel %vm267, %v3779, %v3783
      %v3785 = vshrl.u32 %v3598, 16
      %v3787 = vrot.slane %v3785, 4
      %v3788 = vor.u32 %v3787, %v3783
      %v3789 = vrot.slane %v3788, 4
      %v3791 = vshll.u32 %v3599, 16
      %v3793 = vrot.slane %v3791, 5
      %v3794 = vsel %vm267, %v3789, %v3793
      %v3796 = vshrl.u32 %v3600, 16
      %v3798 = vrot.slane %v3796, 4
      %v3799 = vshll.u32 %v3600, 16
      %v3801 = vrot.slane %v3799, 5
      %v3802 = vor.u32 %v3798, %v3801
      %v3803 = vrot.slane %v3802, 4
      %v3805 = vshll.u32 %v3601, 16
      %v3807 = vrot.slane %v3805, 5
      %v3808 = vsel %vm267, %v3803, %v3807
      %v3809 = vshrl.u32 %v3601, 16
      %v3811 = vrot.slane %v3809, 4
      %v3812 = vor.u32 %v3811, %v3807
      %v3813 = vrot.slane %v3812, 4
      %v3815 = vshll.u32 %v3602, 16
      %v3817 = vrot.slane %v3815, 5
      %v3818 = vsel %vm267, %v3813, %v3817
      %v3820 = vshrl.u32 %v3603, 16
      %v3822 = vrot.slane %v3820, 4
      %v3823 = vshll.u32 %v3603, 16
      %v3825 = vrot.slane %v3823, 5
      %v3826 = vor.u32 %v3822, %v3825
      %v3827 = vrot.slane %v3826, 4
      %v3829 = vshll.u32 %v3604, 16
      %v3831 = vrot.slane %v3829, 5
      %v3832 = vsel %vm267, %v3827, %v3831
      %v3833 = vshrl.u32 %v3604, 16
      %v3835 = vrot.slane %v3833, 4
      %v3836 = vor.u32 %v3835, %v3831
      %v3837 = vrot.slane %v3836, 4
      %v3839 = vshll.u32 %v3605, 16
      %v3841 = vrot.slane %v3839, 5
      %v3842 = vsel %vm267, %v3837, %v3841
      %v3844 = vshrl.u32 %v3606, 16
      %v3846 = vrot.slane %v3844, 4
      %v3847 = vshll.u32 %v3606, 16
      %v3849 = vrot.slane %v3847, 5
      %v3850 = vor.u32 %v3846, %v3849
      %v3851 = vrot.slane %v3850, 4
      %v3853 = vshll.u32 %v3607, 16
      %v3855 = vrot.slane %v3853, 5
      %v3856 = vsel %vm267, %v3851, %v3855
      %v3857 = vshrl.u32 %v3607, 16
      %v3859 = vrot.slane %v3857, 4
      %v3860 = vor.u32 %v3859, %v3855
      %v3861 = vrot.slane %v3860, 4
      %v3863 = vshll.u32 %v3608, 16
      %v3865 = vrot.slane %v3863, 5
      %v3866 = vsel %vm267, %v3861, %v3865
      %v3868 = vshrl.u32 %v3609, 16
      %v3870 = vrot.slane %v3868, 4
      %v3871 = vshll.u32 %v3609, 16
      %v3873 = vrot.slane %v3871, 5
      %v3874 = vor.u32 %v3870, %v3873
      %v3875 = vrot.slane %v3874, 4
      %v3877 = vshll.u32 %v3610, 16
      %v3879 = vrot.slane %v3877, 5
      %v3880 = vsel %vm267, %v3875, %v3879
      %v3881 = vshrl.u32 %v3610, 16
      %v3883 = vrot.slane %v3881, 4
      %v3884 = vor.u32 %v3883, %v3879
      %v3885 = vrot.slane %v3884, 4
      %v3887 = vshll.u32 %v3611, 16
      %v3889 = vrot.slane %v3887, 5
      %v3890 = vsel %vm267, %v3885, %v3889
      %v3892 = vshrl.u32 %v3612, 16
      %v3894 = vrot.slane %v3892, 4
      %v3895 = vshll.u32 %v3612, 16
      %v3897 = vrot.slane %v3895, 5
      %v3898 = vor.u32 %v3894, %v3897
      %v3899 = vrot.slane %v3898, 4
      %v3901 = vshll.u32 %v3613, 16
      %v3903 = vrot.slane %v3901, 5
      %v3904 = vsel %vm267, %v3899, %v3903
      %v3905 = vshrl.u32 %v3613, 16
      %v3907 = vrot.slane %v3905, 4
      %v3908 = vor.u32 %v3907, %v3903
      %v3909 = vrot.slane %v3908, 4
      %v3911 = vshll.u32 %v3614, 16
      %v3913 = vrot.slane %v3911, 5
      %v3914 = vsel %vm267, %v3909, %v3913
      %v3916 = vshrl.u32 %v3615, 16
      %v3918 = vrot.slane %v3916, 4
      %v3919 = vshll.u32 %v3615, 16
      %v3921 = vrot.slane %v3919, 5
      %v3922 = vor.u32 %v3918, %v3921
      %v3923 = vrot.slane %v3922, 4
      %v3925 = vshll.u32 %v3616, 16
      %v3927 = vrot.slane %v3925, 5
      %v3928 = vsel %vm267, %v3923, %v3927
      %v3929 = vshrl.u32 %v3616, 16
      %v3931 = vrot.slane %v3929, 4
      %v3932 = vor.u32 %v3931, %v3927
      %v3933 = vrot.slane %v3932, 4
      %v3935 = vshll.u32 %v3617, 16
      %v3937 = vrot.slane %v3935, 5
      %v3938 = vsel %vm267, %v3933, %v3937
      %v3940 = vshrl.u32 %v3618, 16
      %v3942 = vrot.slane %v3940, 4
      %v3943 = vshll.u32 %v3618, 16
      %v3945 = vrot.slane %v3943, 5
      %v3946 = vor.u32 %v3942, %v3945
      %v3947 = vrot.slane %v3946, 4
      %v3949 = vshll.u32 %v3619, 16
      %v3951 = vrot.slane %v3949, 5
      %v3952 = vsel %vm267, %v3947, %v3951
      %v3953 = vshrl.u32 %v3619, 16
      %v3955 = vrot.slane %v3953, 4
      %v3956 = vor.u32 %v3955, %v3951
      %v3957 = vrot.slane %v3956, 4
      %v3959 = vshll.u32 %v3620, 16
      %v3961 = vrot.slane %v3959, 5
      %v3962 = vsel %vm267, %v3957, %v3961
      %v3964 = vshrl.u32 %v3621, 16
      %v3966 = vrot.slane %v3964, 4
      %v3967 = vshll.u32 %v3621, 16
      %v3969 = vrot.slane %v3967, 5
      %v3970 = vor.u32 %v3966, %v3969
      %v3971 = vrot.slane %v3970, 4
      %v3973 = vshll.u32 %v3622, 16
      %v3975 = vrot.slane %v3973, 5
      %v3976 = vsel %vm267, %v3971, %v3975
      %v3977 = vshrl.u32 %v3622, 16
      %v3979 = vrot.slane %v3977, 4
      %v3980 = vor.u32 %v3979, %v3975
      %v3981 = vrot.slane %v3980, 4
      %v3983 = vshll.u32 %v3623, 16
      %v3985 = vrot.slane %v3983, 5
      %v3986 = vsel %vm267, %v3981, %v3985
      %v3988 = vshrl.u32 %v3624, 16
      %v3990 = vrot.slane %v3988, 4
      %v3991 = vshll.u32 %v3624, 16
      %v3993 = vrot.slane %v3991, 5
      %v3994 = vor.u32 %v3990, %v3993
      %v3995 = vrot.slane %v3994, 4
      %v3997 = vshll.u32 %v3625, 16
      %v3999 = vrot.slane %v3997, 5
      %v4000 = vsel %vm267, %v3995, %v3999
      %v4001 = vshrl.u32 %v3625, 16
      %v4003 = vrot.slane %v4001, 4
      %v4004 = vor.u32 %v4003, %v3999
      %v4005 = vrot.slane %v4004, 4
      %v4007 = vshll.u32 %v3626, 16
      %v4009 = vrot.slane %v4007, 5
      %v4010 = vsel %vm267, %v4005, %v4009
      %s4011 = scalar_lea.vmem %s1, 14
      %v4012 = vld [vmem:[%s4011] sm:$0x3]
      %v4013 = vunpack.c.l.b16 %v3640
      %v4014 = vunpack.c.l.b16 %v3650
      %v4015 = vunpack.c.l.b16 %v3664
      %v4016 = vunpack.c.l.b16 %v3674
      %v4017 = vunpack.c.l.b16 %v3688
      %v4018 = vunpack.c.l.b16 %v3698
      %v4019 = vunpack.c.l.b16 %v3712
      %v4020 = vunpack.c.l.b16 %v3722
      %v4021 = vunpack.c.l.b16 %v3736
      %v4022 = vunpack.c.l.b16 %v3746
      %v4023 = vunpack.c.l.b16 %v3760
      %v4024 = vunpack.c.l.b16 %v3770
      %v4025 = vunpack.c.l.b16 %v3784
      %v4026 = vunpack.c.l.b16 %v3794
      %v4027 = vunpack.c.l.b16 %v3808
      %v4028 = vunpack.c.l.b16 %v3818
      %v4029 = vunpack.c.l.b16 %v3832
      %v4030 = vunpack.c.l.b16 %v3842
      %v4031 = vunpack.c.l.b16 %v3856
      %v4032 = vunpack.c.l.b16 %v3866
      %v4033 = vunpack.c.l.b16 %v3880
      %v4034 = vunpack.c.l.b16 %v3890
      %v4035 = vunpack.c.l.b16 %v3904
      %v4036 = vunpack.c.l.b16 %v3914
      %v4037 = vunpack.c.l.b16 %v3928
      %v4038 = vunpack.c.l.b16 %v3938
      %v4039 = vunpack.c.l.b16 %v3952
      %v4040 = vunpack.c.l.b16 %v3962
      %v4041 = vunpack.c.l.b16 %v3976
      %v4042 = vunpack.c.l.b16 %v3986
      %v4043 = vunpack.c.l.b16 %v4000
      %v4044 = vunpack.c.l.b16 %v4010
      %v4045 = vpack.c.b16 %v4014, %v4013
      %v4046 = vpack.c.b16 %v4016, %v4015
      %v4047 = vpack.c.b16 %v4018, %v4017
      %v4048 = vpack.c.b16 %v4020, %v4019
      %v4049 = vpack.c.b16 %v4022, %v4021
      %v4050 = vpack.c.b16 %v4024, %v4023
      %v4051 = vpack.c.b16 %v4026, %v4025
      %v4052 = vpack.c.b16 %v4028, %v4027
      %v4053 = vpack.c.b16 %v4030, %v4029
      %v4054 = vpack.c.b16 %v4032, %v4031
      %v4055 = vpack.c.b16 %v4034, %v4033
      %v4056 = vpack.c.b16 %v4036, %v4035
      %v4057 = vpack.c.b16 %v4038, %v4037
      %v4058 = vpack.c.b16 %v4040, %v4039
      %v4059 = vpack.c.b16 %v4042, %v4041
      %v4060 = vpack.c.b16 %v4044, %v4043
      %v4062 = vsel %vm702, %v4045, 0
      %v4065 = vsel %vm702, %v4046, 0
      %v4068 = vsel %vm702, %v4047, 0
      %v4071 = vsel %vm702, %v4048, 0
      %v4074 = vsel %vm702, %v4049, 0
      %v4077 = vsel %vm702, %v4050, 0
      %v4080 = vsel %vm702, %v4051, 0
      %v4083 = vsel %vm702, %v4052, 0
      %v4086 = vsel %vm702, %v4053, 0
      %v4089 = vsel %vm702, %v4054, 0
      %v4092 = vsel %vm702, %v4055, 0
      %v4095 = vsel %vm702, %v4056, 0
      %v4098 = vsel %vm702, %v4057, 0
      %v4101 = vsel %vm702, %v4058, 0
      %v4104 = vsel %vm702, %v4059, 0
      %v4107 = vsel %vm702, %v4060, 0
      %v4110 = vsel %vm751, %v4012, 0
      %4112 = vmatprep.subr.bf16.mxu0 0
      %4113 = vmatpush1.bf16.msra.mxu0 0
      %4114 = vmatprep.subr.bf16.mxu0 0
      %4115 = vmatpush1.bf16.msra.mxu0 0
      %4116 = vmatprep.subr.bf16.mxu0 0
      %4117 = vmatpush1.bf16.msra.mxu0 0
      %4118 = vmatprep.subr.bf16.mxu0 0
      %4119 = vmatpush1.bf16.msra.mxu0 0
      %4120 = vmatprep.subr.bf16.mxu0 0
      %4121 = vmatpush1.bf16.msra.mxu0 0
      %4122 = vmatprep.subr.bf16.mxu0 0
      %4123 = vmatpush1.bf16.msra.mxu0 0
      %4124 = vmatprep.subr.bf16.mxu0 0
      %4125 = vmatpush1.bf16.msra.mxu0 0
      %4126 = vmatprep.subr.bf16.mxu0 0
      %4127 = vmatpush1.bf16.msra.mxu0 %v4110
      %4128 = vmatprep.subr.bf16.mxu0 0
      %4129 = vmatpush2.bf16.msra.mxu0 0
      %4130 = vmatprep.subr.bf16.mxu0 0
      %4131 = vmatpush2.bf16.msra.mxu0 0
      %4132 = vmatprep.subr.bf16.mxu0 0
      %4133 = vmatpush2.bf16.msra.mxu0 0
      %4134 = vmatprep.subr.bf16.mxu0 0
      %4135 = vmatpush2.bf16.msra.mxu0 0
      %4136 = vmatprep.subr.bf16.mxu0 0
      %4137 = vmatpush2.bf16.msra.mxu0 0
      %4138 = vmatprep.subr.bf16.mxu0 0
      %4139 = vmatpush2.bf16.msra.mxu0 0
      %4140 = vmatprep.subr.bf16.mxu0 0
      %4141 = vmatpush2.bf16.msra.mxu0 0
      %4142 = vmatprep.subr.bf16.mxu0 0
      %4143 = vmatpush2.bf16.msra.mxu0 0
      %4144 = vmatprep.mubr.bf16.mxu0 0
      %4145 = vmatmul.mubr.bf16.gmra.mxu0 %v4062
      %v4146 = vpop.f32.mrf.mxu0
      %v4147 = vadd.f32 0.0, %v4146
      %v4148 = vpop.f32.mrf.mxu0
      %v4149 = vpop.f32.mrf.mxu0
      %v4150 = vadd.f32 0.0, %v4149
      %v4151 = vpop.f32.mrf.mxu0
      %4152 = vmatprep.mubr.bf16.mxu0 0
      %4153 = vmatmul.mubr.bf16.gmra.mxu0 %v4065
      %v4154 = vpop.f32.mrf.mxu0
      %v4155 = vadd.f32 0.0, %v4154
      %v4156 = vpop.f32.mrf.mxu0
      %v4157 = vpop.f32.mrf.mxu0
      %v4158 = vadd.f32 0.0, %v4157
      %v4159 = vpop.f32.mrf.mxu0
      %4160 = vmatprep.mubr.bf16.mxu0 0
      %4161 = vmatmul.mubr.bf16.gmra.mxu0 %v4068
      %v4162 = vpop.f32.mrf.mxu0
      %v4163 = vadd.f32 0.0, %v4162
      %v4164 = vpop.f32.mrf.mxu0
      %v4165 = vpop.f32.mrf.mxu0
      %v4166 = vadd.f32 0.0, %v4165
      %v4167 = vpop.f32.mrf.mxu0
      %4168 = vmatprep.mubr.bf16.mxu0 0
      %4169 = vmatmul.mubr.bf16.gmra.mxu0 %v4071
      %v4170 = vpop.f32.mrf.mxu0
      %v4171 = vadd.f32 0.0, %v4170
      %v4172 = vpop.f32.mrf.mxu0
      %v4173 = vpop.f32.mrf.mxu0
      %v4174 = vadd.f32 0.0, %v4173
      %v4175 = vpop.f32.mrf.mxu0
      %4176 = vmatprep.mubr.bf16.mxu0 0
      %4177 = vmatmul.mubr.bf16.gmra.mxu0 %v4074
      %v4178 = vpop.f32.mrf.mxu0
      %v4179 = vadd.f32 0.0, %v4178
      %v4180 = vpop.f32.mrf.mxu0
      %v4181 = vpop.f32.mrf.mxu0
      %v4182 = vadd.f32 0.0, %v4181
      %v4183 = vpop.f32.mrf.mxu0
      %4184 = vmatprep.mubr.bf16.mxu0 0
      %4185 = vmatmul.mubr.bf16.gmra.mxu0 %v4077
      %v4186 = vpop.f32.mrf.mxu0
      %v4187 = vadd.f32 0.0, %v4186
      %v4188 = vpop.f32.mrf.mxu0
      %v4189 = vpop.f32.mrf.mxu0
      %v4190 = vadd.f32 0.0, %v4189
      %v4191 = vpop.f32.mrf.mxu0
      %4192 = vmatprep.mubr.bf16.mxu0 0
      %4193 = vmatmul.mubr.bf16.gmra.mxu0 %v4080
      %v4194 = vpop.f32.mrf.mxu0
      %v4195 = vadd.f32 0.0, %v4194
      %v4196 = vpop.f32.mrf.mxu0
      %v4197 = vpop.f32.mrf.mxu0
      %v4198 = vadd.f32 0.0, %v4197
      %v4199 = vpop.f32.mrf.mxu0
      %4200 = vmatprep.mubr.bf16.mxu0 0
      %4201 = vmatmul.mubr.bf16.gmra.mxu0 %v4083
      %v4202 = vpop.f32.mrf.mxu0
      %v4203 = vadd.f32 0.0, %v4202
      %v4204 = vpop.f32.mrf.mxu0
      %v4205 = vpop.f32.mrf.mxu0
      %v4206 = vadd.f32 0.0, %v4205
      %v4207 = vpop.f32.mrf.mxu0
      %4208 = vmatprep.mubr.bf16.mxu0 0
      %4209 = vmatmul.mubr.bf16.gmra.mxu0 %v4086
      %v4210 = vpop.f32.mrf.mxu0
      %v4211 = vadd.f32 0.0, %v4210
      %v4212 = vpop.f32.mrf.mxu0
      %v4213 = vpop.f32.mrf.mxu0
      %v4214 = vadd.f32 0.0, %v4213
      %v4215 = vpop.f32.mrf.mxu0
      %4216 = vmatprep.mubr.bf16.mxu0 0
      %4217 = vmatmul.mubr.bf16.gmra.mxu0 %v4089
      %v4218 = vpop.f32.mrf.mxu0
      %v4219 = vadd.f32 0.0, %v4218
      %v4220 = vpop.f32.mrf.mxu0
      %v4221 = vpop.f32.mrf.mxu0
      %v4222 = vadd.f32 0.0, %v4221
      %v4223 = vpop.f32.mrf.mxu0
      %4224 = vmatprep.mubr.bf16.mxu0 0
      %4225 = vmatmul.mubr.bf16.gmra.mxu0 %v4092
      %v4226 = vpop.f32.mrf.mxu0
      %v4227 = vadd.f32 0.0, %v4226
      %v4228 = vpop.f32.mrf.mxu0
      %v4229 = vpop.f32.mrf.mxu0
      %v4230 = vadd.f32 0.0, %v4229
      %v4231 = vpop.f32.mrf.mxu0
      %4232 = vmatprep.mubr.bf16.mxu0 0
      %4233 = vmatmul.mubr.bf16.gmra.mxu0 %v4095
      %v4234 = vpop.f32.mrf.mxu0
      %v4235 = vadd.f32 0.0, %v4234
      %v4236 = vpop.f32.mrf.mxu0
      %v4237 = vpop.f32.mrf.mxu0
      %v4238 = vadd.f32 0.0, %v4237
      %v4239 = vpop.f32.mrf.mxu0
      %4240 = vmatprep.mubr.bf16.mxu0 0
      %4241 = vmatmul.mubr.bf16.gmra.mxu0 %v4098
      %v4242 = vpop.f32.mrf.mxu0
      %v4243 = vadd.f32 0.0, %v4242
      %v4244 = vpop.f32.mrf.mxu0
      %v4245 = vpop.f32.mrf.mxu0
      %v4246 = vadd.f32 0.0, %v4245
      %v4247 = vpop.f32.mrf.mxu0
      %4248 = vmatprep.mubr.bf16.mxu0 0
      %4249 = vmatmul.mubr.bf16.gmra.mxu0 %v4101
      %v4250 = vpop.f32.mrf.mxu0
      %v4251 = vadd.f32 0.0, %v4250
      %v4252 = vpop.f32.mrf.mxu0
      %v4253 = vpop.f32.mrf.mxu0
      %v4254 = vadd.f32 0.0, %v4253
      %v4255 = vpop.f32.mrf.mxu0
      %4256 = vmatprep.mubr.bf16.mxu0 0
      %4257 = vmatmul.mubr.bf16.gmra.mxu0 %v4104
      %v4258 = vpop.f32.mrf.mxu0
      %v4259 = vadd.f32 0.0, %v4258
      %v4260 = vpop.f32.mrf.mxu0
      %v4261 = vpop.f32.mrf.mxu0
      %v4262 = vadd.f32 0.0, %v4261
      %v4263 = vpop.f32.mrf.mxu0
      %4264 = vmatprep.mubr.bf16.mxu0 0
      %4265 = vmatmul.mubr.bf16.gmra.mxu0 %v4107
      %v4266 = vpop.f32.mrf.mxu0
      %v4267 = vadd.f32 0.0, %v4266
      %v4268 = vpop.f32.mrf.mxu0
      %v4269 = vpop.f32.mrf.mxu0
      %v4270 = vadd.f32 0.0, %v4269
      %v4271 = vpop.f32.mrf.mxu0
      %4272 = vdwg.mxu0
      %v4273 = vadd.f32 %v3547, %v4147
      %v4274 = vadd.f32 %v3548, %v4150
      %v4275 = vadd.f32 %v3549, %v4155
      %v4276 = vadd.f32 %v3550, %v4158
      %v4277 = vadd.f32 %v3551, %v4163
      %v4278 = vadd.f32 %v3552, %v4166
      %v4279 = vadd.f32 %v3553, %v4171
      %v4280 = vadd.f32 %v3554, %v4174
      %v4281 = vadd.f32 %v3555, %v4179
      %v4282 = vadd.f32 %v3556, %v4182
      %v4283 = vadd.f32 %v3557, %v4187
      %v4284 = vadd.f32 %v3558, %v4190
      %v4285 = vadd.f32 %v3559, %v4195
      %v4286 = vadd.f32 %v3560, %v4198
      %v4287 = vadd.f32 %v3561, %v4203
      %v4288 = vadd.f32 %v3562, %v4206
      %v4289 = vadd.f32 %v3563, %v4211
      %v4290 = vadd.f32 %v3564, %v4214
      %v4291 = vadd.f32 %v3565, %v4219
      %v4292 = vadd.f32 %v3566, %v4222
      %v4293 = vadd.f32 %v3567, %v4227
      %v4294 = vadd.f32 %v3568, %v4230
      %v4295 = vadd.f32 %v3569, %v4235
      %v4296 = vadd.f32 %v3570, %v4238
      %v4297 = vadd.f32 %v3571, %v4243
      %v4298 = vadd.f32 %v3572, %v4246
      %v4299 = vadd.f32 %v3573, %v4251
      %v4300 = vadd.f32 %v3574, %v4254
      %v4301 = vadd.f32 %v3575, %v4259
      %v4302 = vadd.f32 %v3576, %v4262
      %v4303 = vadd.f32 %v3577, %v4267
      %v4304 = vadd.f32 %v3578, %v4270
      %v4305 = vld [vmem:[%s3220] sm:$0xe]
      %v4306 = vld [vmem:[%s3220 + $0xc] sm:$0xe]
      %v4307 = vld [vmem:[%s3220 + $0x18] sm:$0xe]
      %v4308 = vld [vmem:[%s3220 + $0x24] sm:$0xe]
      %v4309 = vld [vmem:[%s3220 + $0x30] sm:$0xe]
      %v4310 = vld [vmem:[%s3220 + $0x3c] sm:$0xe]
      %v4311 = vld [vmem:[%s3220 + $0x48] sm:$0xe]
      %v4312 = vld [vmem:[%s3220 + $0x54] sm:$0xe]
      %v4313 = vld [vmem:[%s3220 + $0x60] sm:$0xe]
      %v4314 = vld [vmem:[%s3220 + $0x6c] sm:$0xe]
      %v4315 = vld [vmem:[%s3220 + $0x78] sm:$0xe]
      %v4316 = vld [vmem:[%s3220 + $0x84] sm:$0xe]
      %v4317 = vld [vmem:[%s3220 + $0x90] sm:$0xe]
      %v4318 = vld [vmem:[%s3220 + $0x9c] sm:$0xe]
      %v4319 = vld [vmem:[%s3220 + $0xa8] sm:$0xe]
      %v4320 = vld [vmem:[%s3220 + $0xb4] sm:$0xe]
      %v4369 = vrot.slane %v4305, 5
      %v4370 = vrot.slane %v4369, 4
      %v4371 = vrot.slane %v3580, 5
      %v4372 = vsel %vm1258, %v4370, %v4371
      %v4373 = vrot.slane %v4371, 4
      %v4374 = vrot.slane %v3581, 5
      %v4375 = vsel %vm1258, %v4373, %v4374
      %v4376 = vrot.slane %v4306, 5
      %v4377 = vrot.slane %v4376, 4
      %v4378 = vrot.slane %v3583, 5
      %v4379 = vsel %vm1258, %v4377, %v4378
      %v4380 = vrot.slane %v4378, 4
      %v4381 = vrot.slane %v3584, 5
      %v4382 = vsel %vm1258, %v4380, %v4381
      %v4383 = vrot.slane %v4307, 5
      %v4384 = vrot.slane %v4383, 4
      %v4385 = vrot.slane %v3586, 5
      %v4386 = vsel %vm1258, %v4384, %v4385
      %v4387 = vrot.slane %v4385, 4
      %v4388 = vrot.slane %v3587, 5
      %v4389 = vsel %vm1258, %v4387, %v4388
      %v4390 = vrot.slane %v4308, 5
      %v4391 = vrot.slane %v4390, 4
      %v4392 = vrot.slane %v3589, 5
      %v4393 = vsel %vm1258, %v4391, %v4392
      %v4394 = vrot.slane %v4392, 4
      %v4395 = vrot.slane %v3590, 5
      %v4396 = vsel %vm1258, %v4394, %v4395
      %v4397 = vrot.slane %v4309, 5
      %v4398 = vrot.slane %v4397, 4
      %v4399 = vrot.slane %v3592, 5
      %v4400 = vsel %vm1258, %v4398, %v4399
      %v4401 = vrot.slane %v4399, 4
      %v4402 = vrot.slane %v3593, 5
      %v4403 = vsel %vm1258, %v4401, %v4402
      %v4404 = vrot.slane %v4310, 5
      %v4405 = vrot.slane %v4404, 4
      %v4406 = vrot.slane %v3595, 5
      %v4407 = vsel %vm1258, %v4405, %v4406
      %v4408 = vrot.slane %v4406, 4
      %v4409 = vrot.slane %v3596, 5
      %v4410 = vsel %vm1258, %v4408, %v4409
      %v4411 = vrot.slane %v4311, 5
      %v4412 = vrot.slane %v4411, 4
      %v4413 = vrot.slane %v3598, 5
      %v4414 = vsel %vm1258, %v4412, %v4413
      %v4415 = vrot.slane %v4413, 4
      %v4416 = vrot.slane %v3599, 5
      %v4417 = vsel %vm1258, %v4415, %v4416
      %v4418 = vrot.slane %v4312, 5
      %v4419 = vrot.slane %v4418, 4
      %v4420 = vrot.slane %v3601, 5
      %v4421 = vsel %vm1258, %v4419, %v4420
      %v4422 = vrot.slane %v4420, 4
      %v4423 = vrot.slane %v3602, 5
      %v4424 = vsel %vm1258, %v4422, %v4423
      %v4425 = vrot.slane %v4313, 5
      %v4426 = vrot.slane %v4425, 4
      %v4427 = vrot.slane %v3604, 5
      %v4428 = vsel %vm1258, %v4426, %v4427
      %v4429 = vrot.slane %v4427, 4
      %v4430 = vrot.slane %v3605, 5
      %v4431 = vsel %vm1258, %v4429, %v4430
      %v4432 = vrot.slane %v4314, 5
      %v4433 = vrot.slane %v4432, 4
      %v4434 = vrot.slane %v3607, 5
      %v4435 = vsel %vm1258, %v4433, %v4434
      %v4436 = vrot.slane %v4434, 4
      %v4437 = vrot.slane %v3608, 5
      %v4438 = vsel %vm1258, %v4436, %v4437
      %v4439 = vrot.slane %v4315, 5
      %v4440 = vrot.slane %v4439, 4
      %v4441 = vrot.slane %v3610, 5
      %v4442 = vsel %vm1258, %v4440, %v4441
      %v4443 = vrot.slane %v4441, 4
      %v4444 = vrot.slane %v3611, 5
      %v4445 = vsel %vm1258, %v4443, %v4444
      %v4446 = vrot.slane %v4316, 5
      %v4447 = vrot.slane %v4446, 4
      %v4448 = vrot.slane %v3613, 5
      %v4449 = vsel %vm1258, %v4447, %v4448
      %v4450 = vrot.slane %v4448, 4
      %v4451 = vrot.slane %v3614, 5
      %v4452 = vsel %vm1258, %v4450, %v4451
      %v4453 = vrot.slane %v4317, 5
      %v4454 = vrot.slane %v4453, 4
      %v4455 = vrot.slane %v3616, 5
      %v4456 = vsel %vm1258, %v4454, %v4455
      %v4457 = vrot.slane %v4455, 4
      %v4458 = vrot.slane %v3617, 5
      %v4459 = vsel %vm1258, %v4457, %v4458
      %v4460 = vrot.slane %v4318, 5
      %v4461 = vrot.slane %v4460, 4
      %v4462 = vrot.slane %v3619, 5
      %v4463 = vsel %vm1258, %v4461, %v4462
      %v4464 = vrot.slane %v4462, 4
      %v4465 = vrot.slane %v3620, 5
      %v4466 = vsel %vm1258, %v4464, %v4465
      %v4467 = vrot.slane %v4319, 5
      %v4468 = vrot.slane %v4467, 4
      %v4469 = vrot.slane %v3622, 5
      %v4470 = vsel %vm1258, %v4468, %v4469
      %v4471 = vrot.slane %v4469, 4
      %v4472 = vrot.slane %v3623, 5
      %v4473 = vsel %vm1258, %v4471, %v4472
      %v4474 = vrot.slane %v4320, 5
      %v4475 = vrot.slane %v4474, 4
      %v4476 = vrot.slane %v3625, 5
      %v4477 = vsel %vm1258, %v4475, %v4476
      %v4478 = vrot.slane %v4476, 4
      %v4479 = vrot.slane %v3626, 5
      %v4480 = vsel %vm1258, %v4478, %v4479
      %s4481 = scalar_lea.vmem %s1, 16
      %v4482 = vld [vmem:[%s4481] sm:$0x3]
      %v4483 = vunpack.c.l.b16 %v4372
      %v4484 = vunpack.c.l.b16 %v4375
      %v4485 = vunpack.c.l.b16 %v4379
      %v4486 = vunpack.c.l.b16 %v4382
      %v4487 = vunpack.c.l.b16 %v4386
      %v4488 = vunpack.c.l.b16 %v4389
      %v4489 = vunpack.c.l.b16 %v4393
      %v4490 = vunpack.c.l.b16 %v4396
      %v4491 = vunpack.c.l.b16 %v4400
      %v4492 = vunpack.c.l.b16 %v4403
      %v4493 = vunpack.c.l.b16 %v4407
      %v4494 = vunpack.c.l.b16 %v4410
      %v4495 = vunpack.c.l.b16 %v4414
      %v4496 = vunpack.c.l.b16 %v4417
      %v4497 = vunpack.c.l.b16 %v4421
      %v4498 = vunpack.c.l.b16 %v4424
      %v4499 = vunpack.c.l.b16 %v4428
      %v4500 = vunpack.c.l.b16 %v4431
      %v4501 = vunpack.c.l.b16 %v4435
      %v4502 = vunpack.c.l.b16 %v4438
      %v4503 = vunpack.c.l.b16 %v4442
      %v4504 = vunpack.c.l.b16 %v4445
      %v4505 = vunpack.c.l.b16 %v4449
      %v4506 = vunpack.c.l.b16 %v4452
      %v4507 = vunpack.c.l.b16 %v4456
      %v4508 = vunpack.c.l.b16 %v4459
      %v4509 = vunpack.c.l.b16 %v4463
      %v4510 = vunpack.c.l.b16 %v4466
      %v4511 = vunpack.c.l.b16 %v4470
      %v4512 = vunpack.c.l.b16 %v4473
      %v4513 = vunpack.c.l.b16 %v4477
      %v4514 = vunpack.c.l.b16 %v4480
      %v4515 = vpack.c.b16 %v4484, %v4483
      %v4516 = vpack.c.b16 %v4486, %v4485
      %v4517 = vpack.c.b16 %v4488, %v4487
      %v4518 = vpack.c.b16 %v4490, %v4489
      %v4519 = vpack.c.b16 %v4492, %v4491
      %v4520 = vpack.c.b16 %v4494, %v4493
      %v4521 = vpack.c.b16 %v4496, %v4495
      %v4522 = vpack.c.b16 %v4498, %v4497
      %v4523 = vpack.c.b16 %v4500, %v4499
      %v4524 = vpack.c.b16 %v4502, %v4501
      %v4525 = vpack.c.b16 %v4504, %v4503
      %v4526 = vpack.c.b16 %v4506, %v4505
      %v4527 = vpack.c.b16 %v4508, %v4507
      %v4528 = vpack.c.b16 %v4510, %v4509
      %v4529 = vpack.c.b16 %v4512, %v4511
      %v4530 = vpack.c.b16 %v4514, %v4513
      %v4532 = vsel %vm702, %v4515, 0
      %v4535 = vsel %vm702, %v4516, 0
      %v4538 = vsel %vm702, %v4517, 0
      %v4541 = vsel %vm702, %v4518, 0
      %v4544 = vsel %vm702, %v4519, 0
      %v4547 = vsel %vm702, %v4520, 0
      %v4550 = vsel %vm702, %v4521, 0
      %v4553 = vsel %vm702, %v4522, 0
      %v4556 = vsel %vm702, %v4523, 0
      %v4559 = vsel %vm702, %v4524, 0
      %v4562 = vsel %vm702, %v4525, 0
      %v4565 = vsel %vm702, %v4526, 0
      %v4568 = vsel %vm702, %v4527, 0
      %v4571 = vsel %vm702, %v4528, 0
      %v4574 = vsel %vm702, %v4529, 0
      %v4577 = vsel %vm702, %v4530, 0
      %v4580 = vsel %vm751, %v4482, 0
      %4582 = vmatprep.subr.bf16.mxu0 0
      %4583 = vmatpush1.bf16.msra.mxu0 0
      %4584 = vmatprep.subr.bf16.mxu0 0
      %4585 = vmatpush1.bf16.msra.mxu0 0
      %4586 = vmatprep.subr.bf16.mxu0 0
      %4587 = vmatpush1.bf16.msra.mxu0 0
      %4588 = vmatprep.subr.bf16.mxu0 0
      %4589 = vmatpush1.bf16.msra.mxu0 0
      %4590 = vmatprep.subr.bf16.mxu0 0
      %4591 = vmatpush1.bf16.msra.mxu0 0
      %4592 = vmatprep.subr.bf16.mxu0 0
      %4593 = vmatpush1.bf16.msra.mxu0 0
      %4594 = vmatprep.subr.bf16.mxu0 0
      %4595 = vmatpush1.bf16.msra.mxu0 0
      %4596 = vmatprep.subr.bf16.mxu0 0
      %4597 = vmatpush1.bf16.msra.mxu0 %v4580
      %4598 = vmatprep.subr.bf16.mxu0 0
      %4599 = vmatpush2.bf16.msra.mxu0 0
      %4600 = vmatprep.subr.bf16.mxu0 0
      %4601 = vmatpush2.bf16.msra.mxu0 0
      %4602 = vmatprep.subr.bf16.mxu0 0
      %4603 = vmatpush2.bf16.msra.mxu0 0
      %4604 = vmatprep.subr.bf16.mxu0 0
      %4605 = vmatpush2.bf16.msra.mxu0 0
      %4606 = vmatprep.subr.bf16.mxu0 0
      %4607 = vmatpush2.bf16.msra.mxu0 0
      %4608 = vmatprep.subr.bf16.mxu0 0
      %4609 = vmatpush2.bf16.msra.mxu0 0
      %4610 = vmatprep.subr.bf16.mxu0 0
      %4611 = vmatpush2.bf16.msra.mxu0 0
      %4612 = vmatprep.subr.bf16.mxu0 0
      %4613 = vmatpush2.bf16.msra.mxu0 0
      %4614 = vmatprep.mubr.bf16.mxu0 0
      %4615 = vmatmul.mubr.bf16.gmra.mxu0 %v4532
      %v4616 = vpop.f32.mrf.mxu0
      %v4617 = vadd.f32 0.0, %v4616
      %v4618 = vpop.f32.mrf.mxu0
      %v4619 = vpop.f32.mrf.mxu0
      %v4620 = vadd.f32 0.0, %v4619
      %v4621 = vpop.f32.mrf.mxu0
      %4622 = vmatprep.mubr.bf16.mxu0 0
      %4623 = vmatmul.mubr.bf16.gmra.mxu0 %v4535
      %v4624 = vpop.f32.mrf.mxu0
      %v4625 = vadd.f32 0.0, %v4624
      %v4626 = vpop.f32.mrf.mxu0
      %v4627 = vpop.f32.mrf.mxu0
      %v4628 = vadd.f32 0.0, %v4627
      %v4629 = vpop.f32.mrf.mxu0
      %4630 = vmatprep.mubr.bf16.mxu0 0
      %4631 = vmatmul.mubr.bf16.gmra.mxu0 %v4538
      %v4632 = vpop.f32.mrf.mxu0
      %v4633 = vadd.f32 0.0, %v4632
      %v4634 = vpop.f32.mrf.mxu0
      %v4635 = vpop.f32.mrf.mxu0
      %v4636 = vadd.f32 0.0, %v4635
      %v4637 = vpop.f32.mrf.mxu0
      %4638 = vmatprep.mubr.bf16.mxu0 0
      %4639 = vmatmul.mubr.bf16.gmra.mxu0 %v4541
      %v4640 = vpop.f32.mrf.mxu0
      %v4641 = vadd.f32 0.0, %v4640
      %v4642 = vpop.f32.mrf.mxu0
      %v4643 = vpop.f32.mrf.mxu0
      %v4644 = vadd.f32 0.0, %v4643
      %v4645 = vpop.f32.mrf.mxu0
      %4646 = vmatprep.mubr.bf16.mxu0 0
      %4647 = vmatmul.mubr.bf16.gmra.mxu0 %v4544
      %v4648 = vpop.f32.mrf.mxu0
      %v4649 = vadd.f32 0.0, %v4648
      %v4650 = vpop.f32.mrf.mxu0
      %v4651 = vpop.f32.mrf.mxu0
      %v4652 = vadd.f32 0.0, %v4651
      %v4653 = vpop.f32.mrf.mxu0
      %4654 = vmatprep.mubr.bf16.mxu0 0
      %4655 = vmatmul.mubr.bf16.gmra.mxu0 %v4547
      %v4656 = vpop.f32.mrf.mxu0
      %v4657 = vadd.f32 0.0, %v4656
      %v4658 = vpop.f32.mrf.mxu0
      %v4659 = vpop.f32.mrf.mxu0
      %v4660 = vadd.f32 0.0, %v4659
      %v4661 = vpop.f32.mrf.mxu0
      %4662 = vmatprep.mubr.bf16.mxu0 0
      %4663 = vmatmul.mubr.bf16.gmra.mxu0 %v4550
      %v4664 = vpop.f32.mrf.mxu0
      %v4665 = vadd.f32 0.0, %v4664
      %v4666 = vpop.f32.mrf.mxu0
      %v4667 = vpop.f32.mrf.mxu0
      %v4668 = vadd.f32 0.0, %v4667
      %v4669 = vpop.f32.mrf.mxu0
      %4670 = vmatprep.mubr.bf16.mxu0 0
      %4671 = vmatmul.mubr.bf16.gmra.mxu0 %v4553
      %v4672 = vpop.f32.mrf.mxu0
      %v4673 = vadd.f32 0.0, %v4672
      %v4674 = vpop.f32.mrf.mxu0
      %v4675 = vpop.f32.mrf.mxu0
      %v4676 = vadd.f32 0.0, %v4675
      %v4677 = vpop.f32.mrf.mxu0
      %4678 = vmatprep.mubr.bf16.mxu0 0
      %4679 = vmatmul.mubr.bf16.gmra.mxu0 %v4556
      %v4680 = vpop.f32.mrf.mxu0
      %v4681 = vadd.f32 0.0, %v4680
      %v4682 = vpop.f32.mrf.mxu0
      %v4683 = vpop.f32.mrf.mxu0
      %v4684 = vadd.f32 0.0, %v4683
      %v4685 = vpop.f32.mrf.mxu0
      %4686 = vmatprep.mubr.bf16.mxu0 0
      %4687 = vmatmul.mubr.bf16.gmra.mxu0 %v4559
      %v4688 = vpop.f32.mrf.mxu0
      %v4689 = vadd.f32 0.0, %v4688
      %v4690 = vpop.f32.mrf.mxu0
      %v4691 = vpop.f32.mrf.mxu0
      %v4692 = vadd.f32 0.0, %v4691
      %v4693 = vpop.f32.mrf.mxu0
      %4694 = vmatprep.mubr.bf16.mxu0 0
      %4695 = vmatmul.mubr.bf16.gmra.mxu0 %v4562
      %v4696 = vpop.f32.mrf.mxu0
      %v4697 = vadd.f32 0.0, %v4696
      %v4698 = vpop.f32.mrf.mxu0
      %v4699 = vpop.f32.mrf.mxu0
      %v4700 = vadd.f32 0.0, %v4699
      %v4701 = vpop.f32.mrf.mxu0
      %4702 = vmatprep.mubr.bf16.mxu0 0
      %4703 = vmatmul.mubr.bf16.gmra.mxu0 %v4565
      %v4704 = vpop.f32.mrf.mxu0
      %v4705 = vadd.f32 0.0, %v4704
      %v4706 = vpop.f32.mrf.mxu0
      %v4707 = vpop.f32.mrf.mxu0
      %v4708 = vadd.f32 0.0, %v4707
      %v4709 = vpop.f32.mrf.mxu0
      %4710 = vmatprep.mubr.bf16.mxu0 0
      %4711 = vmatmul.mubr.bf16.gmra.mxu0 %v4568
      %v4712 = vpop.f32.mrf.mxu0
      %v4713 = vadd.f32 0.0, %v4712
      %v4714 = vpop.f32.mrf.mxu0
      %v4715 = vpop.f32.mrf.mxu0
      %v4716 = vadd.f32 0.0, %v4715
      %v4717 = vpop.f32.mrf.mxu0
      %4718 = vmatprep.mubr.bf16.mxu0 0
      %4719 = vmatmul.mubr.bf16.gmra.mxu0 %v4571
      %v4720 = vpop.f32.mrf.mxu0
      %v4721 = vadd.f32 0.0, %v4720
      %v4722 = vpop.f32.mrf.mxu0
      %v4723 = vpop.f32.mrf.mxu0
      %v4724 = vadd.f32 0.0, %v4723
      %v4725 = vpop.f32.mrf.mxu0
      %4726 = vmatprep.mubr.bf16.mxu0 0
      %4727 = vmatmul.mubr.bf16.gmra.mxu0 %v4574
      %v4728 = vpop.f32.mrf.mxu0
      %v4729 = vadd.f32 0.0, %v4728
      %v4730 = vpop.f32.mrf.mxu0
      %v4731 = vpop.f32.mrf.mxu0
      %v4732 = vadd.f32 0.0, %v4731
      %v4733 = vpop.f32.mrf.mxu0
      %4734 = vmatprep.mubr.bf16.mxu0 0
      %4735 = vmatmul.mubr.bf16.gmra.mxu0 %v4577
      %v4736 = vpop.f32.mrf.mxu0
      %v4737 = vadd.f32 0.0, %v4736
      %v4738 = vpop.f32.mrf.mxu0
      %v4739 = vpop.f32.mrf.mxu0
      %v4740 = vadd.f32 0.0, %v4739
      %v4741 = vpop.f32.mrf.mxu0
      %4742 = vdwg.mxu0
      %v4743 = vadd.f32 %v4273, %v4617
      %v4744 = vadd.f32 %v4274, %v4620
      %v4745 = vadd.f32 %v4275, %v4625
      %v4746 = vadd.f32 %v4276, %v4628
      %v4747 = vadd.f32 %v4277, %v4633
      %v4748 = vadd.f32 %v4278, %v4636
      %v4749 = vadd.f32 %v4279, %v4641
      %v4750 = vadd.f32 %v4280, %v4644
      %v4751 = vadd.f32 %v4281, %v4649
      %v4752 = vadd.f32 %v4282, %v4652
      %v4753 = vadd.f32 %v4283, %v4657
      %v4754 = vadd.f32 %v4284, %v4660
      %v4755 = vadd.f32 %v4285, %v4665
      %v4756 = vadd.f32 %v4286, %v4668
      %v4757 = vadd.f32 %v4287, %v4673
      %v4758 = vadd.f32 %v4288, %v4676
      %v4759 = vadd.f32 %v4289, %v4681
      %v4760 = vadd.f32 %v4290, %v4684
      %v4761 = vadd.f32 %v4291, %v4689
      %v4762 = vadd.f32 %v4292, %v4692
      %v4763 = vadd.f32 %v4293, %v4697
      %v4764 = vadd.f32 %v4294, %v4700
      %v4765 = vadd.f32 %v4295, %v4705
      %v4766 = vadd.f32 %v4296, %v4708
      %v4767 = vadd.f32 %v4297, %v4713
      %v4768 = vadd.f32 %v4298, %v4716
      %v4769 = vadd.f32 %v4299, %v4721
      %v4770 = vadd.f32 %v4300, %v4724
      %v4771 = vadd.f32 %v4301, %v4729
      %v4772 = vadd.f32 %v4302, %v4732
      %v4773 = vadd.f32 %v4303, %v4737
      %v4774 = vadd.f32 %v4304, %v4740
      %4775 = vst.msk [vmem:[%s208] sm:$0xff] %vm702, %v4743
      %4776 = vst.msk [vmem:[%s208 + $0x8] sm:$0xff] %vm702, %v4744
      %4777 = vst.msk [vmem:[%s208 + $0x10] sm:$0xff] %vm702, %v4745
      %4778 = vst.msk [vmem:[%s208 + $0x18] sm:$0xff] %vm702, %v4746
      %4779 = vst.msk [vmem:[%s208 + $0x20] sm:$0xff] %vm702, %v4747
      %4780 = vst.msk [vmem:[%s208 + $0x28] sm:$0xff] %vm702, %v4748
      %4781 = vst.msk [vmem:[%s208 + $0x30] sm:$0xff] %vm702, %v4749
      %4782 = vst.msk [vmem:[%s208 + $0x38] sm:$0xff] %vm702, %v4750
      %4783 = vst.msk [vmem:[%s208 + $0x40] sm:$0xff] %vm702, %v4751
      %4784 = vst.msk [vmem:[%s208 + $0x48] sm:$0xff] %vm702, %v4752
      %4785 = vst.msk [vmem:[%s208 + $0x50] sm:$0xff] %vm702, %v4753
      %4786 = vst.msk [vmem:[%s208 + $0x58] sm:$0xff] %vm702, %v4754
      %4787 = vst.msk [vmem:[%s208 + $0x60] sm:$0xff] %vm702, %v4755
      %4788 = vst.msk [vmem:[%s208 + $0x68] sm:$0xff] %vm702, %v4756
      %4789 = vst.msk [vmem:[%s208 + $0x70] sm:$0xff] %vm702, %v4757
      %4790 = vst.msk [vmem:[%s208 + $0x78] sm:$0xff] %vm702, %v4758
      %4791 = vst.msk [vmem:[%s208 + $0x80] sm:$0xff] %vm702, %v4759
      %4792 = vst.msk [vmem:[%s208 + $0x88] sm:$0xff] %vm702, %v4760
      %4793 = vst.msk [vmem:[%s208 + $0x90] sm:$0xff] %vm702, %v4761
      %4794 = vst.msk [vmem:[%s208 + $0x98] sm:$0xff] %vm702, %v4762
      %4795 = vst.msk [vmem:[%s208 + $0xa0] sm:$0xff] %vm702, %v4763
      %4796 = vst.msk [vmem:[%s208 + $0xa8] sm:$0xff] %vm702, %v4764
      %4797 = vst.msk [vmem:[%s208 + $0xb0] sm:$0xff] %vm702, %v4765
      %4798 = vst.msk [vmem:[%s208 + $0xb8] sm:$0xff] %vm702, %v4766
      %4799 = vst.msk [vmem:[%s208 + $0xc0] sm:$0xff] %vm702, %v4767
      %4800 = vst.msk [vmem:[%s208 + $0xc8] sm:$0xff] %vm702, %v4768
      %4801 = vst.msk [vmem:[%s208 + $0xd0] sm:$0xff] %vm702, %v4769
      %4802 = vst.msk [vmem:[%s208 + $0xd8] sm:$0xff] %vm702, %v4770
      %4803 = vst.msk [vmem:[%s208 + $0xe0] sm:$0xff] %vm702, %v4771
      %4804 = vst.msk [vmem:[%s208 + $0xe8] sm:$0xff] %vm702, %v4772
      %4805 = vst.msk [vmem:[%s208 + $0xf0] sm:$0xff] %vm702, %v4773
      %4806 = vst.msk [vmem:[%s208 + $0xf8] sm:$0xff] %vm702, %v4774
      %v4807 = vsel %vm702, %v4743, 0.0
      %v4808 = vsel %vm702, %v4744, 0.0
      %v4809 = vadd.f32 %v4807, %v4808
      %v4810 = vsel %vm702, %v4745, 0.0
      %v4811 = vadd.f32 %v4809, %v4810
      %v4812 = vsel %vm702, %v4746, 0.0
      %v4813 = vadd.f32 %v4811, %v4812
      %v4814 = vsel %vm702, %v4747, 0.0
      %v4815 = vadd.f32 %v4813, %v4814
      %v4816 = vsel %vm702, %v4748, 0.0
      %v4817 = vadd.f32 %v4815, %v4816
      %v4818 = vsel %vm702, %v4749, 0.0
      %v4819 = vadd.f32 %v4817, %v4818
      %v4820 = vsel %vm702, %v4750, 0.0
      %v4821 = vadd.f32 %v4819, %v4820
      %v4822 = vsel %vm702, %v4751, 0.0
      %v4823 = vadd.f32 %v4821, %v4822
      %v4824 = vsel %vm702, %v4752, 0.0
      %v4825 = vadd.f32 %v4823, %v4824
      %v4826 = vsel %vm702, %v4753, 0.0
      %v4827 = vadd.f32 %v4825, %v4826
      %v4828 = vsel %vm702, %v4754, 0.0
      %v4829 = vadd.f32 %v4827, %v4828
      %v4830 = vsel %vm702, %v4755, 0.0
      %v4831 = vadd.f32 %v4829, %v4830
      %v4832 = vsel %vm702, %v4756, 0.0
      %v4833 = vadd.f32 %v4831, %v4832
      %v4834 = vsel %vm702, %v4757, 0.0
      %v4835 = vadd.f32 %v4833, %v4834
      %v4836 = vsel %vm702, %v4758, 0.0
      %v4837 = vadd.f32 %v4835, %v4836
      %v4838 = vsel %vm702, %v4759, 0.0
      %v4839 = vadd.f32 %v4837, %v4838
      %v4840 = vsel %vm702, %v4760, 0.0
      %v4841 = vadd.f32 %v4839, %v4840
      %v4842 = vsel %vm702, %v4761, 0.0
      %v4843 = vadd.f32 %v4841, %v4842
      %v4844 = vsel %vm702, %v4762, 0.0
      %v4845 = vadd.f32 %v4843, %v4844
      %v4846 = vsel %vm702, %v4763, 0.0
      %v4847 = vadd.f32 %v4845, %v4846
      %v4848 = vsel %vm702, %v4764, 0.0
      %v4849 = vadd.f32 %v4847, %v4848
      %v4850 = vsel %vm702, %v4765, 0.0
      %v4851 = vadd.f32 %v4849, %v4850
      %v4852 = vsel %vm702, %v4766, 0.0
      %v4853 = vadd.f32 %v4851, %v4852
      %v4854 = vsel %vm702, %v4767, 0.0
      %v4855 = vadd.f32 %v4853, %v4854
      %v4856 = vsel %vm702, %v4768, 0.0
      %v4857 = vadd.f32 %v4855, %v4856
      %v4858 = vsel %vm702, %v4769, 0.0
      %v4859 = vadd.f32 %v4857, %v4858
      %v4860 = vsel %vm702, %v4770, 0.0
      %v4861 = vadd.f32 %v4859, %v4860
      %v4862 = vsel %vm702, %v4771, 0.0
      %v4863 = vadd.f32 %v4861, %v4862
      %v4864 = vsel %vm702, %v4772, 0.0
      %v4865 = vadd.f32 %v4863, %v4864
      %v4866 = vsel %vm702, %v4773, 0.0
      %v4867 = vadd.f32 %v4865, %v4866
      %v4868 = vsel %vm702, %v4774, 0.0
      %v4869 = vadd.f32 %v4867, %v4868
      %v4870 = vrot.slane %v4869, 4
      %v4871 = vadd.f32 %v4869, %v4870
      %v4872 = vrot.slane %v4871, 2
      %v4873 = vadd.f32 %v4871, %v4872
      %v4874 = vrot.slane %v4873, 1
      %v4875 = vadd.f32 %v4873, %v4874
      %vm4876 = vcmask 24576
      %4877 = vst.msk [vmem:[%s211] sm:$0x1] %vm4876, %v4875
      %v4878 = vmul.f32 %v4743, %v4743
      %v4879 = vmul.f32 %v4744, %v4744
      %v4880 = vmul.f32 %v4745, %v4745
      %v4881 = vmul.f32 %v4746, %v4746
      %v4882 = vmul.f32 %v4747, %v4747
      %v4883 = vmul.f32 %v4748, %v4748
      %v4884 = vmul.f32 %v4749, %v4749
      %v4885 = vmul.f32 %v4750, %v4750
      %v4886 = vmul.f32 %v4751, %v4751
      %v4887 = vmul.f32 %v4752, %v4752
      %v4888 = vmul.f32 %v4753, %v4753
      %v4889 = vmul.f32 %v4754, %v4754
      %v4890 = vmul.f32 %v4755, %v4755
      %v4891 = vmul.f32 %v4756, %v4756
      %v4892 = vmul.f32 %v4757, %v4757
      %v4893 = vmul.f32 %v4758, %v4758
      %v4894 = vmul.f32 %v4759, %v4759
      %v4895 = vmul.f32 %v4760, %v4760
      %v4896 = vmul.f32 %v4761, %v4761
      %v4897 = vmul.f32 %v4762, %v4762
      %v4898 = vmul.f32 %v4763, %v4763
      %v4899 = vmul.f32 %v4764, %v4764
      %v4900 = vmul.f32 %v4765, %v4765
      %v4901 = vmul.f32 %v4766, %v4766
      %v4902 = vmul.f32 %v4767, %v4767
      %v4903 = vmul.f32 %v4768, %v4768
      %v4904 = vmul.f32 %v4769, %v4769
      %v4905 = vmul.f32 %v4770, %v4770
      %v4906 = vmul.f32 %v4771, %v4771
      %v4907 = vmul.f32 %v4772, %v4772
      %v4908 = vmul.f32 %v4773, %v4773
      %v4909 = vmul.f32 %v4774, %v4774
      %v4910 = vsel %vm702, %v4878, 0.0
      %v4911 = vsel %vm702, %v4879, 0.0
      %v4912 = vadd.f32 %v4910, %v4911
      %v4913 = vsel %vm702, %v4880, 0.0
      %v4914 = vadd.f32 %v4912, %v4913
      %v4915 = vsel %vm702, %v4881, 0.0
      %v4916 = vadd.f32 %v4914, %v4915
      %v4917 = vsel %vm702, %v4882, 0.0
      %v4918 = vadd.f32 %v4916, %v4917
      %v4919 = vsel %vm702, %v4883, 0.0
      %v4920 = vadd.f32 %v4918, %v4919
      %v4921 = vsel %vm702, %v4884, 0.0
      %v4922 = vadd.f32 %v4920, %v4921
      %v4923 = vsel %vm702, %v4885, 0.0
      %v4924 = vadd.f32 %v4922, %v4923
      %v4925 = vsel %vm702, %v4886, 0.0
      %v4926 = vadd.f32 %v4924, %v4925
      %v4927 = vsel %vm702, %v4887, 0.0
      %v4928 = vadd.f32 %v4926, %v4927
      %v4929 = vsel %vm702, %v4888, 0.0
      %v4930 = vadd.f32 %v4928, %v4929
      %v4931 = vsel %vm702, %v4889, 0.0
      %v4932 = vadd.f32 %v4930, %v4931
      %v4933 = vsel %vm702, %v4890, 0.0
      %v4934 = vadd.f32 %v4932, %v4933
      %v4935 = vsel %vm702, %v4891, 0.0
      %v4936 = vadd.f32 %v4934, %v4935
      %v4937 = vsel %vm702, %v4892, 0.0
      %v4938 = vadd.f32 %v4936, %v4937
      %v4939 = vsel %vm702, %v4893, 0.0
      %v4940 = vadd.f32 %v4938, %v4939
      %v4941 = vsel %vm702, %v4894, 0.0
      %v4942 = vadd.f32 %v4940, %v4941
      %v4943 = vsel %vm702, %v4895, 0.0
      %v4944 = vadd.f32 %v4942, %v4943
      %v4945 = vsel %vm702, %v4896, 0.0
      %v4946 = vadd.f32 %v4944, %v4945
      %v4947 = vsel %vm702, %v4897, 0.0
      %v4948 = vadd.f32 %v4946, %v4947
      %v4949 = vsel %vm702, %v4898, 0.0
      %v4950 = vadd.f32 %v4948, %v4949
      %v4951 = vsel %vm702, %v4899, 0.0
      %v4952 = vadd.f32 %v4950, %v4951
      %v4953 = vsel %vm702, %v4900, 0.0
      %v4954 = vadd.f32 %v4952, %v4953
      %v4955 = vsel %vm702, %v4901, 0.0
      %v4956 = vadd.f32 %v4954, %v4955
      %v4957 = vsel %vm702, %v4902, 0.0
      %v4958 = vadd.f32 %v4956, %v4957
      %v4959 = vsel %vm702, %v4903, 0.0
      %v4960 = vadd.f32 %v4958, %v4959
      %v4961 = vsel %vm702, %v4904, 0.0
      %v4962 = vadd.f32 %v4960, %v4961
      %v4963 = vsel %vm702, %v4905, 0.0
      %v4964 = vadd.f32 %v4962, %v4963
      %v4965 = vsel %vm702, %v4906, 0.0
      %v4966 = vadd.f32 %v4964, %v4965
      %v4967 = vsel %vm702, %v4907, 0.0
      %v4968 = vadd.f32 %v4966, %v4967
      %v4969 = vsel %vm702, %v4908, 0.0
      %v4970 = vadd.f32 %v4968, %v4969
      %v4971 = vsel %vm702, %v4909, 0.0
      %v4972 = vadd.f32 %v4970, %v4971
      %v4973 = vrot.slane %v4972, 4
      %v4974 = vadd.f32 %v4972, %v4973
      %v4975 = vrot.slane %v4974, 2
      %v4976 = vadd.f32 %v4974, %v4975
      %v4977 = vrot.slane %v4976, 1
      %v4978 = vadd.f32 %v4976, %v4977
      %4979 = vst.msk [vmem:[%s214] sm:$0x1] %vm4876, %v4978
      %p4980 = scmp.lt.s32.totalorder %s16, 1
      %s4981 = scalar_select %p4980, %s16, 1
      %s4982 = smul.addr %s4981, 32
      %s4983 = smul.addr %s4982, 8
      %s4984 = scalar_lea.vmem %s2, %s4983
      %p4985 = scmp.lt.s32.totalorder %s16, 1
      %s4986 = scalar_select %p4985, %s16, 1
      %s4987 = scalar_lea.vmem %s3, %s4986
      %p4988 = scmp.lt.s32.totalorder %s16, 1
      %s4989 = scalar_select %p4988, %s16, 1
      %s4990 = scalar_lea.vmem %s4, %s4989
      // Predicated region
      $region29: #{resnet_block.2} parent=27 // pred_check
        %p4991 = pneg %p81
      $region30: #{resnet_block.2} parent=27 // pred_check_branch
        %4993 = sbr.rel (%p4991) target = $region32
      $region31: #{resnet_block.2} parent=27 // pred_region
        _
      $region32: #{resnet_block.2} parent=27 // pred_fallthru
        _
      // Predicated region
      $region33: #{resnet_block.2} parent=27 // pred_check
        %p4994 = pneg %p107
      $region34: #{resnet_block.2} parent=27 // pred_check_branch
        %4996 = sbr.rel (%p4994) target = $region36
      $region35: #{resnet_block.2} parent=27 // pred_region
        _
      $region36: #{resnet_block.2} parent=27 // pred_fallthru
        _
      // Predicated region
      $region37: #{resnet_block.2} parent=27 // pred_check
        %p4997 = pneg %p133
      $region38: #{resnet_block.2} parent=27 // pred_check_branch
        %4999 = sbr.rel (%p4997) target = $region40
      $region39: #{resnet_block.2} parent=27 // pred_region
        _
      $region40: #{resnet_block.2} parent=27 // pred_fallthru
        _
    $region28: #{resnet_block.2} parent=5 // pred_fallthru
      _
    %p5000 = scmp.le.s32.totalorder 2, %s11
    // Predicated region
    $region41: #{resnet_block.2} parent=5 // pred_check
      %p5001 = pneg %p5000
    $region42: #{resnet_block.2} parent=5 // pred_check_branch
      %5003 = sbr.rel (%p5001) target = $region44
    $region43: #{resnet_block.2} parent=5 // pred_region
      %s5004 = ssub.s32 %s11, 2
      // Predicated region
      $region45: #{resnet_block.2} parent=43 // pred_check
        %p5005 = pneg %p87
      $region46: #{resnet_block.2} parent=43 // pred_check_branch
        %5007 = sbr.rel (%p5005) target = $region48
      $region47: #{resnet_block.2} parent=43 // pred_region
        %p5008 = scmp.lt.s32.totalorder %s17, 1
        %s5009 = scalar_select %p5008, %s17, 1
        %s5010 = smul.addr %s5009, 32
        %s5011 = smul.addr %s5010, 8
        %s5012 = scalar_lea.vmem %s2, %s5011
      $region48: #{resnet_block.2} parent=43 // pred_fallthru
        _
      // Predicated region
      $region49: #{resnet_block.2} parent=43 // pred_check
        %p5013 = pneg %p113
      $region50: #{resnet_block.2} parent=43 // pred_check_branch
        %5015 = sbr.rel (%p5013) target = $region52
      $region51: #{resnet_block.2} parent=43 // pred_region
        %p5016 = scmp.lt.s32.totalorder %s17, 1
        %s5017 = scalar_select %p5016, %s17, 1
        %s5018 = scalar_lea.vmem %s3, %s5017
      $region52: #{resnet_block.2} parent=43 // pred_fallthru
        _
      // Predicated region
      $region53: #{resnet_block.2} parent=43 // pred_check
        %p5019 = pneg %p139
      $region54: #{resnet_block.2} parent=43 // pred_check_branch
        %5021 = sbr.rel (%p5019) target = $region56
      $region55: #{resnet_block.2} parent=43 // pred_region
        %p5022 = scmp.lt.s32.totalorder %s17, 1
        %s5023 = scalar_select %p5022, %s17, 1
        %s5024 = scalar_lea.vmem %s4, %s5023
      $region56: #{resnet_block.2} parent=43 // pred_fallthru
        _
    $region44: #{resnet_block.2} parent=5 // pred_fallthru
      _
  $region6: #{resnet_block.2} parent=0 // loop_footer
    %s15 = sadd.s32 1, %s11
  $region7: #{resnet_block.2} parent=0 // loop_footer_branch
    %10 = sbr.rel target = $region3
  $region8: #{resnet_block.2} parent=0 // loop_exit
    _

</llo_original>
